<compile_context>
chip_gen: v7x
topology: tpu7x:2x2x1
jax: 0.10.0
libtpu: 0.0.40
codegen_flags: <defaults>
</compile_context>

<pallas_src>
import numpy as np

import jax
import jax.numpy as jnp
from jax.experimental import pallas as pl
from jax.experimental.pallas import tpu as pltpu

# --- hyperparameters (from the module) ---
VOCAB_SIZE = 65          # stand-in for len(sorted(set(text)))
VOCAB_PAD = 128          # lane-padded vocab (dense stores / dense one-hot K)
N_EMBD = 64
N_HEAD = 4
HEAD_SIZE = N_EMBD // N_HEAD
BLOCK_SIZE = 32
N_LAYER = 4
LN_EPS = 1e-5            # PyTorch nn.LayerNorm default
NEG_INF = -1e30          # additive mask value (NaN-safe vs. -inf)


def _layernorm(x, g, b):
    mu = jnp.mean(x, axis=-1, keepdims=True)
    var = jnp.mean(jnp.square(x - mu), axis=-1, keepdims=True)
    return (x - mu) * jax.lax.rsqrt(var + LN_EPS) * g + b


def fused_forward_kernel(idx_ref, mask_ref, tok_ref, pos_ref,
                         ln1g_ref, ln1b_ref, wqkv_ref, wo_ref, bo_ref,
                         ln2g_ref, ln2b_ref, w1_ref, b1_ref, w2_ref, b2_ref,
                         lmw_ref, lmb_ref, out_ref):
    """Entire mini-GPT forward for the whole batch, VMEM-resident, no grid."""
    N = idx_ref.shape[0]                    # flattened B*T rows
    C, Hs = N_EMBD, HEAD_SIZE

    # ---- token embedding as a one-hot matmul (bf16 inputs, f32 acc, MXU) ----
    ids = idx_ref[...]                                              # (N, 1) i32
    vocab_iota = jax.lax.broadcasted_iota(jnp.int32, (N, VOCAB_PAD), 1)
    onehot = (vocab_iota == ids).astype(jnp.bfloat16)               # (N, Vp)
    x = jnp.dot(onehot, tok_ref[...], preferred_element_type=jnp.float32)
    x = x + pos_ref[...]                                            # (N, C) f32

    # ---- host-precomputed additive block-diagonal causal mask ----
    mask = mask_ref[...]                                            # (N, N) f32

    for li in range(N_LAYER):                                       # static unroll
        # ---- attention sublayer: x = x + Wo(MHA(LN1(x))) + bo ----
        h = _layernorm(x, ln1g_ref[li], ln1b_ref[li]).astype(jnp.bfloat16)
        # one lane-dense fused QKV projection: (N, 64) x (64, 192)
        qkv = jnp.dot(h, wqkv_ref[li], preferred_element_type=jnp.float32)
        qkv = qkv.astype(jnp.bfloat16)                              # (N, 3C)
        heads = []
        for hd in range(N_HEAD):                                    # static unroll
            qh = qkv[:, hd * Hs:(hd + 1) * Hs]                      # scale folded in
            kh = qkv[:, C + hd * Hs:C + (hd + 1) * Hs]
            vh = qkv[:, 2 * C + hd * Hs:2 * C + (hd + 1) * Hs]
            # qh @ kh.T without materializing a transpose
            s = jax.lax.dot_general(qh, kh, (((1,), (1,)), ((), ())),
                                    preferred_element_type=jnp.float32)
            s = s + mask                                            # (N, N) f32
            s = s - jnp.max(s, axis=-1, keepdims=True)
            p = jnp.exp(s)
            p = p * pl.reciprocal(jnp.sum(p, axis=-1, keepdims=True), approx=True)
            heads.append(jnp.dot(p.astype(jnp.bfloat16), vh,
                                 preferred_element_type=jnp.float32))
        # lane-concat the 4 (N, 16) head outputs -> single K=64 output proj
        att_in = jnp.concatenate(heads, axis=-1).astype(jnp.bfloat16)  # (N, C)
        att = jnp.dot(att_in, wo_ref[li], preferred_element_type=jnp.float32)
        x = x + att + bo_ref[li]                                    # dropout p=0 -> identity

        # ---- MLP sublayer: x = x + W2(relu(W1(LN2(x)) + b1)) + b2 ----
        h2 = _layernorm(x, ln2g_ref[li], ln2b_ref[li]).astype(jnp.bfloat16)
        m = jnp.dot(h2, w1_ref[li], preferred_element_type=jnp.float32) + b1_ref[li]
        m = jnp.maximum(m, 0.0).astype(jnp.bfloat16)                # ReLU
        x = x + jnp.dot(m, w2_ref[li], preferred_element_type=jnp.float32) + b2_ref[li]

    # ---- lm_head: lane-padded (C, 128) weight -> dense (N, 128) store ----
    logits = jnp.dot(x.astype(jnp.bfloat16), lmw_ref[...],
                     preferred_element_type=jnp.float32) + lmb_ref[...]
    out_ref[...] = logits


def prepare_params(params):
    """One-time repack of PyTorch-style params into kernel-friendly arrays.

    Call ONCE (outside jit / the per-step path) and reuse the result.
    """
    L, C, H, Hs, Vp = N_LAYER, N_EMBD, N_HEAD, HEAD_SIZE, VOCAB_PAD
    bf16 = jnp.bfloat16
    blocks = params["blocks"]

    def stack(name, lead1=False):
        a = jnp.stack([b[name] for b in blocks])
        return a[:, None, :] if lead1 else a          # biases -> (L, 1, dim)

    # fused QKV weight: attention scale folded into the Q columns
    wq = stack("wq") * (Hs ** -0.5)                   # (L, C, C)
    wqkv = jnp.concatenate([wq, stack("wk"), stack("wv")], axis=-1)  # (L, C, 3C)

    tok_pad = jnp.zeros((Vp, C), jnp.float32).at[:VOCAB_SIZE].set(params["tok_emb"])
    lmw_pad = jnp.zeros((C, Vp), jnp.float32).at[:, :VOCAB_SIZE].set(params["lm_w"])
    lmb_pad = jnp.zeros((1, Vp), jnp.float32).at[:, :VOCAB_SIZE].set(params["lm_b"][None, :])

    return dict(
        tok_emb=tok_pad.astype(bf16), pos_emb=params["pos_emb"],
        ln1_g=stack("ln1_g", True), ln1_b=stack("ln1_b", True),
        wqkv=wqkv.astype(bf16), wo=stack("wo").astype(bf16),
        bo=stack("bo", True),
        ln2_g=stack("ln2_g", True), ln2_b=stack("ln2_b", True),
        w1=stack("w1").astype(bf16), b1=stack("b1", True),
        w2=stack("w2").astype(bf16), b2=stack("b2", True),
        lm_w=lmw_pad.astype(bf16), lm_b=lmb_pad,
    )


def bigram_forward(idx, prepared, targets=None):
    """idx: (B, T) int32 token ids, T <= BLOCK_SIZE. Returns (logits, loss)."""
    B, T = idx.shape
    assert T <= BLOCK_SIZE
    N = B * T
    p = prepared

    # block-diagonal + causal additive mask: numpy -> baked compile-time constant
    rows = np.arange(N)
    keep = ((rows[:, None] // T) == (rows[None, :] // T)) & \
           ((rows[:, None] % T) >= (rows[None, :] % T))
    mask = jnp.asarray(np.where(keep, 0.0, NEG_INF).astype(np.float32))

    pos = jnp.tile(p["pos_emb"][:T], (B, 1))          # (N, C): row n -> pos n % T
    idx2 = idx.reshape(N, 1).astype(jnp.int32)

    n_in = 17
    vmem_specs = [pl.BlockSpec(memory_space=pltpu.MemorySpace.VMEM)
                  for _ in range(n_in)]

    # Single fused pallas_call, no grid: activations and all weights VMEM-resident.
    logits_pad = pl.pallas_call(
        fused_forward_kernel,
        out_shape=jax.ShapeDtypeStruct((N, VOCAB_PAD), jnp.float32),
        in_specs=vmem_specs,
        out_specs=pl.BlockSpec(memory_space=pltpu.MemorySpace.VMEM),
    )(idx2, mask, p["tok_emb"], pos,
      p["ln1_g"], p["ln1_b"], p["wqkv"], p["wo"], p["bo"],
      p["ln2_g"], p["ln2_b"], p["w1"], p["b1"], p["w2"], p["b2"],
      p["lm_w"], p["lm_b"])

    logits = logits_pad.reshape(B, T, VOCAB_PAD)[:, :, :VOCAB_SIZE]
    loss = None
    if targets is not None:
        # TODO(synk): cross-entropy path not exercised in this demo (targets=None)
        logp = jax.nn.log_softmax(logits, axis=-1)
        loss = -jnp.mean(jnp.take_along_axis(
            logp.reshape(-1, VOCAB_SIZE), targets.reshape(-1, 1), axis=-1))
    return logits, loss


def init_params(key):
    def nrm(k, shape, scale=0.02):
        return (scale * jax.random.normal(k, shape)).astype(jnp.float32)

    keys = jax.random.split(key, 3 + N_LAYER)
    params = {
        "tok_emb": nrm(keys[0], (VOCAB_SIZE, N_EMBD)),
        "pos_emb": nrm(keys[1], (BLOCK_SIZE, N_EMBD)),
        "lm_w": nrm(keys[2], (N_EMBD, VOCAB_SIZE)),
        "lm_b": jnp.zeros((VOCAB_SIZE,), jnp.float32),
        "blocks": [],
    }
    for li in range(N_LAYER):
        lk = jax.random.split(keys[3 + li], 6)
        params["blocks"].append({
            "ln1_g": jnp.ones((N_EMBD,), jnp.float32),
            "ln1_b": jnp.zeros((N_EMBD,), jnp.float32),
            "wq": nrm(lk[0], (N_EMBD, N_EMBD)),
            "wk": nrm(lk[1], (N_EMBD, N_EMBD)),
            "wv": nrm(lk[2], (N_EMBD, N_EMBD)),
            "wo": nrm(lk[3], (N_EMBD, N_EMBD)),
            "bo": jnp.zeros((N_EMBD,), jnp.float32),
            "ln2_g": jnp.ones((N_EMBD,), jnp.float32),
            "ln2_b": jnp.zeros((N_EMBD,), jnp.float32),
            "w1": nrm(lk[4], (N_EMBD, 4 * N_EMBD)),
            "b1": jnp.zeros((4 * N_EMBD,), jnp.float32),
            "w2": nrm(lk[5], (4 * N_EMBD, N_EMBD)),
            "b2": jnp.zeros((N_EMBD,), jnp.float32),
        })
    return params


if __name__ == "__main__":
    key = jax.random.PRNGKey(0)
    pkey, dkey = jax.random.split(key)
    params = init_params(pkey)

    # one-time weight repack, OUTSIDE the jitted per-call path
    prepared = jax.block_until_ready(prepare_params(params))

    B, T = 2, 8
    idx = jax.random.randint(dkey, (B, T), 0, VOCAB_SIZE, dtype=jnp.int32)

    fwd = jax.jit(bigram_forward)
    logits, loss = fwd(idx, prepared)
    logits = jax.block_until_ready(logits)

    assert logits.shape == (B, T, VOCAB_SIZE), logits.shape
    assert logits.dtype == jnp.float32
    assert bool(jnp.all(jnp.isfinite(logits)))
    assert loss is None
    print("KERNEL_OK")
</pallas_src>

<mosaic_0001>
module attributes {stable_mosaic.version = 11 : i64} {
  func.func @fused_forward_kernel(%arg0: memref<16x1xi32, #tpu.memory_space<vmem>>, %arg1: memref<16x16xf32, #tpu.memory_space<vmem>>, %arg2: memref<128x64xbf16, #tpu.memory_space<vmem>>, %arg3: memref<16x64xf32, #tpu.memory_space<vmem>>, %arg4: memref<4x1x64xf32, #tpu.memory_space<vmem>>, %arg5: memref<4x1x64xf32, #tpu.memory_space<vmem>>, %arg6: memref<4x64x192xbf16, #tpu.memory_space<vmem>>, %arg7: memref<4x64x64xbf16, #tpu.memory_space<vmem>>, %arg8: memref<4x1x64xf32, #tpu.memory_space<vmem>>, %arg9: memref<4x1x64xf32, #tpu.memory_space<vmem>>, %arg10: memref<4x1x64xf32, #tpu.memory_space<vmem>>, %arg11: memref<4x64x256xbf16, #tpu.memory_space<vmem>>, %arg12: memref<4x1x256xf32, #tpu.memory_space<vmem>>, %arg13: memref<4x256x64xbf16, #tpu.memory_space<vmem>>, %arg14: memref<4x1x64xf32, #tpu.memory_space<vmem>>, %arg15: memref<64x128xbf16, #tpu.memory_space<vmem>>, %arg16: memref<1x128xf32, #tpu.memory_space<vmem>>, %arg17: memref<16x128xf32, #tpu.memory_space<vmem>>) attributes {dimension_semantics = [], scalar_prefetch = 0 : i64, scratch_operands = 0 : i64, tpu.core_type = #tpu.core_type<tc>} {
    %c0 = arith.constant 0 : index
    %c0_0 = arith.constant 0 : index
    %0 = vector.load %arg0[%c0, %c0_0] : memref<16x1xi32, #tpu.memory_space<vmem>>, vector<16x1xi32>
    %1 = tpu.iota {dimensions = array<i32: 1>} : vector<16x128xi32>
    %2 = vector.broadcast %0 : vector<16x1xi32> to vector<16x128xi32>
    %3 = arith.cmpi eq, %1, %2 : vector<16x128xi32>
    %4 = arith.extui %3 : vector<16x128xi1> to vector<16x128xi32>
    %5 = arith.sitofp %4 : vector<16x128xi32> to vector<16x128xf32>
    %6 = arith.truncf %5 : vector<16x128xf32> to vector<16x128xbf16>
    %c0_1 = arith.constant 0 : index
    %c0_2 = arith.constant 0 : index
    %7 = vector.load %arg2[%c0_1, %c0_2] : memref<128x64xbf16, #tpu.memory_space<vmem>>, vector<128x64xbf16>
    %cst = arith.constant dense<0.000000e+00> : vector<16x64xf32>
    %8 = tpu.matmul %6, %7, %cst {dimension_numbers = #tpu.dot_dimension_numbers<[1], [0], [0], [1], [0, 0, 1, 1], [], []>} : vector<16x128xbf16>, vector<128x64xbf16>, vector<16x64xf32> -> vector<16x64xf32>
    %c0_3 = arith.constant 0 : index
    %c0_4 = arith.constant 0 : index
    %9 = vector.load %arg3[%c0_3, %c0_4] : memref<16x64xf32, #tpu.memory_space<vmem>>, vector<16x64xf32>
    %10 = arith.addf %8, %9 : vector<16x64xf32>
    %c0_5 = arith.constant 0 : index
    %c0_6 = arith.constant 0 : index
    %11 = vector.load %arg1[%c0_5, %c0_6] : memref<16x16xf32, #tpu.memory_space<vmem>>, vector<16x16xf32>
    %c0_7 = arith.constant 0 : index
    %c0_8 = arith.constant 0 : index
    %c0_9 = arith.constant 0 : index
    %12 = vector.load %arg4[%c0_7, %c0_8, %c0_9] : memref<4x1x64xf32, #tpu.memory_space<vmem>>, vector<1x1x64xf32>
    %13 = vector.shape_cast %12 : vector<1x1x64xf32> to vector<1x64xf32>
    %c0_10 = arith.constant 0 : index
    %c0_11 = arith.constant 0 : index
    %c0_12 = arith.constant 0 : index
    %14 = vector.load %arg5[%c0_10, %c0_11, %c0_12] : memref<4x1x64xf32, #tpu.memory_space<vmem>>, vector<1x1x64xf32>
    %15 = vector.shape_cast %14 : vector<1x1x64xf32> to vector<1x64xf32>
    %cst_13 = arith.constant dense<0.000000e+00> : vector<16xf32>
    %16 = vector.multi_reduction <add>, %10, %cst_13 [1] : vector<16x64xf32> to vector<16xf32>
    %17 = vector.shape_cast %16 : vector<16xf32> to vector<16x1xf32>
    %cst_14 = arith.constant 6.400000e+01 : f32
    %18 = vector.broadcast %cst_14 : f32 to vector<16x1xf32>
    %19 = arith.divf %17, %18 : vector<16x1xf32>
    %20 = vector.broadcast %19 : vector<16x1xf32> to vector<16x64xf32>
    %21 = arith.subf %10, %20 : vector<16x64xf32>
    %22 = arith.mulf %21, %21 : vector<16x64xf32>
    %cst_15 = arith.constant dense<0.000000e+00> : vector<16xf32>
    %23 = vector.multi_reduction <add>, %22, %cst_15 [1] : vector<16x64xf32> to vector<16xf32>
    %24 = vector.shape_cast %23 : vector<16xf32> to vector<16x1xf32>
    %cst_16 = arith.constant 6.400000e+01 : f32
    %25 = vector.broadcast %cst_16 : f32 to vector<16x1xf32>
    %26 = arith.divf %24, %25 : vector<16x1xf32>
    %27 = vector.broadcast %19 : vector<16x1xf32> to vector<16x64xf32>
    %28 = arith.subf %10, %27 : vector<16x64xf32>
    %cst_17 = arith.constant 9.99999974E-6 : f32
    %29 = vector.broadcast %cst_17 : f32 to vector<16x1xf32>
    %30 = arith.addf %26, %29 : vector<16x1xf32>
    %31 = math.rsqrt %30 : vector<16x1xf32>
    %32 = vector.broadcast %31 : vector<16x1xf32> to vector<16x64xf32>
    %33 = arith.mulf %28, %32 : vector<16x64xf32>
    %34 = vector.broadcast %13 : vector<1x64xf32> to vector<16x64xf32>
    %35 = arith.mulf %33, %34 : vector<16x64xf32>
    %36 = vector.broadcast %15 : vector<1x64xf32> to vector<16x64xf32>
    %37 = arith.addf %35, %36 : vector<16x64xf32>
    %38 = arith.truncf %37 : vector<16x64xf32> to vector<16x64xbf16>
    %c0_18 = arith.constant 0 : index
    %c0_19 = arith.constant 0 : index
    %c0_20 = arith.constant 0 : index
    %39 = vector.load %arg6[%c0_18, %c0_19, %c0_20] : memref<4x64x192xbf16, #tpu.memory_space<vmem>>, vector<1x64x192xbf16>
    %40 = vector.shape_cast %39 : vector<1x64x192xbf16> to vector<64x192xbf16>
    %cst_21 = arith.constant dense<0.000000e+00> : vector<16x192xf32>
    %41 = tpu.matmul %38, %40, %cst_21 {dimension_numbers = #tpu.dot_dimension_numbers<[1], [0], [0], [1], [0, 0, 1, 1], [], []>} : vector<16x64xbf16>, vector<64x192xbf16>, vector<16x192xf32> -> vector<16x192xf32>
    %42 = arith.truncf %41 : vector<16x192xf32> to vector<16x192xbf16>
    %43 = vector.extract_strided_slice %42 {offsets = [0, 0], sizes = [16, 16], strides = [1, 1]} : vector<16x192xbf16> to vector<16x16xbf16>
    %44 = vector.extract_strided_slice %42 {offsets = [0, 64], sizes = [16, 16], strides = [1, 1]} : vector<16x192xbf16> to vector<16x16xbf16>
    %45 = vector.extract_strided_slice %42 {offsets = [0, 128], sizes = [16, 16], strides = [1, 1]} : vector<16x192xbf16> to vector<16x16xbf16>
    %cst_22 = arith.constant dense<0.000000e+00> : vector<16x16xf32>
    %46 = tpu.matmul %43, %44, %cst_22 {dimension_numbers = #tpu.dot_dimension_numbers<[1], [1], [0], [0], [0, 0, 1, 0], [], []>} : vector<16x16xbf16>, vector<16x16xbf16>, vector<16x16xf32> -> vector<16x16xf32>
    %47 = arith.addf %46, %11 : vector<16x16xf32>
    %cst_23 = arith.constant dense<0xFF800000> : vector<16xf32>
    %48 = vector.multi_reduction <maximumf>, %47, %cst_23 [1] : vector<16x16xf32> to vector<16xf32>
    %49 = vector.shape_cast %48 : vector<16xf32> to vector<16x1xf32>
    %50 = vector.broadcast %49 : vector<16x1xf32> to vector<16x16xf32>
    %51 = arith.subf %47, %50 : vector<16x16xf32>
    %52 = math.exp %51 : vector<16x16xf32>
    %cst_24 = arith.constant dense<0.000000e+00> : vector<16xf32>
    %53 = vector.multi_reduction <add>, %52, %cst_24 [1] : vector<16x16xf32> to vector<16xf32>
    %54 = vector.shape_cast %53 : vector<16xf32> to vector<16x1xf32>
    %55 = tpu.reciprocal %54 {approx = true} : vector<16x1xf32> -> vector<16x1xf32>
    %56 = vector.broadcast %55 : vector<16x1xf32> to vector<16x16xf32>
    %57 = arith.mulf %52, %56 : vector<16x16xf32>
    %58 = arith.truncf %57 : vector<16x16xf32> to vector<16x16xbf16>
    %cst_25 = arith.constant dense<0.000000e+00> : vector<16x16xf32>
    %59 = tpu.matmul %58, %45, %cst_25 {dimension_numbers = #tpu.dot_dimension_numbers<[1], [0], [0], [1], [0, 0, 1, 1], [], []>} : vector<16x16xbf16>, vector<16x16xbf16>, vector<16x16xf32> -> vector<16x16xf32>
    %60 = vector.extract_strided_slice %42 {offsets = [0, 16], sizes = [16, 16], strides = [1, 1]} : vector<16x192xbf16> to vector<16x16xbf16>
    %61 = vector.extract_strided_slice %42 {offsets = [0, 80], sizes = [16, 16], strides = [1, 1]} : vector<16x192xbf16> to vector<16x16xbf16>
    %62 = vector.extract_strided_slice %42 {offsets = [0, 144], sizes = [16, 16], strides = [1, 1]} : vector<16x192xbf16> to vector<16x16xbf16>
    %cst_26 = arith.constant dense<0.000000e+00> : vector<16x16xf32>
    %63 = tpu.matmul %60, %61, %cst_26 {dimension_numbers = #tpu.dot_dimension_numbers<[1], [1], [0], [0], [0, 0, 1, 0], [], []>} : vector<16x16xbf16>, vector<16x16xbf16>, vector<16x16xf32> -> vector<16x16xf32>
    %64 = arith.addf %63, %11 : vector<16x16xf32>
    %cst_27 = arith.constant dense<0xFF800000> : vector<16xf32>
    %65 = vector.multi_reduction <maximumf>, %64, %cst_27 [1] : vector<16x16xf32> to vector<16xf32>
    %66 = vector.shape_cast %65 : vector<16xf32> to vector<16x1xf32>
    %67 = vector.broadcast %66 : vector<16x1xf32> to vector<16x16xf32>
    %68 = arith.subf %64, %67 : vector<16x16xf32>
    %69 = math.exp %68 : vector<16x16xf32>
    %cst_28 = arith.constant dense<0.000000e+00> : vector<16xf32>
    %70 = vector.multi_reduction <add>, %69, %cst_28 [1] : vector<16x16xf32> to vector<16xf32>
    %71 = vector.shape_cast %70 : vector<16xf32> to vector<16x1xf32>
    %72 = tpu.reciprocal %71 {approx = true} : vector<16x1xf32> -> vector<16x1xf32>
    %73 = vector.broadcast %72 : vector<16x1xf32> to vector<16x16xf32>
    %74 = arith.mulf %69, %73 : vector<16x16xf32>
    %75 = arith.truncf %74 : vector<16x16xf32> to vector<16x16xbf16>
    %cst_29 = arith.constant dense<0.000000e+00> : vector<16x16xf32>
    %76 = tpu.matmul %75, %62, %cst_29 {dimension_numbers = #tpu.dot_dimension_numbers<[1], [0], [0], [1], [0, 0, 1, 1], [], []>} : vector<16x16xbf16>, vector<16x16xbf16>, vector<16x16xf32> -> vector<16x16xf32>
    %77 = vector.extract_strided_slice %42 {offsets = [0, 32], sizes = [16, 16], strides = [1, 1]} : vector<16x192xbf16> to vector<16x16xbf16>
    %78 = vector.extract_strided_slice %42 {offsets = [0, 96], sizes = [16, 16], strides = [1, 1]} : vector<16x192xbf16> to vector<16x16xbf16>
    %79 = vector.extract_strided_slice %42 {offsets = [0, 160], sizes = [16, 16], strides = [1, 1]} : vector<16x192xbf16> to vector<16x16xbf16>
    %cst_30 = arith.constant dense<0.000000e+00> : vector<16x16xf32>
    %80 = tpu.matmul %77, %78, %cst_30 {dimension_numbers = #tpu.dot_dimension_numbers<[1], [1], [0], [0], [0, 0, 1, 0], [], []>} : vector<16x16xbf16>, vector<16x16xbf16>, vector<16x16xf32> -> vector<16x16xf32>
    %81 = arith.addf %80, %11 : vector<16x16xf32>
    %cst_31 = arith.constant dense<0xFF800000> : vector<16xf32>
    %82 = vector.multi_reduction <maximumf>, %81, %cst_31 [1] : vector<16x16xf32> to vector<16xf32>
    %83 = vector.shape_cast %82 : vector<16xf32> to vector<16x1xf32>
    %84 = vector.broadcast %83 : vector<16x1xf32> to vector<16x16xf32>
    %85 = arith.subf %81, %84 : vector<16x16xf32>
    %86 = math.exp %85 : vector<16x16xf32>
    %cst_32 = arith.constant dense<0.000000e+00> : vector<16xf32>
    %87 = vector.multi_reduction <add>, %86, %cst_32 [1] : vector<16x16xf32> to vector<16xf32>
    %88 = vector.shape_cast %87 : vector<16xf32> to vector<16x1xf32>
    %89 = tpu.reciprocal %88 {approx = true} : vector<16x1xf32> -> vector<16x1xf32>
    %90 = vector.broadcast %89 : vector<16x1xf32> to vector<16x16xf32>
    %91 = arith.mulf %86, %90 : vector<16x16xf32>
    %92 = arith.truncf %91 : vector<16x16xf32> to vector<16x16xbf16>
    %cst_33 = arith.constant dense<0.000000e+00> : vector<16x16xf32>
    %93 = tpu.matmul %92, %79, %cst_33 {dimension_numbers = #tpu.dot_dimension_numbers<[1], [0], [0], [1], [0, 0, 1, 1], [], []>} : vector<16x16xbf16>, vector<16x16xbf16>, vector<16x16xf32> -> vector<16x16xf32>
    %94 = vector.extract_strided_slice %42 {offsets = [0, 48], sizes = [16, 16], strides = [1, 1]} : vector<16x192xbf16> to vector<16x16xbf16>
    %95 = vector.extract_strided_slice %42 {offsets = [0, 112], sizes = [16, 16], strides = [1, 1]} : vector<16x192xbf16> to vector<16x16xbf16>
    %96 = vector.extract_strided_slice %42 {offsets = [0, 176], sizes = [16, 16], strides = [1, 1]} : vector<16x192xbf16> to vector<16x16xbf16>
    %cst_34 = arith.constant dense<0.000000e+00> : vector<16x16xf32>
    %97 = tpu.matmul %94, %95, %cst_34 {dimension_numbers = #tpu.dot_dimension_numbers<[1], [1], [0], [0], [0, 0, 1, 0], [], []>} : vector<16x16xbf16>, vector<16x16xbf16>, vector<16x16xf32> -> vector<16x16xf32>
    %98 = arith.addf %97, %11 : vector<16x16xf32>
    %cst_35 = arith.constant dense<0xFF800000> : vector<16xf32>
    %99 = vector.multi_reduction <maximumf>, %98, %cst_35 [1] : vector<16x16xf32> to vector<16xf32>
    %100 = vector.shape_cast %99 : vector<16xf32> to vector<16x1xf32>
    %101 = vector.broadcast %100 : vector<16x1xf32> to vector<16x16xf32>
    %102 = arith.subf %98, %101 : vector<16x16xf32>
    %103 = math.exp %102 : vector<16x16xf32>
    %cst_36 = arith.constant dense<0.000000e+00> : vector<16xf32>
    %104 = vector.multi_reduction <add>, %103, %cst_36 [1] : vector<16x16xf32> to vector<16xf32>
    %105 = vector.shape_cast %104 : vector<16xf32> to vector<16x1xf32>
    %106 = tpu.reciprocal %105 {approx = true} : vector<16x1xf32> -> vector<16x1xf32>
    %107 = vector.broadcast %106 : vector<16x1xf32> to vector<16x16xf32>
    %108 = arith.mulf %103, %107 : vector<16x16xf32>
    %109 = arith.truncf %108 : vector<16x16xf32> to vector<16x16xbf16>
    %cst_37 = arith.constant dense<0.000000e+00> : vector<16x16xf32>
    %110 = tpu.matmul %109, %96, %cst_37 {dimension_numbers = #tpu.dot_dimension_numbers<[1], [0], [0], [1], [0, 0, 1, 1], [], []>} : vector<16x16xbf16>, vector<16x16xbf16>, vector<16x16xf32> -> vector<16x16xf32>
    %111 = tpu.concatenate %59, %76, %93, %110 in 1 : vector<16x16xf32>, vector<16x16xf32>, vector<16x16xf32>, vector<16x16xf32> -> vector<16x64xf32>
    %112 = arith.truncf %111 : vector<16x64xf32> to vector<16x64xbf16>
    %c0_38 = arith.constant 0 : index
    %c0_39 = arith.constant 0 : index
    %c0_40 = arith.constant 0 : index
    %113 = vector.load %arg7[%c0_38, %c0_39, %c0_40] : memref<4x64x64xbf16, #tpu.memory_space<vmem>>, vector<1x64x64xbf16>
    %114 = vector.shape_cast %113 : vector<1x64x64xbf16> to vector<64x64xbf16>
    %cst_41 = arith.constant dense<0.000000e+00> : vector<16x64xf32>
    %115 = tpu.matmul %112, %114, %cst_41 {dimension_numbers = #tpu.dot_dimension_numbers<[1], [0], [0], [1], [0, 0, 1, 1], [], []>} : vector<16x64xbf16>, vector<64x64xbf16>, vector<16x64xf32> -> vector<16x64xf32>
    %116 = arith.addf %10, %115 : vector<16x64xf32>
    %c0_42 = arith.constant 0 : index
    %c0_43 = arith.constant 0 : index
    %c0_44 = arith.constant 0 : index
    %117 = vector.load %arg8[%c0_42, %c0_43, %c0_44] : memref<4x1x64xf32, #tpu.memory_space<vmem>>, vector<1x1x64xf32>
    %118 = vector.shape_cast %117 : vector<1x1x64xf32> to vector<1x64xf32>
    %119 = vector.broadcast %118 : vector<1x64xf32> to vector<16x64xf32>
    %120 = arith.addf %116, %119 : vector<16x64xf32>
    %c0_45 = arith.constant 0 : index
    %c0_46 = arith.constant 0 : index
    %c0_47 = arith.constant 0 : index
    %121 = vector.load %arg9[%c0_45, %c0_46, %c0_47] : memref<4x1x64xf32, #tpu.memory_space<vmem>>, vector<1x1x64xf32>
    %122 = vector.shape_cast %121 : vector<1x1x64xf32> to vector<1x64xf32>
    %c0_48 = arith.constant 0 : index
    %c0_49 = arith.constant 0 : index
    %c0_50 = arith.constant 0 : index
    %123 = vector.load %arg10[%c0_48, %c0_49, %c0_50] : memref<4x1x64xf32, #tpu.memory_space<vmem>>, vector<1x1x64xf32>
    %124 = vector.shape_cast %123 : vector<1x1x64xf32> to vector<1x64xf32>
    %cst_51 = arith.constant dense<0.000000e+00> : vector<16xf32>
    %125 = vector.multi_reduction <add>, %120, %cst_51 [1] : vector<16x64xf32> to vector<16xf32>
    %126 = vector.shape_cast %125 : vector<16xf32> to vector<16x1xf32>
    %cst_52 = arith.constant 6.400000e+01 : f32
    %127 = vector.broadcast %cst_52 : f32 to vector<16x1xf32>
    %128 = arith.divf %126, %127 : vector<16x1xf32>
    %129 = vector.broadcast %128 : vector<16x1xf32> to vector<16x64xf32>
    %130 = arith.subf %120, %129 : vector<16x64xf32>
    %131 = arith.mulf %130, %130 : vector<16x64xf32>
    %cst_53 = arith.constant dense<0.000000e+00> : vector<16xf32>
    %132 = vector.multi_reduction <add>, %131, %cst_53 [1] : vector<16x64xf32> to vector<16xf32>
    %133 = vector.shape_cast %132 : vector<16xf32> to vector<16x1xf32>
    %cst_54 = arith.constant 6.400000e+01 : f32
    %134 = vector.broadcast %cst_54 : f32 to vector<16x1xf32>
    %135 = arith.divf %133, %134 : vector<16x1xf32>
    %136 = vector.broadcast %128 : vector<16x1xf32> to vector<16x64xf32>
    %137 = arith.subf %120, %136 : vector<16x64xf32>
    %cst_55 = arith.constant 9.99999974E-6 : f32
    %138 = vector.broadcast %cst_55 : f32 to vector<16x1xf32>
    %139 = arith.addf %135, %138 : vector<16x1xf32>
    %140 = math.rsqrt %139 : vector<16x1xf32>
    %141 = vector.broadcast %140 : vector<16x1xf32> to vector<16x64xf32>
    %142 = arith.mulf %137, %141 : vector<16x64xf32>
    %143 = vector.broadcast %122 : vector<1x64xf32> to vector<16x64xf32>
    %144 = arith.mulf %142, %143 : vector<16x64xf32>
    %145 = vector.broadcast %124 : vector<1x64xf32> to vector<16x64xf32>
    %146 = arith.addf %144, %145 : vector<16x64xf32>
    %147 = arith.truncf %146 : vector<16x64xf32> to vector<16x64xbf16>
    %c0_56 = arith.constant 0 : index
    %c0_57 = arith.constant 0 : index
    %c0_58 = arith.constant 0 : index
    %148 = vector.load %arg11[%c0_56, %c0_57, %c0_58] : memref<4x64x256xbf16, #tpu.memory_space<vmem>>, vector<1x64x256xbf16>
    %149 = vector.shape_cast %148 : vector<1x64x256xbf16> to vector<64x256xbf16>
    %cst_59 = arith.constant dense<0.000000e+00> : vector<16x256xf32>
    %150 = tpu.matmul %147, %149, %cst_59 {dimension_numbers = #tpu.dot_dimension_numbers<[1], [0], [0], [1], [0, 0, 1, 1], [], []>} : vector<16x64xbf16>, vector<64x256xbf16>, vector<16x256xf32> -> vector<16x256xf32>
    %c0_60 = arith.constant 0 : index
    %c0_61 = arith.constant 0 : index
    %c0_62 = arith.constant 0 : index
    %151 = vector.load %arg12[%c0_60, %c0_61, %c0_62] : memref<4x1x256xf32, #tpu.memory_space<vmem>>, vector<1x1x256xf32>
    %152 = vector.shape_cast %151 : vector<1x1x256xf32> to vector<1x256xf32>
    %153 = vector.broadcast %152 : vector<1x256xf32> to vector<16x256xf32>
    %154 = arith.addf %150, %153 : vector<16x256xf32>
    %cst_63 = arith.constant 0.000000e+00 : f32
    %155 = vector.broadcast %cst_63 : f32 to vector<16x256xf32>
    %156 = arith.maximumf %154, %155 : vector<16x256xf32>
    %157 = arith.truncf %156 : vector<16x256xf32> to vector<16x256xbf16>
    %c0_64 = arith.constant 0 : index
    %c0_65 = arith.constant 0 : index
    %c0_66 = arith.constant 0 : index
    %158 = vector.load %arg13[%c0_64, %c0_65, %c0_66] : memref<4x256x64xbf16, #tpu.memory_space<vmem>>, vector<1x256x64xbf16>
    %159 = vector.shape_cast %158 : vector<1x256x64xbf16> to vector<256x64xbf16>
    %cst_67 = arith.constant dense<0.000000e+00> : vector<16x64xf32>
    %160 = tpu.matmul %157, %159, %cst_67 {dimension_numbers = #tpu.dot_dimension_numbers<[1], [0], [0], [1], [0, 0, 1, 1], [], []>} : vector<16x256xbf16>, vector<256x64xbf16>, vector<16x64xf32> -> vector<16x64xf32>
    %161 = arith.addf %120, %160 : vector<16x64xf32>
    %c0_68 = arith.constant 0 : index
    %c0_69 = arith.constant 0 : index
    %c0_70 = arith.constant 0 : index
    %162 = vector.load %arg14[%c0_68, %c0_69, %c0_70] : memref<4x1x64xf32, #tpu.memory_space<vmem>>, vector<1x1x64xf32>
    %163 = vector.shape_cast %162 : vector<1x1x64xf32> to vector<1x64xf32>
    %164 = vector.broadcast %163 : vector<1x64xf32> to vector<16x64xf32>
    %165 = arith.addf %161, %164 : vector<16x64xf32>
    %c1 = arith.constant 1 : index
    %c0_71 = arith.constant 0 : index
    %c0_72 = arith.constant 0 : index
    %166 = vector.load %arg4[%c1, %c0_71, %c0_72] : memref<4x1x64xf32, #tpu.memory_space<vmem>>, vector<1x1x64xf32>
    %167 = vector.shape_cast %166 : vector<1x1x64xf32> to vector<1x64xf32>
    %c1_73 = arith.constant 1 : index
    %c0_74 = arith.constant 0 : index
    %c0_75 = arith.constant 0 : index
    %168 = vector.load %arg5[%c1_73, %c0_74, %c0_75] : memref<4x1x64xf32, #tpu.memory_space<vmem>>, vector<1x1x64xf32>
    %169 = vector.shape_cast %168 : vector<1x1x64xf32> to vector<1x64xf32>
    %cst_76 = arith.constant dense<0.000000e+00> : vector<16xf32>
    %170 = vector.multi_reduction <add>, %165, %cst_76 [1] : vector<16x64xf32> to vector<16xf32>
    %171 = vector.shape_cast %170 : vector<16xf32> to vector<16x1xf32>
    %cst_77 = arith.constant 6.400000e+01 : f32
    %172 = vector.broadcast %cst_77 : f32 to vector<16x1xf32>
    %173 = arith.divf %171, %172 : vector<16x1xf32>
    %174 = vector.broadcast %173 : vector<16x1xf32> to vector<16x64xf32>
    %175 = arith.subf %165, %174 : vector<16x64xf32>
    %176 = arith.mulf %175, %175 : vector<16x64xf32>
    %cst_78 = arith.constant dense<0.000000e+00> : vector<16xf32>
    %177 = vector.multi_reduction <add>, %176, %cst_78 [1] : vector<16x64xf32> to vector<16xf32>
    %178 = vector.shape_cast %177 : vector<16xf32> to vector<16x1xf32>
    %cst_79 = arith.constant 6.400000e+01 : f32
    %179 = vector.broadcast %cst_79 : f32 to vector<16x1xf32>
    %180 = arith.divf %178, %179 : vector<16x1xf32>
    %181 = vector.broadcast %173 : vector<16x1xf32> to vector<16x64xf32>
    %182 = arith.subf %165, %181 : vector<16x64xf32>
    %cst_80 = arith.constant 9.99999974E-6 : f32
    %183 = vector.broadcast %cst_80 : f32 to vector<16x1xf32>
    %184 = arith.addf %180, %183 : vector<16x1xf32>
    %185 = math.rsqrt %184 : vector<16x1xf32>
    %186 = vector.broadcast %185 : vector<16x1xf32> to vector<16x64xf32>
    %187 = arith.mulf %182, %186 : vector<16x64xf32>
    %188 = vector.broadcast %167 : vector<1x64xf32> to vector<16x64xf32>
    %189 = arith.mulf %187, %188 : vector<16x64xf32>
    %190 = vector.broadcast %169 : vector<1x64xf32> to vector<16x64xf32>
    %191 = arith.addf %189, %190 : vector<16x64xf32>
    %192 = arith.truncf %191 : vector<16x64xf32> to vector<16x64xbf16>
    %c1_81 = arith.constant 1 : index
    %c0_82 = arith.constant 0 : index
    %c0_83 = arith.constant 0 : index
    %193 = vector.load %arg6[%c1_81, %c0_82, %c0_83] : memref<4x64x192xbf16, #tpu.memory_space<vmem>>, vector<1x64x192xbf16>
    %194 = vector.shape_cast %193 : vector<1x64x192xbf16> to vector<64x192xbf16>
    %cst_84 = arith.constant dense<0.000000e+00> : vector<16x192xf32>
    %195 = tpu.matmul %192, %194, %cst_84 {dimension_numbers = #tpu.dot_dimension_numbers<[1], [0], [0], [1], [0, 0, 1, 1], [], []>} : vector<16x64xbf16>, vector<64x192xbf16>, vector<16x192xf32> -> vector<16x192xf32>
    %196 = arith.truncf %195 : vector<16x192xf32> to vector<16x192xbf16>
    %197 = vector.extract_strided_slice %196 {offsets = [0, 0], sizes = [16, 16], strides = [1, 1]} : vector<16x192xbf16> to vector<16x16xbf16>
    %198 = vector.extract_strided_slice %196 {offsets = [0, 64], sizes = [16, 16], strides = [1, 1]} : vector<16x192xbf16> to vector<16x16xbf16>
    %199 = vector.extract_strided_slice %196 {offsets = [0, 128], sizes = [16, 16], strides = [1, 1]} : vector<16x192xbf16> to vector<16x16xbf16>
    %cst_85 = arith.constant dense<0.000000e+00> : vector<16x16xf32>
    %200 = tpu.matmul %197, %198, %cst_85 {dimension_numbers = #tpu.dot_dimension_numbers<[1], [1], [0], [0], [0, 0, 1, 0], [], []>} : vector<16x16xbf16>, vector<16x16xbf16>, vector<16x16xf32> -> vector<16x16xf32>
    %201 = arith.addf %200, %11 : vector<16x16xf32>
    %cst_86 = arith.constant dense<0xFF800000> : vector<16xf32>
    %202 = vector.multi_reduction <maximumf>, %201, %cst_86 [1] : vector<16x16xf32> to vector<16xf32>
    %203 = vector.shape_cast %202 : vector<16xf32> to vector<16x1xf32>
    %204 = vector.broadcast %203 : vector<16x1xf32> to vector<16x16xf32>
    %205 = arith.subf %201, %204 : vector<16x16xf32>
    %206 = math.exp %205 : vector<16x16xf32>
    %cst_87 = arith.constant dense<0.000000e+00> : vector<16xf32>
    %207 = vector.multi_reduction <add>, %206, %cst_87 [1] : vector<16x16xf32> to vector<16xf32>
    %208 = vector.shape_cast %207 : vector<16xf32> to vector<16x1xf32>
    %209 = tpu.reciprocal %208 {approx = true} : vector<16x1xf32> -> vector<16x1xf32>
    %210 = vector.broadcast %209 : vector<16x1xf32> to vector<16x16xf32>
    %211 = arith.mulf %206, %210 : vector<16x16xf32>
    %212 = arith.truncf %211 : vector<16x16xf32> to vector<16x16xbf16>
    %cst_88 = arith.constant dense<0.000000e+00> : vector<16x16xf32>
    %213 = tpu.matmul %212, %199, %cst_88 {dimension_numbers = #tpu.dot_dimension_numbers<[1], [0], [0], [1], [0, 0, 1, 1], [], []>} : vector<16x16xbf16>, vector<16x16xbf16>, vector<16x16xf32> -> vector<16x16xf32>
    %214 = vector.extract_strided_slice %196 {offsets = [0, 16], sizes = [16, 16], strides = [1, 1]} : vector<16x192xbf16> to vector<16x16xbf16>
    %215 = vector.extract_strided_slice %196 {offsets = [0, 80], sizes = [16, 16], strides = [1, 1]} : vector<16x192xbf16> to vector<16x16xbf16>
    %216 = vector.extract_strided_slice %196 {offsets = [0, 144], sizes = [16, 16], strides = [1, 1]} : vector<16x192xbf16> to vector<16x16xbf16>
    %cst_89 = arith.constant dense<0.000000e+00> : vector<16x16xf32>
    %217 = tpu.matmul %214, %215, %cst_89 {dimension_numbers = #tpu.dot_dimension_numbers<[1], [1], [0], [0], [0, 0, 1, 0], [], []>} : vector<16x16xbf16>, vector<16x16xbf16>, vector<16x16xf32> -> vector<16x16xf32>
    %218 = arith.addf %217, %11 : vector<16x16xf32>
    %cst_90 = arith.constant dense<0xFF800000> : vector<16xf32>
    %219 = vector.multi_reduction <maximumf>, %218, %cst_90 [1] : vector<16x16xf32> to vector<16xf32>
    %220 = vector.shape_cast %219 : vector<16xf32> to vector<16x1xf32>
    %221 = vector.broadcast %220 : vector<16x1xf32> to vector<16x16xf32>
    %222 = arith.subf %218, %221 : vector<16x16xf32>
    %223 = math.exp %222 : vector<16x16xf32>
    %cst_91 = arith.constant dense<0.000000e+00> : vector<16xf32>
    %224 = vector.multi_reduction <add>, %223, %cst_91 [1] : vector<16x16xf32> to vector<16xf32>
    %225 = vector.shape_cast %224 : vector<16xf32> to vector<16x1xf32>
    %226 = tpu.reciprocal %225 {approx = true} : vector<16x1xf32> -> vector<16x1xf32>
    %227 = vector.broadcast %226 : vector<16x1xf32> to vector<16x16xf32>
    %228 = arith.mulf %223, %227 : vector<16x16xf32>
    %229 = arith.truncf %228 : vector<16x16xf32> to vector<16x16xbf16>
    %cst_92 = arith.constant dense<0.000000e+00> : vector<16x16xf32>
    %230 = tpu.matmul %229, %216, %cst_92 {dimension_numbers = #tpu.dot_dimension_numbers<[1], [0], [0], [1], [0, 0, 1, 1], [], []>} : vector<16x16xbf16>, vector<16x16xbf16>, vector<16x16xf32> -> vector<16x16xf32>
    %231 = vector.extract_strided_slice %196 {offsets = [0, 32], sizes = [16, 16], strides = [1, 1]} : vector<16x192xbf16> to vector<16x16xbf16>
    %232 = vector.extract_strided_slice %196 {offsets = [0, 96], sizes = [16, 16], strides = [1, 1]} : vector<16x192xbf16> to vector<16x16xbf16>
    %233 = vector.extract_strided_slice %196 {offsets = [0, 160], sizes = [16, 16], strides = [1, 1]} : vector<16x192xbf16> to vector<16x16xbf16>
    %cst_93 = arith.constant dense<0.000000e+00> : vector<16x16xf32>
    %234 = tpu.matmul %231, %232, %cst_93 {dimension_numbers = #tpu.dot_dimension_numbers<[1], [1], [0], [0], [0, 0, 1, 0], [], []>} : vector<16x16xbf16>, vector<16x16xbf16>, vector<16x16xf32> -> vector<16x16xf32>
    %235 = arith.addf %234, %11 : vector<16x16xf32>
    %cst_94 = arith.constant dense<0xFF800000> : vector<16xf32>
    %236 = vector.multi_reduction <maximumf>, %235, %cst_94 [1] : vector<16x16xf32> to vector<16xf32>
    %237 = vector.shape_cast %236 : vector<16xf32> to vector<16x1xf32>
    %238 = vector.broadcast %237 : vector<16x1xf32> to vector<16x16xf32>
    %239 = arith.subf %235, %238 : vector<16x16xf32>
    %240 = math.exp %239 : vector<16x16xf32>
    %cst_95 = arith.constant dense<0.000000e+00> : vector<16xf32>
    %241 = vector.multi_reduction <add>, %240, %cst_95 [1] : vector<16x16xf32> to vector<16xf32>
    %242 = vector.shape_cast %241 : vector<16xf32> to vector<16x1xf32>
    %243 = tpu.reciprocal %242 {approx = true} : vector<16x1xf32> -> vector<16x1xf32>
    %244 = vector.broadcast %243 : vector<16x1xf32> to vector<16x16xf32>
    %245 = arith.mulf %240, %244 : vector<16x16xf32>
    %246 = arith.truncf %245 : vector<16x16xf32> to vector<16x16xbf16>
    %cst_96 = arith.constant dense<0.000000e+00> : vector<16x16xf32>
    %247 = tpu.matmul %246, %233, %cst_96 {dimension_numbers = #tpu.dot_dimension_numbers<[1], [0], [0], [1], [0, 0, 1, 1], [], []>} : vector<16x16xbf16>, vector<16x16xbf16>, vector<16x16xf32> -> vector<16x16xf32>
    %248 = vector.extract_strided_slice %196 {offsets = [0, 48], sizes = [16, 16], strides = [1, 1]} : vector<16x192xbf16> to vector<16x16xbf16>
    %249 = vector.extract_strided_slice %196 {offsets = [0, 112], sizes = [16, 16], strides = [1, 1]} : vector<16x192xbf16> to vector<16x16xbf16>
    %250 = vector.extract_strided_slice %196 {offsets = [0, 176], sizes = [16, 16], strides = [1, 1]} : vector<16x192xbf16> to vector<16x16xbf16>
    %cst_97 = arith.constant dense<0.000000e+00> : vector<16x16xf32>
    %251 = tpu.matmul %248, %249, %cst_97 {dimension_numbers = #tpu.dot_dimension_numbers<[1], [1], [0], [0], [0, 0, 1, 0], [], []>} : vector<16x16xbf16>, vector<16x16xbf16>, vector<16x16xf32> -> vector<16x16xf32>
    %252 = arith.addf %251, %11 : vector<16x16xf32>
    %cst_98 = arith.constant dense<0xFF800000> : vector<16xf32>
    %253 = vector.multi_reduction <maximumf>, %252, %cst_98 [1] : vector<16x16xf32> to vector<16xf32>
    %254 = vector.shape_cast %253 : vector<16xf32> to vector<16x1xf32>
    %255 = vector.broadcast %254 : vector<16x1xf32> to vector<16x16xf32>
    %256 = arith.subf %252, %255 : vector<16x16xf32>
    %257 = math.exp %256 : vector<16x16xf32>
    %cst_99 = arith.constant dense<0.000000e+00> : vector<16xf32>
    %258 = vector.multi_reduction <add>, %257, %cst_99 [1] : vector<16x16xf32> to vector<16xf32>
    %259 = vector.shape_cast %258 : vector<16xf32> to vector<16x1xf32>
    %260 = tpu.reciprocal %259 {approx = true} : vector<16x1xf32> -> vector<16x1xf32>
    %261 = vector.broadcast %260 : vector<16x1xf32> to vector<16x16xf32>
    %262 = arith.mulf %257, %261 : vector<16x16xf32>
    %263 = arith.truncf %262 : vector<16x16xf32> to vector<16x16xbf16>
    %cst_100 = arith.constant dense<0.000000e+00> : vector<16x16xf32>
    %264 = tpu.matmul %263, %250, %cst_100 {dimension_numbers = #tpu.dot_dimension_numbers<[1], [0], [0], [1], [0, 0, 1, 1], [], []>} : vector<16x16xbf16>, vector<16x16xbf16>, vector<16x16xf32> -> vector<16x16xf32>
    %265 = tpu.concatenate %213, %230, %247, %264 in 1 : vector<16x16xf32>, vector<16x16xf32>, vector<16x16xf32>, vector<16x16xf32> -> vector<16x64xf32>
    %266 = arith.truncf %265 : vector<16x64xf32> to vector<16x64xbf16>
    %c1_101 = arith.constant 1 : index
    %c0_102 = arith.constant 0 : index
    %c0_103 = arith.constant 0 : index
    %267 = vector.load %arg7[%c1_101, %c0_102, %c0_103] : memref<4x64x64xbf16, #tpu.memory_space<vmem>>, vector<1x64x64xbf16>
    %268 = vector.shape_cast %267 : vector<1x64x64xbf16> to vector<64x64xbf16>
    %cst_104 = arith.constant dense<0.000000e+00> : vector<16x64xf32>
    %269 = tpu.matmul %266, %268, %cst_104 {dimension_numbers = #tpu.dot_dimension_numbers<[1], [0], [0], [1], [0, 0, 1, 1], [], []>} : vector<16x64xbf16>, vector<64x64xbf16>, vector<16x64xf32> -> vector<16x64xf32>
    %270 = arith.addf %165, %269 : vector<16x64xf32>
    %c1_105 = arith.constant 1 : index
    %c0_106 = arith.constant 0 : index
    %c0_107 = arith.constant 0 : index
    %271 = vector.load %arg8[%c1_105, %c0_106, %c0_107] : memref<4x1x64xf32, #tpu.memory_space<vmem>>, vector<1x1x64xf32>
    %272 = vector.shape_cast %271 : vector<1x1x64xf32> to vector<1x64xf32>
    %273 = vector.broadcast %272 : vector<1x64xf32> to vector<16x64xf32>
    %274 = arith.addf %270, %273 : vector<16x64xf32>
    %c1_108 = arith.constant 1 : index
    %c0_109 = arith.constant 0 : index
    %c0_110 = arith.constant 0 : index
    %275 = vector.load %arg9[%c1_108, %c0_109, %c0_110] : memref<4x1x64xf32, #tpu.memory_space<vmem>>, vector<1x1x64xf32>
    %276 = vector.shape_cast %275 : vector<1x1x64xf32> to vector<1x64xf32>
    %c1_111 = arith.constant 1 : index
    %c0_112 = arith.constant 0 : index
    %c0_113 = arith.constant 0 : index
    %277 = vector.load %arg10[%c1_111, %c0_112, %c0_113] : memref<4x1x64xf32, #tpu.memory_space<vmem>>, vector<1x1x64xf32>
    %278 = vector.shape_cast %277 : vector<1x1x64xf32> to vector<1x64xf32>
    %cst_114 = arith.constant dense<0.000000e+00> : vector<16xf32>
    %279 = vector.multi_reduction <add>, %274, %cst_114 [1] : vector<16x64xf32> to vector<16xf32>
    %280 = vector.shape_cast %279 : vector<16xf32> to vector<16x1xf32>
    %cst_115 = arith.constant 6.400000e+01 : f32
    %281 = vector.broadcast %cst_115 : f32 to vector<16x1xf32>
    %282 = arith.divf %280, %281 : vector<16x1xf32>
    %283 = vector.broadcast %282 : vector<16x1xf32> to vector<16x64xf32>
    %284 = arith.subf %274, %283 : vector<16x64xf32>
    %285 = arith.mulf %284, %284 : vector<16x64xf32>
    %cst_116 = arith.constant dense<0.000000e+00> : vector<16xf32>
    %286 = vector.multi_reduction <add>, %285, %cst_116 [1] : vector<16x64xf32> to vector<16xf32>
    %287 = vector.shape_cast %286 : vector<16xf32> to vector<16x1xf32>
    %cst_117 = arith.constant 6.400000e+01 : f32
    %288 = vector.broadcast %cst_117 : f32 to vector<16x1xf32>
    %289 = arith.divf %287, %288 : vector<16x1xf32>
    %290 = vector.broadcast %282 : vector<16x1xf32> to vector<16x64xf32>
    %291 = arith.subf %274, %290 : vector<16x64xf32>
    %cst_118 = arith.constant 9.99999974E-6 : f32
    %292 = vector.broadcast %cst_118 : f32 to vector<16x1xf32>
    %293 = arith.addf %289, %292 : vector<16x1xf32>
    %294 = math.rsqrt %293 : vector<16x1xf32>
    %295 = vector.broadcast %294 : vector<16x1xf32> to vector<16x64xf32>
    %296 = arith.mulf %291, %295 : vector<16x64xf32>
    %297 = vector.broadcast %276 : vector<1x64xf32> to vector<16x64xf32>
    %298 = arith.mulf %296, %297 : vector<16x64xf32>
    %299 = vector.broadcast %278 : vector<1x64xf32> to vector<16x64xf32>
    %300 = arith.addf %298, %299 : vector<16x64xf32>
    %301 = arith.truncf %300 : vector<16x64xf32> to vector<16x64xbf16>
    %c1_119 = arith.constant 1 : index
    %c0_120 = arith.constant 0 : index
    %c0_121 = arith.constant 0 : index
    %302 = vector.load %arg11[%c1_119, %c0_120, %c0_121] : memref<4x64x256xbf16, #tpu.memory_space<vmem>>, vector<1x64x256xbf16>
    %303 = vector.shape_cast %302 : vector<1x64x256xbf16> to vector<64x256xbf16>
    %cst_122 = arith.constant dense<0.000000e+00> : vector<16x256xf32>
    %304 = tpu.matmul %301, %303, %cst_122 {dimension_numbers = #tpu.dot_dimension_numbers<[1], [0], [0], [1], [0, 0, 1, 1], [], []>} : vector<16x64xbf16>, vector<64x256xbf16>, vector<16x256xf32> -> vector<16x256xf32>
    %c1_123 = arith.constant 1 : index
    %c0_124 = arith.constant 0 : index
    %c0_125 = arith.constant 0 : index
    %305 = vector.load %arg12[%c1_123, %c0_124, %c0_125] : memref<4x1x256xf32, #tpu.memory_space<vmem>>, vector<1x1x256xf32>
    %306 = vector.shape_cast %305 : vector<1x1x256xf32> to vector<1x256xf32>
    %307 = vector.broadcast %306 : vector<1x256xf32> to vector<16x256xf32>
    %308 = arith.addf %304, %307 : vector<16x256xf32>
    %cst_126 = arith.constant 0.000000e+00 : f32
    %309 = vector.broadcast %cst_126 : f32 to vector<16x256xf32>
    %310 = arith.maximumf %308, %309 : vector<16x256xf32>
    %311 = arith.truncf %310 : vector<16x256xf32> to vector<16x256xbf16>
    %c1_127 = arith.constant 1 : index
    %c0_128 = arith.constant 0 : index
    %c0_129 = arith.constant 0 : index
    %312 = vector.load %arg13[%c1_127, %c0_128, %c0_129] : memref<4x256x64xbf16, #tpu.memory_space<vmem>>, vector<1x256x64xbf16>
    %313 = vector.shape_cast %312 : vector<1x256x64xbf16> to vector<256x64xbf16>
    %cst_130 = arith.constant dense<0.000000e+00> : vector<16x64xf32>
    %314 = tpu.matmul %311, %313, %cst_130 {dimension_numbers = #tpu.dot_dimension_numbers<[1], [0], [0], [1], [0, 0, 1, 1], [], []>} : vector<16x256xbf16>, vector<256x64xbf16>, vector<16x64xf32> -> vector<16x64xf32>
    %315 = arith.addf %274, %314 : vector<16x64xf32>
    %c1_131 = arith.constant 1 : index
    %c0_132 = arith.constant 0 : index
    %c0_133 = arith.constant 0 : index
    %316 = vector.load %arg14[%c1_131, %c0_132, %c0_133] : memref<4x1x64xf32, #tpu.memory_space<vmem>>, vector<1x1x64xf32>
    %317 = vector.shape_cast %316 : vector<1x1x64xf32> to vector<1x64xf32>
    %318 = vector.broadcast %317 : vector<1x64xf32> to vector<16x64xf32>
    %319 = arith.addf %315, %318 : vector<16x64xf32>
    %c2 = arith.constant 2 : index
    %c0_134 = arith.constant 0 : index
    %c0_135 = arith.constant 0 : index
    %320 = vector.load %arg4[%c2, %c0_134, %c0_135] : memref<4x1x64xf32, #tpu.memory_space<vmem>>, vector<1x1x64xf32>
    %321 = vector.shape_cast %320 : vector<1x1x64xf32> to vector<1x64xf32>
    %c2_136 = arith.constant 2 : index
    %c0_137 = arith.constant 0 : index
    %c0_138 = arith.constant 0 : index
    %322 = vector.load %arg5[%c2_136, %c0_137, %c0_138] : memref<4x1x64xf32, #tpu.memory_space<vmem>>, vector<1x1x64xf32>
    %323 = vector.shape_cast %322 : vector<1x1x64xf32> to vector<1x64xf32>
    %cst_139 = arith.constant dense<0.000000e+00> : vector<16xf32>
    %324 = vector.multi_reduction <add>, %319, %cst_139 [1] : vector<16x64xf32> to vector<16xf32>
    %325 = vector.shape_cast %324 : vector<16xf32> to vector<16x1xf32>
    %cst_140 = arith.constant 6.400000e+01 : f32
    %326 = vector.broadcast %cst_140 : f32 to vector<16x1xf32>
    %327 = arith.divf %325, %326 : vector<16x1xf32>
    %328 = vector.broadcast %327 : vector<16x1xf32> to vector<16x64xf32>
    %329 = arith.subf %319, %328 : vector<16x64xf32>
    %330 = arith.mulf %329, %329 : vector<16x64xf32>
    %cst_141 = arith.constant dense<0.000000e+00> : vector<16xf32>
    %331 = vector.multi_reduction <add>, %330, %cst_141 [1] : vector<16x64xf32> to vector<16xf32>
    %332 = vector.shape_cast %331 : vector<16xf32> to vector<16x1xf32>
    %cst_142 = arith.constant 6.400000e+01 : f32
    %333 = vector.broadcast %cst_142 : f32 to vector<16x1xf32>
    %334 = arith.divf %332, %333 : vector<16x1xf32>
    %335 = vector.broadcast %327 : vector<16x1xf32> to vector<16x64xf32>
    %336 = arith.subf %319, %335 : vector<16x64xf32>
    %cst_143 = arith.constant 9.99999974E-6 : f32
    %337 = vector.broadcast %cst_143 : f32 to vector<16x1xf32>
    %338 = arith.addf %334, %337 : vector<16x1xf32>
    %339 = math.rsqrt %338 : vector<16x1xf32>
    %340 = vector.broadcast %339 : vector<16x1xf32> to vector<16x64xf32>
    %341 = arith.mulf %336, %340 : vector<16x64xf32>
    %342 = vector.broadcast %321 : vector<1x64xf32> to vector<16x64xf32>
    %343 = arith.mulf %341, %342 : vector<16x64xf32>
    %344 = vector.broadcast %323 : vector<1x64xf32> to vector<16x64xf32>
    %345 = arith.addf %343, %344 : vector<16x64xf32>
    %346 = arith.truncf %345 : vector<16x64xf32> to vector<16x64xbf16>
    %c2_144 = arith.constant 2 : index
    %c0_145 = arith.constant 0 : index
    %c0_146 = arith.constant 0 : index
    %347 = vector.load %arg6[%c2_144, %c0_145, %c0_146] : memref<4x64x192xbf16, #tpu.memory_space<vmem>>, vector<1x64x192xbf16>
    %348 = vector.shape_cast %347 : vector<1x64x192xbf16> to vector<64x192xbf16>
    %cst_147 = arith.constant dense<0.000000e+00> : vector<16x192xf32>
    %349 = tpu.matmul %346, %348, %cst_147 {dimension_numbers = #tpu.dot_dimension_numbers<[1], [0], [0], [1], [0, 0, 1, 1], [], []>} : vector<16x64xbf16>, vector<64x192xbf16>, vector<16x192xf32> -> vector<16x192xf32>
    %350 = arith.truncf %349 : vector<16x192xf32> to vector<16x192xbf16>
    %351 = vector.extract_strided_slice %350 {offsets = [0, 0], sizes = [16, 16], strides = [1, 1]} : vector<16x192xbf16> to vector<16x16xbf16>
    %352 = vector.extract_strided_slice %350 {offsets = [0, 64], sizes = [16, 16], strides = [1, 1]} : vector<16x192xbf16> to vector<16x16xbf16>
    %353 = vector.extract_strided_slice %350 {offsets = [0, 128], sizes = [16, 16], strides = [1, 1]} : vector<16x192xbf16> to vector<16x16xbf16>
    %cst_148 = arith.constant dense<0.000000e+00> : vector<16x16xf32>
    %354 = tpu.matmul %351, %352, %cst_148 {dimension_numbers = #tpu.dot_dimension_numbers<[1], [1], [0], [0], [0, 0, 1, 0], [], []>} : vector<16x16xbf16>, vector<16x16xbf16>, vector<16x16xf32> -> vector<16x16xf32>
    %355 = arith.addf %354, %11 : vector<16x16xf32>
    %cst_149 = arith.constant dense<0xFF800000> : vector<16xf32>
    %356 = vector.multi_reduction <maximumf>, %355, %cst_149 [1] : vector<16x16xf32> to vector<16xf32>
    %357 = vector.shape_cast %356 : vector<16xf32> to vector<16x1xf32>
    %358 = vector.broadcast %357 : vector<16x1xf32> to vector<16x16xf32>
    %359 = arith.subf %355, %358 : vector<16x16xf32>
    %360 = math.exp %359 : vector<16x16xf32>
    %cst_150 = arith.constant dense<0.000000e+00> : vector<16xf32>
    %361 = vector.multi_reduction <add>, %360, %cst_150 [1] : vector<16x16xf32> to vector<16xf32>
    %362 = vector.shape_cast %361 : vector<16xf32> to vector<16x1xf32>
    %363 = tpu.reciprocal %362 {approx = true} : vector<16x1xf32> -> vector<16x1xf32>
    %364 = vector.broadcast %363 : vector<16x1xf32> to vector<16x16xf32>
    %365 = arith.mulf %360, %364 : vector<16x16xf32>
    %366 = arith.truncf %365 : vector<16x16xf32> to vector<16x16xbf16>
    %cst_151 = arith.constant dense<0.000000e+00> : vector<16x16xf32>
    %367 = tpu.matmul %366, %353, %cst_151 {dimension_numbers = #tpu.dot_dimension_numbers<[1], [0], [0], [1], [0, 0, 1, 1], [], []>} : vector<16x16xbf16>, vector<16x16xbf16>, vector<16x16xf32> -> vector<16x16xf32>
    %368 = vector.extract_strided_slice %350 {offsets = [0, 16], sizes = [16, 16], strides = [1, 1]} : vector<16x192xbf16> to vector<16x16xbf16>
    %369 = vector.extract_strided_slice %350 {offsets = [0, 80], sizes = [16, 16], strides = [1, 1]} : vector<16x192xbf16> to vector<16x16xbf16>
    %370 = vector.extract_strided_slice %350 {offsets = [0, 144], sizes = [16, 16], strides = [1, 1]} : vector<16x192xbf16> to vector<16x16xbf16>
    %cst_152 = arith.constant dense<0.000000e+00> : vector<16x16xf32>
    %371 = tpu.matmul %368, %369, %cst_152 {dimension_numbers = #tpu.dot_dimension_numbers<[1], [1], [0], [0], [0, 0, 1, 0], [], []>} : vector<16x16xbf16>, vector<16x16xbf16>, vector<16x16xf32> -> vector<16x16xf32>
    %372 = arith.addf %371, %11 : vector<16x16xf32>
    %cst_153 = arith.constant dense<0xFF800000> : vector<16xf32>
    %373 = vector.multi_reduction <maximumf>, %372, %cst_153 [1] : vector<16x16xf32> to vector<16xf32>
    %374 = vector.shape_cast %373 : vector<16xf32> to vector<16x1xf32>
    %375 = vector.broadcast %374 : vector<16x1xf32> to vector<16x16xf32>
    %376 = arith.subf %372, %375 : vector<16x16xf32>
    %377 = math.exp %376 : vector<16x16xf32>
    %cst_154 = arith.constant dense<0.000000e+00> : vector<16xf32>
    %378 = vector.multi_reduction <add>, %377, %cst_154 [1] : vector<16x16xf32> to vector<16xf32>
    %379 = vector.shape_cast %378 : vector<16xf32> to vector<16x1xf32>
    %380 = tpu.reciprocal %379 {approx = true} : vector<16x1xf32> -> vector<16x1xf32>
    %381 = vector.broadcast %380 : vector<16x1xf32> to vector<16x16xf32>
    %382 = arith.mulf %377, %381 : vector<16x16xf32>
    %383 = arith.truncf %382 : vector<16x16xf32> to vector<16x16xbf16>
    %cst_155 = arith.constant dense<0.000000e+00> : vector<16x16xf32>
    %384 = tpu.matmul %383, %370, %cst_155 {dimension_numbers = #tpu.dot_dimension_numbers<[1], [0], [0], [1], [0, 0, 1, 1], [], []>} : vector<16x16xbf16>, vector<16x16xbf16>, vector<16x16xf32> -> vector<16x16xf32>
    %385 = vector.extract_strided_slice %350 {offsets = [0, 32], sizes = [16, 16], strides = [1, 1]} : vector<16x192xbf16> to vector<16x16xbf16>
    %386 = vector.extract_strided_slice %350 {offsets = [0, 96], sizes = [16, 16], strides = [1, 1]} : vector<16x192xbf16> to vector<16x16xbf16>
    %387 = vector.extract_strided_slice %350 {offsets = [0, 160], sizes = [16, 16], strides = [1, 1]} : vector<16x192xbf16> to vector<16x16xbf16>
    %cst_156 = arith.constant dense<0.000000e+00> : vector<16x16xf32>
    %388 = tpu.matmul %385, %386, %cst_156 {dimension_numbers = #tpu.dot_dimension_numbers<[1], [1], [0], [0], [0, 0, 1, 0], [], []>} : vector<16x16xbf16>, vector<16x16xbf16>, vector<16x16xf32> -> vector<16x16xf32>
    %389 = arith.addf %388, %11 : vector<16x16xf32>
    %cst_157 = arith.constant dense<0xFF800000> : vector<16xf32>
    %390 = vector.multi_reduction <maximumf>, %389, %cst_157 [1] : vector<16x16xf32> to vector<16xf32>
    %391 = vector.shape_cast %390 : vector<16xf32> to vector<16x1xf32>
    %392 = vector.broadcast %391 : vector<16x1xf32> to vector<16x16xf32>
    %393 = arith.subf %389, %392 : vector<16x16xf32>
    %394 = math.exp %393 : vector<16x16xf32>
    %cst_158 = arith.constant dense<0.000000e+00> : vector<16xf32>
    %395 = vector.multi_reduction <add>, %394, %cst_158 [1] : vector<16x16xf32> to vector<16xf32>
    %396 = vector.shape_cast %395 : vector<16xf32> to vector<16x1xf32>
    %397 = tpu.reciprocal %396 {approx = true} : vector<16x1xf32> -> vector<16x1xf32>
    %398 = vector.broadcast %397 : vector<16x1xf32> to vector<16x16xf32>
    %399 = arith.mulf %394, %398 : vector<16x16xf32>
    %400 = arith.truncf %399 : vector<16x16xf32> to vector<16x16xbf16>
    %cst_159 = arith.constant dense<0.000000e+00> : vector<16x16xf32>
    %401 = tpu.matmul %400, %387, %cst_159 {dimension_numbers = #tpu.dot_dimension_numbers<[1], [0], [0], [1], [0, 0, 1, 1], [], []>} : vector<16x16xbf16>, vector<16x16xbf16>, vector<16x16xf32> -> vector<16x16xf32>
    %402 = vector.extract_strided_slice %350 {offsets = [0, 48], sizes = [16, 16], strides = [1, 1]} : vector<16x192xbf16> to vector<16x16xbf16>
    %403 = vector.extract_strided_slice %350 {offsets = [0, 112], sizes = [16, 16], strides = [1, 1]} : vector<16x192xbf16> to vector<16x16xbf16>
    %404 = vector.extract_strided_slice %350 {offsets = [0, 176], sizes = [16, 16], strides = [1, 1]} : vector<16x192xbf16> to vector<16x16xbf16>
    %cst_160 = arith.constant dense<0.000000e+00> : vector<16x16xf32>
    %405 = tpu.matmul %402, %403, %cst_160 {dimension_numbers = #tpu.dot_dimension_numbers<[1], [1], [0], [0], [0, 0, 1, 0], [], []>} : vector<16x16xbf16>, vector<16x16xbf16>, vector<16x16xf32> -> vector<16x16xf32>
    %406 = arith.addf %405, %11 : vector<16x16xf32>
    %cst_161 = arith.constant dense<0xFF800000> : vector<16xf32>
    %407 = vector.multi_reduction <maximumf>, %406, %cst_161 [1] : vector<16x16xf32> to vector<16xf32>
    %408 = vector.shape_cast %407 : vector<16xf32> to vector<16x1xf32>
    %409 = vector.broadcast %408 : vector<16x1xf32> to vector<16x16xf32>
    %410 = arith.subf %406, %409 : vector<16x16xf32>
    %411 = math.exp %410 : vector<16x16xf32>
    %cst_162 = arith.constant dense<0.000000e+00> : vector<16xf32>
    %412 = vector.multi_reduction <add>, %411, %cst_162 [1] : vector<16x16xf32> to vector<16xf32>
    %413 = vector.shape_cast %412 : vector<16xf32> to vector<16x1xf32>
    %414 = tpu.reciprocal %413 {approx = true} : vector<16x1xf32> -> vector<16x1xf32>
    %415 = vector.broadcast %414 : vector<16x1xf32> to vector<16x16xf32>
    %416 = arith.mulf %411, %415 : vector<16x16xf32>
    %417 = arith.truncf %416 : vector<16x16xf32> to vector<16x16xbf16>
    %cst_163 = arith.constant dense<0.000000e+00> : vector<16x16xf32>
    %418 = tpu.matmul %417, %404, %cst_163 {dimension_numbers = #tpu.dot_dimension_numbers<[1], [0], [0], [1], [0, 0, 1, 1], [], []>} : vector<16x16xbf16>, vector<16x16xbf16>, vector<16x16xf32> -> vector<16x16xf32>
    %419 = tpu.concatenate %367, %384, %401, %418 in 1 : vector<16x16xf32>, vector<16x16xf32>, vector<16x16xf32>, vector<16x16xf32> -> vector<16x64xf32>
    %420 = arith.truncf %419 : vector<16x64xf32> to vector<16x64xbf16>
    %c2_164 = arith.constant 2 : index
    %c0_165 = arith.constant 0 : index
    %c0_166 = arith.constant 0 : index
    %421 = vector.load %arg7[%c2_164, %c0_165, %c0_166] : memref<4x64x64xbf16, #tpu.memory_space<vmem>>, vector<1x64x64xbf16>
    %422 = vector.shape_cast %421 : vector<1x64x64xbf16> to vector<64x64xbf16>
    %cst_167 = arith.constant dense<0.000000e+00> : vector<16x64xf32>
    %423 = tpu.matmul %420, %422, %cst_167 {dimension_numbers = #tpu.dot_dimension_numbers<[1], [0], [0], [1], [0, 0, 1, 1], [], []>} : vector<16x64xbf16>, vector<64x64xbf16>, vector<16x64xf32> -> vector<16x64xf32>
    %424 = arith.addf %319, %423 : vector<16x64xf32>
    %c2_168 = arith.constant 2 : index
    %c0_169 = arith.constant 0 : index
    %c0_170 = arith.constant 0 : index
    %425 = vector.load %arg8[%c2_168, %c0_169, %c0_170] : memref<4x1x64xf32, #tpu.memory_space<vmem>>, vector<1x1x64xf32>
    %426 = vector.shape_cast %425 : vector<1x1x64xf32> to vector<1x64xf32>
    %427 = vector.broadcast %426 : vector<1x64xf32> to vector<16x64xf32>
    %428 = arith.addf %424, %427 : vector<16x64xf32>
    %c2_171 = arith.constant 2 : index
    %c0_172 = arith.constant 0 : index
    %c0_173 = arith.constant 0 : index
    %429 = vector.load %arg9[%c2_171, %c0_172, %c0_173] : memref<4x1x64xf32, #tpu.memory_space<vmem>>, vector<1x1x64xf32>
    %430 = vector.shape_cast %429 : vector<1x1x64xf32> to vector<1x64xf32>
    %c2_174 = arith.constant 2 : index
    %c0_175 = arith.constant 0 : index
    %c0_176 = arith.constant 0 : index
    %431 = vector.load %arg10[%c2_174, %c0_175, %c0_176] : memref<4x1x64xf32, #tpu.memory_space<vmem>>, vector<1x1x64xf32>
    %432 = vector.shape_cast %431 : vector<1x1x64xf32> to vector<1x64xf32>
    %cst_177 = arith.constant dense<0.000000e+00> : vector<16xf32>
    %433 = vector.multi_reduction <add>, %428, %cst_177 [1] : vector<16x64xf32> to vector<16xf32>
    %434 = vector.shape_cast %433 : vector<16xf32> to vector<16x1xf32>
    %cst_178 = arith.constant 6.400000e+01 : f32
    %435 = vector.broadcast %cst_178 : f32 to vector<16x1xf32>
    %436 = arith.divf %434, %435 : vector<16x1xf32>
    %437 = vector.broadcast %436 : vector<16x1xf32> to vector<16x64xf32>
    %438 = arith.subf %428, %437 : vector<16x64xf32>
    %439 = arith.mulf %438, %438 : vector<16x64xf32>
    %cst_179 = arith.constant dense<0.000000e+00> : vector<16xf32>
    %440 = vector.multi_reduction <add>, %439, %cst_179 [1] : vector<16x64xf32> to vector<16xf32>
    %441 = vector.shape_cast %440 : vector<16xf32> to vector<16x1xf32>
    %cst_180 = arith.constant 6.400000e+01 : f32
    %442 = vector.broadcast %cst_180 : f32 to vector<16x1xf32>
    %443 = arith.divf %441, %442 : vector<16x1xf32>
    %444 = vector.broadcast %436 : vector<16x1xf32> to vector<16x64xf32>
    %445 = arith.subf %428, %444 : vector<16x64xf32>
    %cst_181 = arith.constant 9.99999974E-6 : f32
    %446 = vector.broadcast %cst_181 : f32 to vector<16x1xf32>
    %447 = arith.addf %443, %446 : vector<16x1xf32>
    %448 = math.rsqrt %447 : vector<16x1xf32>
    %449 = vector.broadcast %448 : vector<16x1xf32> to vector<16x64xf32>
    %450 = arith.mulf %445, %449 : vector<16x64xf32>
    %451 = vector.broadcast %430 : vector<1x64xf32> to vector<16x64xf32>
    %452 = arith.mulf %450, %451 : vector<16x64xf32>
    %453 = vector.broadcast %432 : vector<1x64xf32> to vector<16x64xf32>
    %454 = arith.addf %452, %453 : vector<16x64xf32>
    %455 = arith.truncf %454 : vector<16x64xf32> to vector<16x64xbf16>
    %c2_182 = arith.constant 2 : index
    %c0_183 = arith.constant 0 : index
    %c0_184 = arith.constant 0 : index
    %456 = vector.load %arg11[%c2_182, %c0_183, %c0_184] : memref<4x64x256xbf16, #tpu.memory_space<vmem>>, vector<1x64x256xbf16>
    %457 = vector.shape_cast %456 : vector<1x64x256xbf16> to vector<64x256xbf16>
    %cst_185 = arith.constant dense<0.000000e+00> : vector<16x256xf32>
    %458 = tpu.matmul %455, %457, %cst_185 {dimension_numbers = #tpu.dot_dimension_numbers<[1], [0], [0], [1], [0, 0, 1, 1], [], []>} : vector<16x64xbf16>, vector<64x256xbf16>, vector<16x256xf32> -> vector<16x256xf32>
    %c2_186 = arith.constant 2 : index
    %c0_187 = arith.constant 0 : index
    %c0_188 = arith.constant 0 : index
    %459 = vector.load %arg12[%c2_186, %c0_187, %c0_188] : memref<4x1x256xf32, #tpu.memory_space<vmem>>, vector<1x1x256xf32>
    %460 = vector.shape_cast %459 : vector<1x1x256xf32> to vector<1x256xf32>
    %461 = vector.broadcast %460 : vector<1x256xf32> to vector<16x256xf32>
    %462 = arith.addf %458, %461 : vector<16x256xf32>
    %cst_189 = arith.constant 0.000000e+00 : f32
    %463 = vector.broadcast %cst_189 : f32 to vector<16x256xf32>
    %464 = arith.maximumf %462, %463 : vector<16x256xf32>
    %465 = arith.truncf %464 : vector<16x256xf32> to vector<16x256xbf16>
    %c2_190 = arith.constant 2 : index
    %c0_191 = arith.constant 0 : index
    %c0_192 = arith.constant 0 : index
    %466 = vector.load %arg13[%c2_190, %c0_191, %c0_192] : memref<4x256x64xbf16, #tpu.memory_space<vmem>>, vector<1x256x64xbf16>
    %467 = vector.shape_cast %466 : vector<1x256x64xbf16> to vector<256x64xbf16>
    %cst_193 = arith.constant dense<0.000000e+00> : vector<16x64xf32>
    %468 = tpu.matmul %465, %467, %cst_193 {dimension_numbers = #tpu.dot_dimension_numbers<[1], [0], [0], [1], [0, 0, 1, 1], [], []>} : vector<16x256xbf16>, vector<256x64xbf16>, vector<16x64xf32> -> vector<16x64xf32>
    %469 = arith.addf %428, %468 : vector<16x64xf32>
    %c2_194 = arith.constant 2 : index
    %c0_195 = arith.constant 0 : index
    %c0_196 = arith.constant 0 : index
    %470 = vector.load %arg14[%c2_194, %c0_195, %c0_196] : memref<4x1x64xf32, #tpu.memory_space<vmem>>, vector<1x1x64xf32>
    %471 = vector.shape_cast %470 : vector<1x1x64xf32> to vector<1x64xf32>
    %472 = vector.broadcast %471 : vector<1x64xf32> to vector<16x64xf32>
    %473 = arith.addf %469, %472 : vector<16x64xf32>
    %c3 = arith.constant 3 : index
    %c0_197 = arith.constant 0 : index
    %c0_198 = arith.constant 0 : index
    %474 = vector.load %arg4[%c3, %c0_197, %c0_198] : memref<4x1x64xf32, #tpu.memory_space<vmem>>, vector<1x1x64xf32>
    %475 = vector.shape_cast %474 : vector<1x1x64xf32> to vector<1x64xf32>
    %c3_199 = arith.constant 3 : index
    %c0_200 = arith.constant 0 : index
    %c0_201 = arith.constant 0 : index
    %476 = vector.load %arg5[%c3_199, %c0_200, %c0_201] : memref<4x1x64xf32, #tpu.memory_space<vmem>>, vector<1x1x64xf32>
    %477 = vector.shape_cast %476 : vector<1x1x64xf32> to vector<1x64xf32>
    %cst_202 = arith.constant dense<0.000000e+00> : vector<16xf32>
    %478 = vector.multi_reduction <add>, %473, %cst_202 [1] : vector<16x64xf32> to vector<16xf32>
    %479 = vector.shape_cast %478 : vector<16xf32> to vector<16x1xf32>
    %cst_203 = arith.constant 6.400000e+01 : f32
    %480 = vector.broadcast %cst_203 : f32 to vector<16x1xf32>
    %481 = arith.divf %479, %480 : vector<16x1xf32>
    %482 = vector.broadcast %481 : vector<16x1xf32> to vector<16x64xf32>
    %483 = arith.subf %473, %482 : vector<16x64xf32>
    %484 = arith.mulf %483, %483 : vector<16x64xf32>
    %cst_204 = arith.constant dense<0.000000e+00> : vector<16xf32>
    %485 = vector.multi_reduction <add>, %484, %cst_204 [1] : vector<16x64xf32> to vector<16xf32>
    %486 = vector.shape_cast %485 : vector<16xf32> to vector<16x1xf32>
    %cst_205 = arith.constant 6.400000e+01 : f32
    %487 = vector.broadcast %cst_205 : f32 to vector<16x1xf32>
    %488 = arith.divf %486, %487 : vector<16x1xf32>
    %489 = vector.broadcast %481 : vector<16x1xf32> to vector<16x64xf32>
    %490 = arith.subf %473, %489 : vector<16x64xf32>
    %cst_206 = arith.constant 9.99999974E-6 : f32
    %491 = vector.broadcast %cst_206 : f32 to vector<16x1xf32>
    %492 = arith.addf %488, %491 : vector<16x1xf32>
    %493 = math.rsqrt %492 : vector<16x1xf32>
    %494 = vector.broadcast %493 : vector<16x1xf32> to vector<16x64xf32>
    %495 = arith.mulf %490, %494 : vector<16x64xf32>
    %496 = vector.broadcast %475 : vector<1x64xf32> to vector<16x64xf32>
    %497 = arith.mulf %495, %496 : vector<16x64xf32>
    %498 = vector.broadcast %477 : vector<1x64xf32> to vector<16x64xf32>
    %499 = arith.addf %497, %498 : vector<16x64xf32>
    %500 = arith.truncf %499 : vector<16x64xf32> to vector<16x64xbf16>
    %c3_207 = arith.constant 3 : index
    %c0_208 = arith.constant 0 : index
    %c0_209 = arith.constant 0 : index
    %501 = vector.load %arg6[%c3_207, %c0_208, %c0_209] : memref<4x64x192xbf16, #tpu.memory_space<vmem>>, vector<1x64x192xbf16>
    %502 = vector.shape_cast %501 : vector<1x64x192xbf16> to vector<64x192xbf16>
    %cst_210 = arith.constant dense<0.000000e+00> : vector<16x192xf32>
    %503 = tpu.matmul %500, %502, %cst_210 {dimension_numbers = #tpu.dot_dimension_numbers<[1], [0], [0], [1], [0, 0, 1, 1], [], []>} : vector<16x64xbf16>, vector<64x192xbf16>, vector<16x192xf32> -> vector<16x192xf32>
    %504 = arith.truncf %503 : vector<16x192xf32> to vector<16x192xbf16>
    %505 = vector.extract_strided_slice %504 {offsets = [0, 0], sizes = [16, 16], strides = [1, 1]} : vector<16x192xbf16> to vector<16x16xbf16>
    %506 = vector.extract_strided_slice %504 {offsets = [0, 64], sizes = [16, 16], strides = [1, 1]} : vector<16x192xbf16> to vector<16x16xbf16>
    %507 = vector.extract_strided_slice %504 {offsets = [0, 128], sizes = [16, 16], strides = [1, 1]} : vector<16x192xbf16> to vector<16x16xbf16>
    %cst_211 = arith.constant dense<0.000000e+00> : vector<16x16xf32>
    %508 = tpu.matmul %505, %506, %cst_211 {dimension_numbers = #tpu.dot_dimension_numbers<[1], [1], [0], [0], [0, 0, 1, 0], [], []>} : vector<16x16xbf16>, vector<16x16xbf16>, vector<16x16xf32> -> vector<16x16xf32>
    %509 = arith.addf %508, %11 : vector<16x16xf32>
    %cst_212 = arith.constant dense<0xFF800000> : vector<16xf32>
    %510 = vector.multi_reduction <maximumf>, %509, %cst_212 [1] : vector<16x16xf32> to vector<16xf32>
    %511 = vector.shape_cast %510 : vector<16xf32> to vector<16x1xf32>
    %512 = vector.broadcast %511 : vector<16x1xf32> to vector<16x16xf32>
    %513 = arith.subf %509, %512 : vector<16x16xf32>
    %514 = math.exp %513 : vector<16x16xf32>
    %cst_213 = arith.constant dense<0.000000e+00> : vector<16xf32>
    %515 = vector.multi_reduction <add>, %514, %cst_213 [1] : vector<16x16xf32> to vector<16xf32>
    %516 = vector.shape_cast %515 : vector<16xf32> to vector<16x1xf32>
    %517 = tpu.reciprocal %516 {approx = true} : vector<16x1xf32> -> vector<16x1xf32>
    %518 = vector.broadcast %517 : vector<16x1xf32> to vector<16x16xf32>
    %519 = arith.mulf %514, %518 : vector<16x16xf32>
    %520 = arith.truncf %519 : vector<16x16xf32> to vector<16x16xbf16>
    %cst_214 = arith.constant dense<0.000000e+00> : vector<16x16xf32>
    %521 = tpu.matmul %520, %507, %cst_214 {dimension_numbers = #tpu.dot_dimension_numbers<[1], [0], [0], [1], [0, 0, 1, 1], [], []>} : vector<16x16xbf16>, vector<16x16xbf16>, vector<16x16xf32> -> vector<16x16xf32>
    %522 = vector.extract_strided_slice %504 {offsets = [0, 16], sizes = [16, 16], strides = [1, 1]} : vector<16x192xbf16> to vector<16x16xbf16>
    %523 = vector.extract_strided_slice %504 {offsets = [0, 80], sizes = [16, 16], strides = [1, 1]} : vector<16x192xbf16> to vector<16x16xbf16>
    %524 = vector.extract_strided_slice %504 {offsets = [0, 144], sizes = [16, 16], strides = [1, 1]} : vector<16x192xbf16> to vector<16x16xbf16>
    %cst_215 = arith.constant dense<0.000000e+00> : vector<16x16xf32>
    %525 = tpu.matmul %522, %523, %cst_215 {dimension_numbers = #tpu.dot_dimension_numbers<[1], [1], [0], [0], [0, 0, 1, 0], [], []>} : vector<16x16xbf16>, vector<16x16xbf16>, vector<16x16xf32> -> vector<16x16xf32>
    %526 = arith.addf %525, %11 : vector<16x16xf32>
    %cst_216 = arith.constant dense<0xFF800000> : vector<16xf32>
    %527 = vector.multi_reduction <maximumf>, %526, %cst_216 [1] : vector<16x16xf32> to vector<16xf32>
    %528 = vector.shape_cast %527 : vector<16xf32> to vector<16x1xf32>
    %529 = vector.broadcast %528 : vector<16x1xf32> to vector<16x16xf32>
    %530 = arith.subf %526, %529 : vector<16x16xf32>
    %531 = math.exp %530 : vector<16x16xf32>
    %cst_217 = arith.constant dense<0.000000e+00> : vector<16xf32>
    %532 = vector.multi_reduction <add>, %531, %cst_217 [1] : vector<16x16xf32> to vector<16xf32>
    %533 = vector.shape_cast %532 : vector<16xf32> to vector<16x1xf32>
    %534 = tpu.reciprocal %533 {approx = true} : vector<16x1xf32> -> vector<16x1xf32>
    %535 = vector.broadcast %534 : vector<16x1xf32> to vector<16x16xf32>
    %536 = arith.mulf %531, %535 : vector<16x16xf32>
    %537 = arith.truncf %536 : vector<16x16xf32> to vector<16x16xbf16>
    %cst_218 = arith.constant dense<0.000000e+00> : vector<16x16xf32>
    %538 = tpu.matmul %537, %524, %cst_218 {dimension_numbers = #tpu.dot_dimension_numbers<[1], [0], [0], [1], [0, 0, 1, 1], [], []>} : vector<16x16xbf16>, vector<16x16xbf16>, vector<16x16xf32> -> vector<16x16xf32>
    %539 = vector.extract_strided_slice %504 {offsets = [0, 32], sizes = [16, 16], strides = [1, 1]} : vector<16x192xbf16> to vector<16x16xbf16>
    %540 = vector.extract_strided_slice %504 {offsets = [0, 96], sizes = [16, 16], strides = [1, 1]} : vector<16x192xbf16> to vector<16x16xbf16>
    %541 = vector.extract_strided_slice %504 {offsets = [0, 160], sizes = [16, 16], strides = [1, 1]} : vector<16x192xbf16> to vector<16x16xbf16>
    %cst_219 = arith.constant dense<0.000000e+00> : vector<16x16xf32>
    %542 = tpu.matmul %539, %540, %cst_219 {dimension_numbers = #tpu.dot_dimension_numbers<[1], [1], [0], [0], [0, 0, 1, 0], [], []>} : vector<16x16xbf16>, vector<16x16xbf16>, vector<16x16xf32> -> vector<16x16xf32>
    %543 = arith.addf %542, %11 : vector<16x16xf32>
    %cst_220 = arith.constant dense<0xFF800000> : vector<16xf32>
    %544 = vector.multi_reduction <maximumf>, %543, %cst_220 [1] : vector<16x16xf32> to vector<16xf32>
    %545 = vector.shape_cast %544 : vector<16xf32> to vector<16x1xf32>
    %546 = vector.broadcast %545 : vector<16x1xf32> to vector<16x16xf32>
    %547 = arith.subf %543, %546 : vector<16x16xf32>
    %548 = math.exp %547 : vector<16x16xf32>
    %cst_221 = arith.constant dense<0.000000e+00> : vector<16xf32>
    %549 = vector.multi_reduction <add>, %548, %cst_221 [1] : vector<16x16xf32> to vector<16xf32>
    %550 = vector.shape_cast %549 : vector<16xf32> to vector<16x1xf32>
    %551 = tpu.reciprocal %550 {approx = true} : vector<16x1xf32> -> vector<16x1xf32>
    %552 = vector.broadcast %551 : vector<16x1xf32> to vector<16x16xf32>
    %553 = arith.mulf %548, %552 : vector<16x16xf32>
    %554 = arith.truncf %553 : vector<16x16xf32> to vector<16x16xbf16>
    %cst_222 = arith.constant dense<0.000000e+00> : vector<16x16xf32>
    %555 = tpu.matmul %554, %541, %cst_222 {dimension_numbers = #tpu.dot_dimension_numbers<[1], [0], [0], [1], [0, 0, 1, 1], [], []>} : vector<16x16xbf16>, vector<16x16xbf16>, vector<16x16xf32> -> vector<16x16xf32>
    %556 = vector.extract_strided_slice %504 {offsets = [0, 48], sizes = [16, 16], strides = [1, 1]} : vector<16x192xbf16> to vector<16x16xbf16>
    %557 = vector.extract_strided_slice %504 {offsets = [0, 112], sizes = [16, 16], strides = [1, 1]} : vector<16x192xbf16> to vector<16x16xbf16>
    %558 = vector.extract_strided_slice %504 {offsets = [0, 176], sizes = [16, 16], strides = [1, 1]} : vector<16x192xbf16> to vector<16x16xbf16>
    %cst_223 = arith.constant dense<0.000000e+00> : vector<16x16xf32>
    %559 = tpu.matmul %556, %557, %cst_223 {dimension_numbers = #tpu.dot_dimension_numbers<[1], [1], [0], [0], [0, 0, 1, 0], [], []>} : vector<16x16xbf16>, vector<16x16xbf16>, vector<16x16xf32> -> vector<16x16xf32>
    %560 = arith.addf %559, %11 : vector<16x16xf32>
    %cst_224 = arith.constant dense<0xFF800000> : vector<16xf32>
    %561 = vector.multi_reduction <maximumf>, %560, %cst_224 [1] : vector<16x16xf32> to vector<16xf32>
    %562 = vector.shape_cast %561 : vector<16xf32> to vector<16x1xf32>
    %563 = vector.broadcast %562 : vector<16x1xf32> to vector<16x16xf32>
    %564 = arith.subf %560, %563 : vector<16x16xf32>
    %565 = math.exp %564 : vector<16x16xf32>
    %cst_225 = arith.constant dense<0.000000e+00> : vector<16xf32>
    %566 = vector.multi_reduction <add>, %565, %cst_225 [1] : vector<16x16xf32> to vector<16xf32>
    %567 = vector.shape_cast %566 : vector<16xf32> to vector<16x1xf32>
    %568 = tpu.reciprocal %567 {approx = true} : vector<16x1xf32> -> vector<16x1xf32>
    %569 = vector.broadcast %568 : vector<16x1xf32> to vector<16x16xf32>
    %570 = arith.mulf %565, %569 : vector<16x16xf32>
    %571 = arith.truncf %570 : vector<16x16xf32> to vector<16x16xbf16>
    %cst_226 = arith.constant dense<0.000000e+00> : vector<16x16xf32>
    %572 = tpu.matmul %571, %558, %cst_226 {dimension_numbers = #tpu.dot_dimension_numbers<[1], [0], [0], [1], [0, 0, 1, 1], [], []>} : vector<16x16xbf16>, vector<16x16xbf16>, vector<16x16xf32> -> vector<16x16xf32>
    %573 = tpu.concatenate %521, %538, %555, %572 in 1 : vector<16x16xf32>, vector<16x16xf32>, vector<16x16xf32>, vector<16x16xf32> -> vector<16x64xf32>
    %574 = arith.truncf %573 : vector<16x64xf32> to vector<16x64xbf16>
    %c3_227 = arith.constant 3 : index
    %c0_228 = arith.constant 0 : index
    %c0_229 = arith.constant 0 : index
    %575 = vector.load %arg7[%c3_227, %c0_228, %c0_229] : memref<4x64x64xbf16, #tpu.memory_space<vmem>>, vector<1x64x64xbf16>
    %576 = vector.shape_cast %575 : vector<1x64x64xbf16> to vector<64x64xbf16>
    %cst_230 = arith.constant dense<0.000000e+00> : vector<16x64xf32>
    %577 = tpu.matmul %574, %576, %cst_230 {dimension_numbers = #tpu.dot_dimension_numbers<[1], [0], [0], [1], [0, 0, 1, 1], [], []>} : vector<16x64xbf16>, vector<64x64xbf16>, vector<16x64xf32> -> vector<16x64xf32>
    %578 = arith.addf %473, %577 : vector<16x64xf32>
    %c3_231 = arith.constant 3 : index
    %c0_232 = arith.constant 0 : index
    %c0_233 = arith.constant 0 : index
    %579 = vector.load %arg8[%c3_231, %c0_232, %c0_233] : memref<4x1x64xf32, #tpu.memory_space<vmem>>, vector<1x1x64xf32>
    %580 = vector.shape_cast %579 : vector<1x1x64xf32> to vector<1x64xf32>
    %581 = vector.broadcast %580 : vector<1x64xf32> to vector<16x64xf32>
    %582 = arith.addf %578, %581 : vector<16x64xf32>
    %c3_234 = arith.constant 3 : index
    %c0_235 = arith.constant 0 : index
    %c0_236 = arith.constant 0 : index
    %583 = vector.load %arg9[%c3_234, %c0_235, %c0_236] : memref<4x1x64xf32, #tpu.memory_space<vmem>>, vector<1x1x64xf32>
    %584 = vector.shape_cast %583 : vector<1x1x64xf32> to vector<1x64xf32>
    %c3_237 = arith.constant 3 : index
    %c0_238 = arith.constant 0 : index
    %c0_239 = arith.constant 0 : index
    %585 = vector.load %arg10[%c3_237, %c0_238, %c0_239] : memref<4x1x64xf32, #tpu.memory_space<vmem>>, vector<1x1x64xf32>
    %586 = vector.shape_cast %585 : vector<1x1x64xf32> to vector<1x64xf32>
    %cst_240 = arith.constant dense<0.000000e+00> : vector<16xf32>
    %587 = vector.multi_reduction <add>, %582, %cst_240 [1] : vector<16x64xf32> to vector<16xf32>
    %588 = vector.shape_cast %587 : vector<16xf32> to vector<16x1xf32>
    %cst_241 = arith.constant 6.400000e+01 : f32
    %589 = vector.broadcast %cst_241 : f32 to vector<16x1xf32>
    %590 = arith.divf %588, %589 : vector<16x1xf32>
    %591 = vector.broadcast %590 : vector<16x1xf32> to vector<16x64xf32>
    %592 = arith.subf %582, %591 : vector<16x64xf32>
    %593 = arith.mulf %592, %592 : vector<16x64xf32>
    %cst_242 = arith.constant dense<0.000000e+00> : vector<16xf32>
    %594 = vector.multi_reduction <add>, %593, %cst_242 [1] : vector<16x64xf32> to vector<16xf32>
    %595 = vector.shape_cast %594 : vector<16xf32> to vector<16x1xf32>
    %cst_243 = arith.constant 6.400000e+01 : f32
    %596 = vector.broadcast %cst_243 : f32 to vector<16x1xf32>
    %597 = arith.divf %595, %596 : vector<16x1xf32>
    %598 = vector.broadcast %590 : vector<16x1xf32> to vector<16x64xf32>
    %599 = arith.subf %582, %598 : vector<16x64xf32>
    %cst_244 = arith.constant 9.99999974E-6 : f32
    %600 = vector.broadcast %cst_244 : f32 to vector<16x1xf32>
    %601 = arith.addf %597, %600 : vector<16x1xf32>
    %602 = math.rsqrt %601 : vector<16x1xf32>
    %603 = vector.broadcast %602 : vector<16x1xf32> to vector<16x64xf32>
    %604 = arith.mulf %599, %603 : vector<16x64xf32>
    %605 = vector.broadcast %584 : vector<1x64xf32> to vector<16x64xf32>
    %606 = arith.mulf %604, %605 : vector<16x64xf32>
    %607 = vector.broadcast %586 : vector<1x64xf32> to vector<16x64xf32>
    %608 = arith.addf %606, %607 : vector<16x64xf32>
    %609 = arith.truncf %608 : vector<16x64xf32> to vector<16x64xbf16>
    %c3_245 = arith.constant 3 : index
    %c0_246 = arith.constant 0 : index
    %c0_247 = arith.constant 0 : index
    %610 = vector.load %arg11[%c3_245, %c0_246, %c0_247] : memref<4x64x256xbf16, #tpu.memory_space<vmem>>, vector<1x64x256xbf16>
    %611 = vector.shape_cast %610 : vector<1x64x256xbf16> to vector<64x256xbf16>
    %cst_248 = arith.constant dense<0.000000e+00> : vector<16x256xf32>
    %612 = tpu.matmul %609, %611, %cst_248 {dimension_numbers = #tpu.dot_dimension_numbers<[1], [0], [0], [1], [0, 0, 1, 1], [], []>} : vector<16x64xbf16>, vector<64x256xbf16>, vector<16x256xf32> -> vector<16x256xf32>
    %c3_249 = arith.constant 3 : index
    %c0_250 = arith.constant 0 : index
    %c0_251 = arith.constant 0 : index
    %613 = vector.load %arg12[%c3_249, %c0_250, %c0_251] : memref<4x1x256xf32, #tpu.memory_space<vmem>>, vector<1x1x256xf32>
    %614 = vector.shape_cast %613 : vector<1x1x256xf32> to vector<1x256xf32>
    %615 = vector.broadcast %614 : vector<1x256xf32> to vector<16x256xf32>
    %616 = arith.addf %612, %615 : vector<16x256xf32>
    %cst_252 = arith.constant 0.000000e+00 : f32
    %617 = vector.broadcast %cst_252 : f32 to vector<16x256xf32>
    %618 = arith.maximumf %616, %617 : vector<16x256xf32>
    %619 = arith.truncf %618 : vector<16x256xf32> to vector<16x256xbf16>
    %c3_253 = arith.constant 3 : index
    %c0_254 = arith.constant 0 : index
    %c0_255 = arith.constant 0 : index
    %620 = vector.load %arg13[%c3_253, %c0_254, %c0_255] : memref<4x256x64xbf16, #tpu.memory_space<vmem>>, vector<1x256x64xbf16>
    %621 = vector.shape_cast %620 : vector<1x256x64xbf16> to vector<256x64xbf16>
    %cst_256 = arith.constant dense<0.000000e+00> : vector<16x64xf32>
    %622 = tpu.matmul %619, %621, %cst_256 {dimension_numbers = #tpu.dot_dimension_numbers<[1], [0], [0], [1], [0, 0, 1, 1], [], []>} : vector<16x256xbf16>, vector<256x64xbf16>, vector<16x64xf32> -> vector<16x64xf32>
    %623 = arith.addf %582, %622 : vector<16x64xf32>
    %c3_257 = arith.constant 3 : index
    %c0_258 = arith.constant 0 : index
    %c0_259 = arith.constant 0 : index
    %624 = vector.load %arg14[%c3_257, %c0_258, %c0_259] : memref<4x1x64xf32, #tpu.memory_space<vmem>>, vector<1x1x64xf32>
    %625 = vector.shape_cast %624 : vector<1x1x64xf32> to vector<1x64xf32>
    %626 = vector.broadcast %625 : vector<1x64xf32> to vector<16x64xf32>
    %627 = arith.addf %623, %626 : vector<16x64xf32>
    %628 = arith.truncf %627 : vector<16x64xf32> to vector<16x64xbf16>
    %c0_260 = arith.constant 0 : index
    %c0_261 = arith.constant 0 : index
    %629 = vector.load %arg15[%c0_260, %c0_261] : memref<64x128xbf16, #tpu.memory_space<vmem>>, vector<64x128xbf16>
    %cst_262 = arith.constant dense<0.000000e+00> : vector<16x128xf32>
    %630 = tpu.matmul %628, %629, %cst_262 {dimension_numbers = #tpu.dot_dimension_numbers<[1], [0], [0], [1], [0, 0, 1, 1], [], []>} : vector<16x64xbf16>, vector<64x128xbf16>, vector<16x128xf32> -> vector<16x128xf32>
    %c0_263 = arith.constant 0 : index
    %c0_264 = arith.constant 0 : index
    %631 = vector.load %arg16[%c0_263, %c0_264] : memref<1x128xf32, #tpu.memory_space<vmem>>, vector<1x128xf32>
    %632 = vector.broadcast %631 : vector<1x128xf32> to vector<16x128xf32>
    %633 = arith.addf %630, %632 : vector<16x128xf32>
    %c0_265 = arith.constant 0 : index
    %c0_266 = arith.constant 0 : index
    %634 = vector.load %arg17[%c0_265, %c0_266] : memref<16x128xf32, #tpu.memory_space<vmem>>, vector<16x128xf32>
    tpu.vector_store %arg17[%c0_265, %c0_266], %633 {strides = array<i32>} : memref<16x128xf32, #tpu.memory_space<vmem>>, vector<16x128xf32>,
    return
  }
}

</mosaic_0001>

<llo_original>
// kernel: bigram_forward.1
$region0: #{bigram_forward.1}
  #allocation0 [shape = 'u32[]', space=smem, size = 0x4, offset = 0x4, fixed_abs, tag = 'smem constant byte address 0x4 - core index']
  #allocation1 [shape = 'u32[144,128]{1,0:T(1,128)}', space=vmem, size = 0x12000, scoped, tag = 'internal scratch']
  %s0 = inlined_call_operand.vmem [shape: s32[16,1], index: 0, kind: input, shape index: {}]
  %s1 = inlined_call_operand.vmem [shape: f32[16,16], index: 1, kind: input, shape index: {}]
  %s2 = inlined_call_operand.vmem [shape: bf16[128,64], index: 2, kind: input, shape index: {}]
  %s3 = inlined_call_operand.vmem [shape: f32[16,64], index: 3, kind: input, shape index: {}]
  %s4 = inlined_call_operand.vmem [shape: f32[4,1,64], index: 4, kind: input, shape index: {}]
  %s5 = inlined_call_operand.vmem [shape: f32[4,1,64], index: 5, kind: input, shape index: {}]
  %s6 = inlined_call_operand.vmem [shape: bf16[4,64,192], index: 6, kind: input, shape index: {}]
  %s7 = inlined_call_operand.vmem [shape: bf16[4,64,64], index: 7, kind: input, shape index: {}]
  %s8 = inlined_call_operand.vmem [shape: f32[4,1,64], index: 8, kind: input, shape index: {}]
  %s9 = inlined_call_operand.vmem [shape: f32[4,1,64], index: 9, kind: input, shape index: {}]
  %s10 = inlined_call_operand.vmem [shape: f32[4,1,64], index: 10, kind: input, shape index: {}]
  %s11 = inlined_call_operand.vmem [shape: bf16[4,64,256], index: 11, kind: input, shape index: {}]
  %s12 = inlined_call_operand.vmem [shape: f32[4,1,256], index: 12, kind: input, shape index: {}]
  %s13 = inlined_call_operand.vmem [shape: bf16[4,256,64], index: 13, kind: input, shape index: {}]
  %s14 = inlined_call_operand.vmem [shape: f32[4,1,64], index: 14, kind: input, shape index: {}]
  %s15 = inlined_call_operand.vmem [shape: bf16[64,128], index: 15, kind: input, shape index: {}]
  %s16 = inlined_call_operand.vmem [shape: f32[1,128], index: 16, kind: input, shape index: {}]
  %s17 = inlined_call_operand.hbm [shape: f32[16,128], index: 17, kind: output, shape index: {}]
  %s18 = sld [smem:[#allocation0]]
  $region78: #{bigram_forward.1} parent=0
    _
  %s20 = ssub.s32 1, %s18
  %s21 = scalar_select 0, %s20, %s18
  $region1: #{bigram_forward.1} parent=0
    #allocation2 [shape = 'u8[8192]{0}', space=vmem, size = 0x2000, scoped, tag = 'output window, operand 0, single buffered']
    #allocation3 [shape = 's32[1]{0}', space=sflag, size = 0x4, scoped, tag = 'scoped memory for bigram_forward.1']
    %22 = vsyncpa [#allocation3], 0
    // Predicated region
    $region2: #{bigram_forward.1} parent=1 // pred_check
      _
    $region3: #{bigram_forward.1} parent=1 // pred_check_branch
      %24 = sbr.rel (0) target = $region5
    $region4: #{bigram_forward.1} parent=1 // pred_region
      _
    $region5: #{bigram_forward.1} parent=1 // pred_fallthru
      _
    // Predicated region
    $region6: #{bigram_forward.1} parent=1 // pred_check
      _
    $region7: #{bigram_forward.1} parent=1 // pred_check_branch
      %26 = sbr.rel (0) target = $region9
    $region8: #{bigram_forward.1} parent=1 // pred_region
      _
    $region9: #{bigram_forward.1} parent=1 // pred_fallthru
      _
    // Predicated region
    $region10: #{bigram_forward.1} parent=1 // pred_check
      _
    $region11: #{bigram_forward.1} parent=1 // pred_check_branch
      %28 = sbr.rel (0) target = $region13
    $region12: #{bigram_forward.1} parent=1 // pred_region
      _
    $region13: #{bigram_forward.1} parent=1 // pred_fallthru
      _
    // Predicated region
    $region14: #{bigram_forward.1} parent=1 // pred_check
      _
    $region15: #{bigram_forward.1} parent=1 // pred_check_branch
      %30 = sbr.rel (0) target = $region17
    $region16: #{bigram_forward.1} parent=1 // pred_region
      _
    $region17: #{bigram_forward.1} parent=1 // pred_fallthru
      _
    // Predicated region
    $region18: #{bigram_forward.1} parent=1 // pred_check
      _
    $region19: #{bigram_forward.1} parent=1 // pred_check_branch
      %32 = sbr.rel (0) target = $region21
    $region20: #{bigram_forward.1} parent=1 // pred_region
      _
    $region21: #{bigram_forward.1} parent=1 // pred_fallthru
      _
    // Predicated region
    $region22: #{bigram_forward.1} parent=1 // pred_check
      _
    $region23: #{bigram_forward.1} parent=1 // pred_check_branch
      %34 = sbr.rel (0) target = $region25
    $region24: #{bigram_forward.1} parent=1 // pred_region
      _
    $region25: #{bigram_forward.1} parent=1 // pred_fallthru
      _
    // Predicated region
    $region26: #{bigram_forward.1} parent=1 // pred_check
      _
    $region27: #{bigram_forward.1} parent=1 // pred_check_branch
      %36 = sbr.rel (0) target = $region29
    $region28: #{bigram_forward.1} parent=1 // pred_region
      _
    $region29: #{bigram_forward.1} parent=1 // pred_fallthru
      _
    // Predicated region
    $region30: #{bigram_forward.1} parent=1 // pred_check
      _
    $region31: #{bigram_forward.1} parent=1 // pred_check_branch
      %38 = sbr.rel (0) target = $region33
    $region32: #{bigram_forward.1} parent=1 // pred_region
      _
    $region33: #{bigram_forward.1} parent=1 // pred_fallthru
      _
    // Predicated region
    $region34: #{bigram_forward.1} parent=1 // pred_check
      _
    $region35: #{bigram_forward.1} parent=1 // pred_check_branch
      %40 = sbr.rel (0) target = $region37
    $region36: #{bigram_forward.1} parent=1 // pred_region
      _
    $region37: #{bigram_forward.1} parent=1 // pred_fallthru
      _
    // Predicated region
    $region38: #{bigram_forward.1} parent=1 // pred_check
      _
    $region39: #{bigram_forward.1} parent=1 // pred_check_branch
      %42 = sbr.rel (0) target = $region41
    $region40: #{bigram_forward.1} parent=1 // pred_region
      _
    $region41: #{bigram_forward.1} parent=1 // pred_fallthru
      _
    // Predicated region
    $region42: #{bigram_forward.1} parent=1 // pred_check
      _
    $region43: #{bigram_forward.1} parent=1 // pred_check_branch
      %44 = sbr.rel (0) target = $region45
    $region44: #{bigram_forward.1} parent=1 // pred_region
      _
    $region45: #{bigram_forward.1} parent=1 // pred_fallthru
      _
    // Predicated region
    $region46: #{bigram_forward.1} parent=1 // pred_check
      _
    $region47: #{bigram_forward.1} parent=1 // pred_check_branch
      %46 = sbr.rel (0) target = $region49
    $region48: #{bigram_forward.1} parent=1 // pred_region
      _
    $region49: #{bigram_forward.1} parent=1 // pred_fallthru
      _
    // Predicated region
    $region50: #{bigram_forward.1} parent=1 // pred_check
      _
    $region51: #{bigram_forward.1} parent=1 // pred_check_branch
      %48 = sbr.rel (0) target = $region53
    $region52: #{bigram_forward.1} parent=1 // pred_region
      _
    $region53: #{bigram_forward.1} parent=1 // pred_fallthru
      _
    // Predicated region
    $region54: #{bigram_forward.1} parent=1 // pred_check
      _
    $region55: #{bigram_forward.1} parent=1 // pred_check_branch
      %50 = sbr.rel (0) target = $region57
    $region56: #{bigram_forward.1} parent=1 // pred_region
      _
    $region57: #{bigram_forward.1} parent=1 // pred_fallthru
      _
    // Predicated region
    $region58: #{bigram_forward.1} parent=1 // pred_check
      _
    $region59: #{bigram_forward.1} parent=1 // pred_check_branch
      %52 = sbr.rel (0) target = $region61
    $region60: #{bigram_forward.1} parent=1 // pred_region
      _
    $region61: #{bigram_forward.1} parent=1 // pred_fallthru
      _
    // Predicated region
    $region62: #{bigram_forward.1} parent=1 // pred_check
      _
    $region63: #{bigram_forward.1} parent=1 // pred_check_branch
      %54 = sbr.rel (0) target = $region65
    $region64: #{bigram_forward.1} parent=1 // pred_region
      _
    $region65: #{bigram_forward.1} parent=1 // pred_fallthru
      _
    // Predicated region
    $region66: #{bigram_forward.1} parent=1 // pred_check
      _
    $region67: #{bigram_forward.1} parent=1 // pred_check_branch
      %56 = sbr.rel (0) target = $region69
    $region68: #{bigram_forward.1} parent=1 // pred_region
      _
    $region69: #{bigram_forward.1} parent=1 // pred_fallthru
      _
    %v58 = vld [vmem:[%s0] sm:$0xff]
    %v59 = vld [vmem:[%s0 + $0x8] sm:$0xff]
    %v60 = vlaneseq
    %v61 = vand.u32 %v60, 127
    %62 = vset.pattern.permute.xlu0 0
    %63 = vperm.xlu0 %62, %v58
    %v64 = vpop.permute.xlu0 %63
    %65 = vset.pattern.permute.xlu0 0
    %66 = vperm.xlu0 %65, %v59
    %v67 = vpop.permute.xlu0 %66
    %vm68 = vcmp.eq.s32.totalorder %v61, %v64
    %vm69 = vcmp.eq.s32.totalorder %v61, %v67
    %v70 = vsel %vm68, 1, 0
    %v71 = vsel %vm69, 1, 0
    %v72 = vcvt.s32.f32 %v70
    %v73 = vcvt.s32.f32 %v71
    %v74 = vpack.c.bf16 %v73, %v72
    %v75 = vld [vmem:[%s2] sm:$0xf]
    %v76 = vld [vmem:[%s2 + $0x4] sm:$0xf]
    %v77 = vld [vmem:[%s2 + $0x8] sm:$0xf]
    %v78 = vld [vmem:[%s2 + $0xc] sm:$0xf]
    %v79 = vld [vmem:[%s2 + $0x10] sm:$0xf]
    %v80 = vld [vmem:[%s2 + $0x14] sm:$0xf]
    %v81 = vld [vmem:[%s2 + $0x18] sm:$0xf]
    %v82 = vld [vmem:[%s2 + $0x1c] sm:$0xf]
    %v83 = vld [vmem:[%s2 + $0x20] sm:$0xf]
    %v84 = vld [vmem:[%s2 + $0x24] sm:$0xf]
    %v85 = vld [vmem:[%s2 + $0x28] sm:$0xf]
    %v86 = vld [vmem:[%s2 + $0x2c] sm:$0xf]
    %v87 = vld [vmem:[%s2 + $0x30] sm:$0xf]
    %v88 = vld [vmem:[%s2 + $0x34] sm:$0xf]
    %v89 = vld [vmem:[%s2 + $0x38] sm:$0xf]
    %v90 = vld [vmem:[%s2 + $0x3c] sm:$0xf]
    %v91 = vld [vmem:[%s3] sm:$0xff]
    %v92 = vld [vmem:[%s3 + $0x8] sm:$0xff]
    %v109 = vunpack.c.l.b16 %v75
    %v110 = vunpack.c.l.b16 %v76
    %v111 = vunpack.c.l.b16 %v77
    %v112 = vunpack.c.l.b16 %v78
    %v113 = vunpack.c.l.b16 %v79
    %v114 = vunpack.c.l.b16 %v80
    %v115 = vunpack.c.l.b16 %v81
    %v116 = vunpack.c.l.b16 %v82
    %v117 = vunpack.c.l.b16 %v83
    %v118 = vunpack.c.l.b16 %v84
    %v119 = vunpack.c.l.b16 %v85
    %v120 = vunpack.c.l.b16 %v86
    %v121 = vunpack.c.l.b16 %v87
    %v122 = vunpack.c.l.b16 %v88
    %v123 = vunpack.c.l.b16 %v89
    %v124 = vunpack.c.l.b16 %v90
    %v125 = vpack.c.b16 %v110, %v109
    %v126 = vpack.c.b16 %v112, %v111
    %v127 = vpack.c.b16 %v114, %v113
    %v128 = vpack.c.b16 %v116, %v115
    %v129 = vpack.c.b16 %v118, %v117
    %v130 = vpack.c.b16 %v120, %v119
    %v131 = vpack.c.b16 %v122, %v121
    %v132 = vpack.c.b16 %v124, %v123
    %141 = vmatprep.subr.bf16.mxu0 0
    %142 = vmatpush1.bf16.msra.mxu0 %v125
    %143 = vmatprep.subr.bf16.mxu0 0
    %144 = vmatpush1.bf16.msra.mxu0 %v126
    %145 = vmatprep.subr.bf16.mxu0 0
    %146 = vmatpush1.bf16.msra.mxu0 %v127
    %147 = vmatprep.subr.bf16.mxu0 0
    %148 = vmatpush1.bf16.msra.mxu0 %v128
    %149 = vmatprep.subr.bf16.mxu0 0
    %150 = vmatpush1.bf16.msra.mxu0 %v129
    %151 = vmatprep.subr.bf16.mxu0 0
    %152 = vmatpush1.bf16.msra.mxu0 %v130
    %153 = vmatprep.subr.bf16.mxu0 0
    %154 = vmatpush1.bf16.msra.mxu0 %v131
    %155 = vmatprep.subr.bf16.mxu0 0
    %156 = vmatpush1.bf16.msra.mxu0 %v132
    %157 = vmatprep.subr.bf16.mxu0 0
    %158 = vmatpush1.bf16.msra.mxu0 0
    %159 = vmatprep.subr.bf16.mxu0 0
    %160 = vmatpush1.bf16.msra.mxu0 0
    %161 = vmatprep.subr.bf16.mxu0 0
    %162 = vmatpush1.bf16.msra.mxu0 0
    %163 = vmatprep.subr.bf16.mxu0 0
    %164 = vmatpush1.bf16.msra.mxu0 0
    %165 = vmatprep.subr.bf16.mxu0 0
    %166 = vmatpush1.bf16.msra.mxu0 0
    %167 = vmatprep.subr.bf16.mxu0 0
    %168 = vmatpush1.bf16.msra.mxu0 0
    %169 = vmatprep.subr.bf16.mxu0 0
    %170 = vmatpush1.bf16.msra.mxu0 0
    %171 = vmatprep.subr.bf16.mxu0 0
    %172 = vmatpush1.bf16.msra.mxu0 0
    %173 = vmatprep.mubr.bf16.mxu0 0
    %174 = vmatmul.mubr.bf16.gmra.mrb[0].mxu0 %v74
    %v175 = vpop.f32.mrb[0].mxu0
    %v176 = vadd.f32 %v91, %v175
    %v177 = vpop.f32.mrb[0].mxu0
    %v178 = vpop.f32.mrb[0].mxu0
    %v179 = vadd.f32 %v92, %v178
    %v180 = vpop.f32.mrb[0].mxu0
    %181 = vdwg.mxu0
    %v182 = vld [vmem:[%s1] sm:$0xff]
    %v183 = vld [vmem:[%s1 + $0x8] sm:$0xff]
    %v184 = vld [vmem:[%s4] sm:$0x1]
    %v185 = vld [vmem:[%s5] sm:$0x1]
    %vm186 = vcmask 523264
    %v187 = vsel %vm186, %v176, 0.0
    %188 = vadd.xlane.f32.xlu0 %v187
    %v189 = vpop.xlane.xlu0 %188
    %v190 = vsel %vm186, %v179, 0.0
    %191 = vadd.xlane.f32.xlu0 %v190
    %v192 = vpop.xlane.xlu0 %191
    %v193 = vrcp.pop 64.0
    %v194 = vmul.f32 %v189, %v193
    %v195 = vmul.f32 %v192, %v193
    %v196 = vsub.f32 %v176, %v194
    %v197 = vsub.f32 %v179, %v195
    %v198 = vmul.f32 %v196, %v196
    %v199 = vmul.f32 %v197, %v197
    %v200 = vsel %vm186, %v198, 0.0
    %201 = vadd.xlane.f32.xlu0 %v200
    %v202 = vpop.xlane.xlu0 %201
    %v203 = vsel %vm186, %v199, 0.0
    %204 = vadd.xlane.f32.xlu0 %v203
    %v205 = vpop.xlane.xlu0 %204
    %v206 = vmul.f32 %v202, %v193
    %v207 = vmul.f32 %v205, %v193
    %v208 = vadd.f32 %v206, 1e-05
    %v209 = vadd.f32 %v207, 1e-05
    %v210 = vrsqrt.pop %v208
    %v211 = vrsqrt.pop %v209
    %v212 = vmul.f32 %v196, %v210
    %v213 = vmul.f32 %v197, %v211
    %v215 = vlaneseq
    %v216 = vshrl.u32 %v215, 7
    %v217 = vsub.s32 0, %v216
    %v218 = vrot.slane %v184, %v217
    %v220 = vmul.f32 %v212, %v218
    %v221 = vmul.f32 %v213, %v218
    %v223 = vlaneseq
    %v224 = vshrl.u32 %v223, 7
    %v225 = vsub.s32 0, %v224
    %v226 = vrot.slane %v185, %v225
    %v228 = vadd.f32 %v220, %v226
    %v229 = vadd.f32 %v221, %v226
    %v230 = vpack.c.bf16 %v229, %v228
    %v231 = vld [vmem:[%s6] sm:$0xff]
    %v232 = vld [vmem:[%s6 + $0x8] sm:$0xff]
    %v233 = vld [vmem:[%s6 + $0x10] sm:$0xff]
    %v234 = vld [vmem:[%s6 + $0x18] sm:$0xff]
    %v235 = vld [vmem:[%s6 + $0x20] sm:$0xff]
    %v236 = vld [vmem:[%s6 + $0x28] sm:$0xff]
    %v237 = vld [vmem:[%s6 + $0x30] sm:$0xff]
    %v238 = vld [vmem:[%s6 + $0x38] sm:$0xff]
    %v247 = vunpack.c.l.b16 %v231
    %v248 = vunpack.c.h.b16 %v231
    %v249 = vunpack.c.l.b16 %v232
    %v250 = vunpack.c.h.b16 %v232
    %v251 = vunpack.c.l.b16 %v233
    %v252 = vunpack.c.h.b16 %v233
    %v253 = vunpack.c.l.b16 %v234
    %v254 = vunpack.c.h.b16 %v234
    %v255 = vunpack.c.l.b16 %v235
    %v256 = vunpack.c.h.b16 %v235
    %v257 = vunpack.c.l.b16 %v236
    %v258 = vunpack.c.h.b16 %v236
    %v259 = vunpack.c.l.b16 %v237
    %v260 = vunpack.c.h.b16 %v237
    %v261 = vunpack.c.l.b16 %v238
    %v262 = vunpack.c.h.b16 %v238
    %v263 = vpack.c.b16 %v249, %v247
    %v264 = vpack.c.b16 %v250, %v248
    %v265 = vpack.c.b16 %v253, %v251
    %v266 = vpack.c.b16 %v254, %v252
    %v267 = vpack.c.b16 %v257, %v255
    %v268 = vpack.c.b16 %v258, %v256
    %v269 = vpack.c.b16 %v261, %v259
    %v270 = vpack.c.b16 %v262, %v260
    %v280 = vsel %vm186, %v230, 0
    %282 = vmatprep.subr.bf16.mxu0 %v264
    %283 = vmatpush1.bf16.msra.mxu0 %v263
    %284 = vmatprep.subr.bf16.mxu0 %v266
    %285 = vmatpush1.bf16.msra.mxu0 %v265
    %286 = vmatprep.subr.bf16.mxu0 %v268
    %287 = vmatpush1.bf16.msra.mxu0 %v267
    %288 = vmatprep.subr.bf16.mxu0 %v270
    %289 = vmatpush1.bf16.msra.mxu0 %v269
    %290 = vmatprep.subr.bf16.mxu0 0
    %291 = vmatpush1.bf16.msra.mxu0 0
    %292 = vmatprep.subr.bf16.mxu0 0
    %293 = vmatpush1.bf16.msra.mxu0 0
    %294 = vmatprep.subr.bf16.mxu0 0
    %295 = vmatpush1.bf16.msra.mxu0 0
    %296 = vmatprep.subr.bf16.mxu0 0
    %297 = vmatpush1.bf16.msra.mxu0 0
    %298 = vmatprep.subr.bf16.mxu0 0
    %299 = vmatpush1.bf16.msra.mxu0 0
    %300 = vmatprep.subr.bf16.mxu0 0
    %301 = vmatpush1.bf16.msra.mxu0 0
    %302 = vmatprep.subr.bf16.mxu0 0
    %303 = vmatpush1.bf16.msra.mxu0 0
    %304 = vmatprep.subr.bf16.mxu0 0
    %305 = vmatpush1.bf16.msra.mxu0 0
    %306 = vmatprep.subr.bf16.mxu0 0
    %307 = vmatpush1.bf16.msra.mxu0 0
    %308 = vmatprep.subr.bf16.mxu0 0
    %309 = vmatpush1.bf16.msra.mxu0 0
    %310 = vmatprep.subr.bf16.mxu0 0
    %311 = vmatpush1.bf16.msra.mxu0 0
    %312 = vmatprep.subr.bf16.mxu0 0
    %313 = vmatpush1.bf16.msra.mxu0 0
    %314 = vmatprep.mubr.bf16.mxu0 0
    %315 = vmatmul.mubr.bf16.gmra.mrb[0].mxu0 %v280
    %v316 = vpop.f32.mrb[0].mxu0
    %v317 = vadd.f32 0.0, %v316
    %v318 = vpop.f32.mrb[0].mxu0
    %v319 = vadd.f32 0.0, %v318
    %v320 = vpop.f32.mrb[0].mxu0
    %v321 = vadd.f32 0.0, %v320
    %v322 = vpop.f32.mrb[0].mxu0
    %v323 = vadd.f32 0.0, %v322
    %324 = vdwg.mxu0
    %v325 = vpack.c.bf16 %v321, %v317
    %v326 = vpack.c.bf16 %v323, %v319
    %328 = vrot.lane.b32.xlu0 %v325, 64
    %v329 = vpop.permute.xlu0 %328
    %vm330 = vcmask 130048
    %v332 = vsel %vm330, %v325, 0
    %v335 = vsel %vm330, %v329, 0
    %337 = vmatprep.subr.bf16.mxu0 0
    %338 = vmatpush1.bf16.xpose.msra.mxu0 %v335
    %339 = vmatprep.subr.bf16.mxu0 0
    %340 = vmatpush1.bf16.xpose.msra.mxu0 0
    %341 = vmatprep.subr.bf16.mxu0 0
    %342 = vmatpush1.bf16.xpose.msra.mxu0 0
    %343 = vmatprep.subr.bf16.mxu0 0
    %344 = vmatpush1.bf16.xpose.msra.mxu0 0
    %345 = vmatprep.subr.bf16.mxu0 0
    %346 = vmatpush1.bf16.xpose.msra.mxu0 0
    %347 = vmatprep.subr.bf16.mxu0 0
    %348 = vmatpush1.bf16.xpose.msra.mxu0 0
    %349 = vmatprep.subr.bf16.mxu0 0
    %350 = vmatpush1.bf16.xpose.msra.mxu0 0
    %351 = vmatprep.subr.bf16.mxu0 0
    %352 = vmatpush1.bf16.xpose.msra.mxu0 0
    %353 = vmatprep.subr.bf16.mxu0 0
    %354 = vmatpush1.bf16.xpose.msra.mxu0 0
    %355 = vmatprep.subr.bf16.mxu0 0
    %356 = vmatpush1.bf16.xpose.msra.mxu0 0
    %357 = vmatprep.subr.bf16.mxu0 0
    %358 = vmatpush1.bf16.xpose.msra.mxu0 0
    %359 = vmatprep.subr.bf16.mxu0 0
    %360 = vmatpush1.bf16.xpose.msra.mxu0 0
    %361 = vmatprep.subr.bf16.mxu0 0
    %362 = vmatpush1.bf16.xpose.msra.mxu0 0
    %363 = vmatprep.subr.bf16.mxu0 0
    %364 = vmatpush1.bf16.xpose.msra.mxu0 0
    %365 = vmatprep.subr.bf16.mxu0 0
    %366 = vmatpush1.bf16.xpose.msra.mxu0 0
    %367 = vmatprep.subr.bf16.mxu0 0
    %368 = vmatpush1.bf16.xpose.msra.mxu0 0
    %369 = vmatprep.mubr.bf16.mxu0 0
    %370 = vmatmul.mubr.bf16.gmra.mrb[0].mxu0 %v332
    %v371 = vpop.f32.mrb[0].mxu0
    %v372 = vadd.f32 %v182, %v371
    %v373 = vpop.f32.mrb[0].mxu0
    %v374 = vpop.f32.mrb[0].mxu0
    %v375 = vadd.f32 %v183, %v374
    %v376 = vpop.f32.mrb[0].mxu0
    %377 = vdwg.mxu0
    %v378 = vsel %vm330, %v372, -inf
    %379 = vmax.xlane.f32.xlu0 %v378
    %v380 = vpop.xlane.xlu0 %379
    %v381 = vsel %vm330, %v375, -inf
    %382 = vmax.xlane.f32.xlu0 %v381
    %v383 = vpop.xlane.xlu0 %382
    %v384 = vsub.f32 %v372, %v380
    %v385 = vsub.f32 %v375, %v383
    %v386 = vmul.f32 %v384, 1.442695
    %v387 = vpow.pop %v386
    %v388 = vmul.f32 %v385, 1.442695
    %v389 = vpow.pop %v388
    %v390 = vsel %vm330, %v387, 0.0
    %391 = vadd.xlane.f32.xlu0 %v390
    %v392 = vpop.xlane.xlu0 %391
    %v393 = vsel %vm330, %v389, 0.0
    %394 = vadd.xlane.f32.xlu0 %v393
    %v395 = vpop.xlane.xlu0 %394
    %v396 = vrcp.pop %v392
    %v397 = vrcp.pop %v395
    %v398 = vmul.f32 %v387, %v396
    %v399 = vmul.f32 %v389, %v397
    %v400 = vpack.c.bf16 %v399, %v398
    %v402 = vsel %vm330, %v400, 0
    %404 = vmatprep.subr.bf16.mxu0 0
    %405 = vmatpush1.bf16.msra.mxu0 %v326
    %406 = vmatprep.subr.bf16.mxu0 0
    %407 = vmatpush1.bf16.msra.mxu0 0
    %408 = vmatprep.subr.bf16.mxu0 0
    %409 = vmatpush1.bf16.msra.mxu0 0
    %410 = vmatprep.subr.bf16.mxu0 0
    %411 = vmatpush1.bf16.msra.mxu0 0
    %412 = vmatprep.subr.bf16.mxu0 0
    %413 = vmatpush1.bf16.msra.mxu0 0
    %414 = vmatprep.subr.bf16.mxu0 0
    %415 = vmatpush1.bf16.msra.mxu0 0
    %416 = vmatprep.subr.bf16.mxu0 0
    %417 = vmatpush1.bf16.msra.mxu0 0
    %418 = vmatprep.subr.bf16.mxu0 0
    %419 = vmatpush1.bf16.msra.mxu0 0
    %420 = vmatprep.subr.bf16.mxu0 0
    %421 = vmatpush1.bf16.msra.mxu0 0
    %422 = vmatprep.subr.bf16.mxu0 0
    %423 = vmatpush1.bf16.msra.mxu0 0
    %424 = vmatprep.subr.bf16.mxu0 0
    %425 = vmatpush1.bf16.msra.mxu0 0
    %426 = vmatprep.subr.bf16.mxu0 0
    %427 = vmatpush1.bf16.msra.mxu0 0
    %428 = vmatprep.subr.bf16.mxu0 0
    %429 = vmatpush1.bf16.msra.mxu0 0
    %430 = vmatprep.subr.bf16.mxu0 0
    %431 = vmatpush1.bf16.msra.mxu0 0
    %432 = vmatprep.subr.bf16.mxu0 0
    %433 = vmatpush1.bf16.msra.mxu0 0
    %434 = vmatprep.subr.bf16.mxu0 0
    %435 = vmatpush1.bf16.msra.mxu0 0
    %436 = vmatprep.mubr.bf16.mxu0 0
    %437 = vmatmul.mubr.bf16.gmra.mrb[0].mxu0 %v402
    %v438 = vpop.f32.mrb[0].mxu0
    %v439 = vadd.f32 0.0, %v438
    %v440 = vpop.f32.mrb[0].mxu0
    %v441 = vpop.f32.mrb[0].mxu0
    %v442 = vadd.f32 0.0, %v441
    %v443 = vpop.f32.mrb[0].mxu0
    %444 = vdwg.mxu0
    %445 = vrot.lane.b32.xlu0 %v325, 112
    %v446 = vpop.permute.xlu0 %445
    %447 = vrot.lane.b32.xlu0 %v325, 48
    %v448 = vpop.permute.xlu0 %447
    %v450 = vsel %vm330, %v446, 0
    %v453 = vsel %vm330, %v448, 0
    %455 = vmatprep.subr.bf16.mxu0 0
    %456 = vmatpush1.bf16.xpose.msra.mxu0 %v453
    %457 = vmatprep.subr.bf16.mxu0 0
    %458 = vmatpush1.bf16.xpose.msra.mxu0 0
    %459 = vmatprep.subr.bf16.mxu0 0
    %460 = vmatpush1.bf16.xpose.msra.mxu0 0
    %461 = vmatprep.subr.bf16.mxu0 0
    %462 = vmatpush1.bf16.xpose.msra.mxu0 0
    %463 = vmatprep.subr.bf16.mxu0 0
    %464 = vmatpush1.bf16.xpose.msra.mxu0 0
    %465 = vmatprep.subr.bf16.mxu0 0
    %466 = vmatpush1.bf16.xpose.msra.mxu0 0
    %467 = vmatprep.subr.bf16.mxu0 0
    %468 = vmatpush1.bf16.xpose.msra.mxu0 0
    %469 = vmatprep.subr.bf16.mxu0 0
    %470 = vmatpush1.bf16.xpose.msra.mxu0 0
    %471 = vmatprep.subr.bf16.mxu0 0
    %472 = vmatpush1.bf16.xpose.msra.mxu0 0
    %473 = vmatprep.subr.bf16.mxu0 0
    %474 = vmatpush1.bf16.xpose.msra.mxu0 0
    %475 = vmatprep.subr.bf16.mxu0 0
    %476 = vmatpush1.bf16.xpose.msra.mxu0 0
    %477 = vmatprep.subr.bf16.mxu0 0
    %478 = vmatpush1.bf16.xpose.msra.mxu0 0
    %479 = vmatprep.subr.bf16.mxu0 0
    %480 = vmatpush1.bf16.xpose.msra.mxu0 0
    %481 = vmatprep.subr.bf16.mxu0 0
    %482 = vmatpush1.bf16.xpose.msra.mxu0 0
    %483 = vmatprep.subr.bf16.mxu0 0
    %484 = vmatpush1.bf16.xpose.msra.mxu0 0
    %485 = vmatprep.subr.bf16.mxu0 0
    %486 = vmatpush1.bf16.xpose.msra.mxu0 0
    %487 = vmatprep.mubr.bf16.mxu0 0
    %488 = vmatmul.mubr.bf16.gmra.mrb[0].mxu0 %v450
    %v489 = vpop.f32.mrb[0].mxu0
    %v490 = vadd.f32 %v182, %v489
    %v491 = vpop.f32.mrb[0].mxu0
    %v492 = vpop.f32.mrb[0].mxu0
    %v493 = vadd.f32 %v183, %v492
    %v494 = vpop.f32.mrb[0].mxu0
    %495 = vdwg.mxu0
    %v496 = vsel %vm330, %v490, -inf
    %497 = vmax.xlane.f32.xlu0 %v496
    %v498 = vpop.xlane.xlu0 %497
    %v499 = vsel %vm330, %v493, -inf
    %500 = vmax.xlane.f32.xlu0 %v499
    %v501 = vpop.xlane.xlu0 %500
    %v502 = vsub.f32 %v490, %v498
    %v503 = vsub.f32 %v493, %v501
    %v504 = vmul.f32 %v502, 1.442695
    %v505 = vpow.pop %v504
    %v506 = vmul.f32 %v503, 1.442695
    %v507 = vpow.pop %v506
    %v508 = vsel %vm330, %v505, 0.0
    %509 = vadd.xlane.f32.xlu0 %v508
    %v510 = vpop.xlane.xlu0 %509
    %v511 = vsel %vm330, %v507, 0.0
    %512 = vadd.xlane.f32.xlu0 %v511
    %v513 = vpop.xlane.xlu0 %512
    %v514 = vrcp.pop %v510
    %v515 = vrcp.pop %v513
    %v516 = vmul.f32 %v505, %v514
    %v517 = vmul.f32 %v507, %v515
    %v518 = vpack.c.bf16 %v517, %v516
    %520 = vrot.lane.b32.xlu0 %v326, 112
    %v521 = vpop.permute.xlu0 %520
    %v524 = vsel %vm330, %v518, 0
    %526 = vmatprep.subr.bf16.mxu0 0
    %527 = vmatpush1.bf16.msra.mxu0 %v521
    %528 = vmatprep.subr.bf16.mxu0 0
    %529 = vmatpush1.bf16.msra.mxu0 0
    %530 = vmatprep.subr.bf16.mxu0 0
    %531 = vmatpush1.bf16.msra.mxu0 0
    %532 = vmatprep.subr.bf16.mxu0 0
    %533 = vmatpush1.bf16.msra.mxu0 0
    %534 = vmatprep.subr.bf16.mxu0 0
    %535 = vmatpush1.bf16.msra.mxu0 0
    %536 = vmatprep.subr.bf16.mxu0 0
    %537 = vmatpush1.bf16.msra.mxu0 0
    %538 = vmatprep.subr.bf16.mxu0 0
    %539 = vmatpush1.bf16.msra.mxu0 0
    %540 = vmatprep.subr.bf16.mxu0 0
    %541 = vmatpush1.bf16.msra.mxu0 0
    %542 = vmatprep.subr.bf16.mxu0 0
    %543 = vmatpush1.bf16.msra.mxu0 0
    %544 = vmatprep.subr.bf16.mxu0 0
    %545 = vmatpush1.bf16.msra.mxu0 0
    %546 = vmatprep.subr.bf16.mxu0 0
    %547 = vmatpush1.bf16.msra.mxu0 0
    %548 = vmatprep.subr.bf16.mxu0 0
    %549 = vmatpush1.bf16.msra.mxu0 0
    %550 = vmatprep.subr.bf16.mxu0 0
    %551 = vmatpush1.bf16.msra.mxu0 0
    %552 = vmatprep.subr.bf16.mxu0 0
    %553 = vmatpush1.bf16.msra.mxu0 0
    %554 = vmatprep.subr.bf16.mxu0 0
    %555 = vmatpush1.bf16.msra.mxu0 0
    %556 = vmatprep.subr.bf16.mxu0 0
    %557 = vmatpush1.bf16.msra.mxu0 0
    %558 = vmatprep.mubr.bf16.mxu0 0
    %559 = vmatmul.mubr.bf16.gmra.mrb[0].mxu0 %v524
    %v560 = vpop.f32.mrb[0].mxu0
    %v561 = vadd.f32 0.0, %v560
    %v562 = vpop.f32.mrb[0].mxu0
    %v563 = vpop.f32.mrb[0].mxu0
    %v564 = vadd.f32 0.0, %v563
    %v565 = vpop.f32.mrb[0].mxu0
    %566 = vdwg.mxu0
    %567 = vrot.lane.b32.xlu0 %v325, 96
    %v568 = vpop.permute.xlu0 %567
    %569 = vrot.lane.b32.xlu0 %v325, 32
    %v570 = vpop.permute.xlu0 %569
    %v572 = vsel %vm330, %v568, 0
    %v575 = vsel %vm330, %v570, 0
    %577 = vmatprep.subr.bf16.mxu0 0
    %578 = vmatpush1.bf16.xpose.msra.mxu0 %v575
    %579 = vmatprep.subr.bf16.mxu0 0
    %580 = vmatpush1.bf16.xpose.msra.mxu0 0
    %581 = vmatprep.subr.bf16.mxu0 0
    %582 = vmatpush1.bf16.xpose.msra.mxu0 0
    %583 = vmatprep.subr.bf16.mxu0 0
    %584 = vmatpush1.bf16.xpose.msra.mxu0 0
    %585 = vmatprep.subr.bf16.mxu0 0
    %586 = vmatpush1.bf16.xpose.msra.mxu0 0
    %587 = vmatprep.subr.bf16.mxu0 0
    %588 = vmatpush1.bf16.xpose.msra.mxu0 0
    %589 = vmatprep.subr.bf16.mxu0 0
    %590 = vmatpush1.bf16.xpose.msra.mxu0 0
    %591 = vmatprep.subr.bf16.mxu0 0
    %592 = vmatpush1.bf16.xpose.msra.mxu0 0
    %593 = vmatprep.subr.bf16.mxu0 0
    %594 = vmatpush1.bf16.xpose.msra.mxu0 0
    %595 = vmatprep.subr.bf16.mxu0 0
    %596 = vmatpush1.bf16.xpose.msra.mxu0 0
    %597 = vmatprep.subr.bf16.mxu0 0
    %598 = vmatpush1.bf16.xpose.msra.mxu0 0
    %599 = vmatprep.subr.bf16.mxu0 0
    %600 = vmatpush1.bf16.xpose.msra.mxu0 0
    %601 = vmatprep.subr.bf16.mxu0 0
    %602 = vmatpush1.bf16.xpose.msra.mxu0 0
    %603 = vmatprep.subr.bf16.mxu0 0
    %604 = vmatpush1.bf16.xpose.msra.mxu0 0
    %605 = vmatprep.subr.bf16.mxu0 0
    %606 = vmatpush1.bf16.xpose.msra.mxu0 0
    %607 = vmatprep.subr.bf16.mxu0 0
    %608 = vmatpush1.bf16.xpose.msra.mxu0 0
    %609 = vmatprep.mubr.bf16.mxu0 0
    %610 = vmatmul.mubr.bf16.gmra.mrb[0].mxu0 %v572
    %v611 = vpop.f32.mrb[0].mxu0
    %v612 = vadd.f32 %v182, %v611
    %v613 = vpop.f32.mrb[0].mxu0
    %v614 = vpop.f32.mrb[0].mxu0
    %v615 = vadd.f32 %v183, %v614
    %v616 = vpop.f32.mrb[0].mxu0
    %617 = vdwg.mxu0
    %v618 = vsel %vm330, %v612, -inf
    %619 = vmax.xlane.f32.xlu0 %v618
    %v620 = vpop.xlane.xlu0 %619
    %v621 = vsel %vm330, %v615, -inf
    %622 = vmax.xlane.f32.xlu0 %v621
    %v623 = vpop.xlane.xlu0 %622
    %v624 = vsub.f32 %v612, %v620
    %v625 = vsub.f32 %v615, %v623
    %v626 = vmul.f32 %v624, 1.442695
    %v627 = vpow.pop %v626
    %v628 = vmul.f32 %v625, 1.442695
    %v629 = vpow.pop %v628
    %v630 = vsel %vm330, %v627, 0.0
    %631 = vadd.xlane.f32.xlu0 %v630
    %v632 = vpop.xlane.xlu0 %631
    %v633 = vsel %vm330, %v629, 0.0
    %634 = vadd.xlane.f32.xlu0 %v633
    %v635 = vpop.xlane.xlu0 %634
    %v636 = vrcp.pop %v632
    %v637 = vrcp.pop %v635
    %v638 = vmul.f32 %v627, %v636
    %v639 = vmul.f32 %v629, %v637
    %v640 = vpack.c.bf16 %v639, %v638
    %641 = vrot.lane.b32.xlu0 %v326, 96
    %v642 = vpop.permute.xlu0 %641
    %v645 = vsel %vm330, %v640, 0
    %647 = vmatprep.subr.bf16.mxu0 0
    %648 = vmatpush1.bf16.msra.mxu0 %v642
    %649 = vmatprep.subr.bf16.mxu0 0
    %650 = vmatpush1.bf16.msra.mxu0 0
    %651 = vmatprep.subr.bf16.mxu0 0
    %652 = vmatpush1.bf16.msra.mxu0 0
    %653 = vmatprep.subr.bf16.mxu0 0
    %654 = vmatpush1.bf16.msra.mxu0 0
    %655 = vmatprep.subr.bf16.mxu0 0
    %656 = vmatpush1.bf16.msra.mxu0 0
    %657 = vmatprep.subr.bf16.mxu0 0
    %658 = vmatpush1.bf16.msra.mxu0 0
    %659 = vmatprep.subr.bf16.mxu0 0
    %660 = vmatpush1.bf16.msra.mxu0 0
    %661 = vmatprep.subr.bf16.mxu0 0
    %662 = vmatpush1.bf16.msra.mxu0 0
    %663 = vmatprep.subr.bf16.mxu0 0
    %664 = vmatpush1.bf16.msra.mxu0 0
    %665 = vmatprep.subr.bf16.mxu0 0
    %666 = vmatpush1.bf16.msra.mxu0 0
    %667 = vmatprep.subr.bf16.mxu0 0
    %668 = vmatpush1.bf16.msra.mxu0 0
    %669 = vmatprep.subr.bf16.mxu0 0
    %670 = vmatpush1.bf16.msra.mxu0 0
    %671 = vmatprep.subr.bf16.mxu0 0
    %672 = vmatpush1.bf16.msra.mxu0 0
    %673 = vmatprep.subr.bf16.mxu0 0
    %674 = vmatpush1.bf16.msra.mxu0 0
    %675 = vmatprep.subr.bf16.mxu0 0
    %676 = vmatpush1.bf16.msra.mxu0 0
    %677 = vmatprep.subr.bf16.mxu0 0
    %678 = vmatpush1.bf16.msra.mxu0 0
    %679 = vmatprep.mubr.bf16.mxu0 0
    %680 = vmatmul.mubr.bf16.gmra.mrb[0].mxu0 %v645
    %v681 = vpop.f32.mrb[0].mxu0
    %v682 = vadd.f32 0.0, %v681
    %v683 = vpop.f32.mrb[0].mxu0
    %v684 = vpop.f32.mrb[0].mxu0
    %v685 = vadd.f32 0.0, %v684
    %v686 = vpop.f32.mrb[0].mxu0
    %687 = vdwg.mxu0
    %688 = vrot.lane.b32.xlu0 %v325, 80
    %v689 = vpop.permute.xlu0 %688
    %690 = vrot.lane.b32.xlu0 %v325, 16
    %v691 = vpop.permute.xlu0 %690
    %v693 = vsel %vm330, %v689, 0
    %v696 = vsel %vm330, %v691, 0
    %698 = vmatprep.subr.bf16.mxu0 0
    %699 = vmatpush1.bf16.xpose.msra.mxu0 %v696
    %700 = vmatprep.subr.bf16.mxu0 0
    %701 = vmatpush1.bf16.xpose.msra.mxu0 0
    %702 = vmatprep.subr.bf16.mxu0 0
    %703 = vmatpush1.bf16.xpose.msra.mxu0 0
    %704 = vmatprep.subr.bf16.mxu0 0
    %705 = vmatpush1.bf16.xpose.msra.mxu0 0
    %706 = vmatprep.subr.bf16.mxu0 0
    %707 = vmatpush1.bf16.xpose.msra.mxu0 0
    %708 = vmatprep.subr.bf16.mxu0 0
    %709 = vmatpush1.bf16.xpose.msra.mxu0 0
    %710 = vmatprep.subr.bf16.mxu0 0
    %711 = vmatpush1.bf16.xpose.msra.mxu0 0
    %712 = vmatprep.subr.bf16.mxu0 0
    %713 = vmatpush1.bf16.xpose.msra.mxu0 0
    %714 = vmatprep.subr.bf16.mxu0 0
    %715 = vmatpush1.bf16.xpose.msra.mxu0 0
    %716 = vmatprep.subr.bf16.mxu0 0
    %717 = vmatpush1.bf16.xpose.msra.mxu0 0
    %718 = vmatprep.subr.bf16.mxu0 0
    %719 = vmatpush1.bf16.xpose.msra.mxu0 0
    %720 = vmatprep.subr.bf16.mxu0 0
    %721 = vmatpush1.bf16.xpose.msra.mxu0 0
    %722 = vmatprep.subr.bf16.mxu0 0
    %723 = vmatpush1.bf16.xpose.msra.mxu0 0
    %724 = vmatprep.subr.bf16.mxu0 0
    %725 = vmatpush1.bf16.xpose.msra.mxu0 0
    %726 = vmatprep.subr.bf16.mxu0 0
    %727 = vmatpush1.bf16.xpose.msra.mxu0 0
    %728 = vmatprep.subr.bf16.mxu0 0
    %729 = vmatpush1.bf16.xpose.msra.mxu0 0
    %730 = vmatprep.mubr.bf16.mxu0 0
    %731 = vmatmul.mubr.bf16.gmra.mrb[0].mxu0 %v693
    %v732 = vpop.f32.mrb[0].mxu0
    %v733 = vadd.f32 %v182, %v732
    %v734 = vpop.f32.mrb[0].mxu0
    %v735 = vpop.f32.mrb[0].mxu0
    %v736 = vadd.f32 %v183, %v735
    %v737 = vpop.f32.mrb[0].mxu0
    %738 = vdwg.mxu0
    %v739 = vsel %vm330, %v733, -inf
    %740 = vmax.xlane.f32.xlu0 %v739
    %v741 = vpop.xlane.xlu0 %740
    %v742 = vsel %vm330, %v736, -inf
    %743 = vmax.xlane.f32.xlu0 %v742
    %v744 = vpop.xlane.xlu0 %743
    %v745 = vsub.f32 %v733, %v741
    %v746 = vsub.f32 %v736, %v744
    %v747 = vmul.f32 %v745, 1.442695
    %v748 = vpow.pop %v747
    %v749 = vmul.f32 %v746, 1.442695
    %v750 = vpow.pop %v749
    %v751 = vsel %vm330, %v748, 0.0
    %752 = vadd.xlane.f32.xlu0 %v751
    %v753 = vpop.xlane.xlu0 %752
    %v754 = vsel %vm330, %v750, 0.0
    %755 = vadd.xlane.f32.xlu0 %v754
    %v756 = vpop.xlane.xlu0 %755
    %v757 = vrcp.pop %v753
    %v758 = vrcp.pop %v756
    %v759 = vmul.f32 %v748, %v757
    %v760 = vmul.f32 %v750, %v758
    %v761 = vpack.c.bf16 %v760, %v759
    %762 = vrot.lane.b32.xlu0 %v326, 80
    %v763 = vpop.permute.xlu0 %762
    %v766 = vsel %vm330, %v761, 0
    %768 = vmatprep.subr.bf16.mxu0 0
    %769 = vmatpush1.bf16.msra.mxu0 %v763
    %770 = vmatprep.subr.bf16.mxu0 0
    %771 = vmatpush1.bf16.msra.mxu0 0
    %772 = vmatprep.subr.bf16.mxu0 0
    %773 = vmatpush1.bf16.msra.mxu0 0
    %774 = vmatprep.subr.bf16.mxu0 0
    %775 = vmatpush1.bf16.msra.mxu0 0
    %776 = vmatprep.subr.bf16.mxu0 0
    %777 = vmatpush1.bf16.msra.mxu0 0
    %778 = vmatprep.subr.bf16.mxu0 0
    %779 = vmatpush1.bf16.msra.mxu0 0
    %780 = vmatprep.subr.bf16.mxu0 0
    %781 = vmatpush1.bf16.msra.mxu0 0
    %782 = vmatprep.subr.bf16.mxu0 0
    %783 = vmatpush1.bf16.msra.mxu0 0
    %784 = vmatprep.subr.bf16.mxu0 0
    %785 = vmatpush1.bf16.msra.mxu0 0
    %786 = vmatprep.subr.bf16.mxu0 0
    %787 = vmatpush1.bf16.msra.mxu0 0
    %788 = vmatprep.subr.bf16.mxu0 0
    %789 = vmatpush1.bf16.msra.mxu0 0
    %790 = vmatprep.subr.bf16.mxu0 0
    %791 = vmatpush1.bf16.msra.mxu0 0
    %792 = vmatprep.subr.bf16.mxu0 0
    %793 = vmatpush1.bf16.msra.mxu0 0
    %794 = vmatprep.subr.bf16.mxu0 0
    %795 = vmatpush1.bf16.msra.mxu0 0
    %796 = vmatprep.subr.bf16.mxu0 0
    %797 = vmatpush1.bf16.msra.mxu0 0
    %798 = vmatprep.subr.bf16.mxu0 0
    %799 = vmatpush1.bf16.msra.mxu0 0
    %800 = vmatprep.mubr.bf16.mxu0 0
    %801 = vmatmul.mubr.bf16.gmra.mrb[0].mxu0 %v766
    %v802 = vpop.f32.mrb[0].mxu0
    %v803 = vadd.f32 0.0, %v802
    %v804 = vpop.f32.mrb[0].mxu0
    %v805 = vpop.f32.mrb[0].mxu0
    %v806 = vadd.f32 0.0, %v805
    %v807 = vpop.f32.mrb[0].mxu0
    %808 = vdwg.mxu0
    %811 = vrot.lane.b32.xlu0 %v561, 16
    %v812 = vpop.permute.xlu0 %811
    %813 = vrot.lane.b32.xlu0 %v564, 16
    %v814 = vpop.permute.xlu0 %813
    %819 = vrot.lane.b32.xlu0 %v682, 32
    %v820 = vpop.permute.xlu0 %819
    %821 = vrot.lane.b32.xlu0 %v685, 32
    %v822 = vpop.permute.xlu0 %821
    %827 = vrot.lane.b32.xlu0 %v803, 48
    %v828 = vpop.permute.xlu0 %827
    %829 = vrot.lane.b32.xlu0 %v806, 48
    %v830 = vpop.permute.xlu0 %829
    %v833 = vsel %vm330, %v439, %v812
    %v834 = vsel %vm330, %v442, %v814
    %vm835 = vcmask 261120
    %v836 = vsel %vm835, %v833, %v820
    %v837 = vsel %vm835, %v834, %v822
    %vm838 = vcmask 392192
    %v839 = vsel %vm838, %v836, %v828
    %v840 = vsel %vm838, %v837, %v830
    %v841 = vpack.c.bf16 %v840, %v839
    %v842 = vld [vmem:[%s7] sm:$0xf]
    %v843 = vld [vmem:[%s7 + $0x4] sm:$0xf]
    %v844 = vld [vmem:[%s7 + $0x8] sm:$0xf]
    %v845 = vld [vmem:[%s7 + $0xc] sm:$0xf]
    %v846 = vld [vmem:[%s7 + $0x10] sm:$0xf]
    %v847 = vld [vmem:[%s7 + $0x14] sm:$0xf]
    %v848 = vld [vmem:[%s7 + $0x18] sm:$0xf]
    %v849 = vld [vmem:[%s7 + $0x1c] sm:$0xf]
    %v858 = vunpack.c.l.b16 %v842
    %v859 = vunpack.c.l.b16 %v843
    %v860 = vunpack.c.l.b16 %v844
    %v861 = vunpack.c.l.b16 %v845
    %v862 = vunpack.c.l.b16 %v846
    %v863 = vunpack.c.l.b16 %v847
    %v864 = vunpack.c.l.b16 %v848
    %v865 = vunpack.c.l.b16 %v849
    %v866 = vpack.c.b16 %v859, %v858
    %v867 = vpack.c.b16 %v861, %v860
    %v868 = vpack.c.b16 %v863, %v862
    %v869 = vpack.c.b16 %v865, %v864
    %v875 = vsel %vm186, %v841, 0
    %877 = vmatprep.subr.bf16.mxu0 0
    %878 = vmatpush1.bf16.msra.mxu0 %v866
    %879 = vmatprep.subr.bf16.mxu0 0
    %880 = vmatpush1.bf16.msra.mxu0 %v867
    %881 = vmatprep.subr.bf16.mxu0 0
    %882 = vmatpush1.bf16.msra.mxu0 %v868
    %883 = vmatprep.subr.bf16.mxu0 0
    %884 = vmatpush1.bf16.msra.mxu0 %v869
    %885 = vmatprep.subr.bf16.mxu0 0
    %886 = vmatpush1.bf16.msra.mxu0 0
    %887 = vmatprep.subr.bf16.mxu0 0
    %888 = vmatpush1.bf16.msra.mxu0 0
    %889 = vmatprep.subr.bf16.mxu0 0
    %890 = vmatpush1.bf16.msra.mxu0 0
    %891 = vmatprep.subr.bf16.mxu0 0
    %892 = vmatpush1.bf16.msra.mxu0 0
    %893 = vmatprep.subr.bf16.mxu0 0
    %894 = vmatpush1.bf16.msra.mxu0 0
    %895 = vmatprep.subr.bf16.mxu0 0
    %896 = vmatpush1.bf16.msra.mxu0 0
    %897 = vmatprep.subr.bf16.mxu0 0
    %898 = vmatpush1.bf16.msra.mxu0 0
    %899 = vmatprep.subr.bf16.mxu0 0
    %900 = vmatpush1.bf16.msra.mxu0 0
    %901 = vmatprep.subr.bf16.mxu0 0
    %902 = vmatpush1.bf16.msra.mxu0 0
    %903 = vmatprep.subr.bf16.mxu0 0
    %904 = vmatpush1.bf16.msra.mxu0 0
    %905 = vmatprep.subr.bf16.mxu0 0
    %906 = vmatpush1.bf16.msra.mxu0 0
    %907 = vmatprep.subr.bf16.mxu0 0
    %908 = vmatpush1.bf16.msra.mxu0 0
    %909 = vmatprep.mubr.bf16.mxu0 0
    %910 = vmatmul.mubr.bf16.gmra.mrb[0].mxu0 %v875
    %v911 = vpop.f32.mrb[0].mxu0
    %v912 = vadd.f32 0.0, %v911
    %v913 = vpop.f32.mrb[0].mxu0
    %v914 = vpop.f32.mrb[0].mxu0
    %v915 = vadd.f32 0.0, %v914
    %v916 = vpop.f32.mrb[0].mxu0
    %917 = vdwg.mxu0
    %v918 = vadd.f32 %v176, %v912
    %v919 = vadd.f32 %v179, %v915
    %v920 = vld [vmem:[%s8] sm:$0x1]
    %v922 = vlaneseq
    %v923 = vshrl.u32 %v922, 7
    %v924 = vsub.s32 0, %v923
    %v925 = vrot.slane %v920, %v924
    %v927 = vadd.f32 %v918, %v925
    %v928 = vadd.f32 %v919, %v925
    %v929 = vld [vmem:[%s9] sm:$0x1]
    %v930 = vld [vmem:[%s10] sm:$0x1]
    %v931 = vsel %vm186, %v927, 0.0
    %932 = vadd.xlane.f32.xlu0 %v931
    %v933 = vpop.xlane.xlu0 %932
    %v934 = vsel %vm186, %v928, 0.0
    %935 = vadd.xlane.f32.xlu0 %v934
    %v936 = vpop.xlane.xlu0 %935
    %v937 = vmul.f32 %v933, %v193
    %v938 = vmul.f32 %v936, %v193
    %v939 = vsub.f32 %v927, %v937
    %v940 = vsub.f32 %v928, %v938
    %v941 = vmul.f32 %v939, %v939
    %v942 = vmul.f32 %v940, %v940
    %v943 = vsel %vm186, %v941, 0.0
    %944 = vadd.xlane.f32.xlu0 %v943
    %v945 = vpop.xlane.xlu0 %944
    %v946 = vsel %vm186, %v942, 0.0
    %947 = vadd.xlane.f32.xlu0 %v946
    %v948 = vpop.xlane.xlu0 %947
    %v949 = vmul.f32 %v945, %v193
    %v950 = vmul.f32 %v948, %v193
    %v951 = vadd.f32 %v949, 1e-05
    %v952 = vadd.f32 %v950, 1e-05
    %v953 = vrsqrt.pop %v951
    %v954 = vrsqrt.pop %v952
    %v955 = vmul.f32 %v939, %v953
    %v956 = vmul.f32 %v940, %v954
    %v958 = vlaneseq
    %v959 = vshrl.u32 %v958, 7
    %v960 = vsub.s32 0, %v959
    %v961 = vrot.slane %v929, %v960
    %v963 = vmul.f32 %v955, %v961
    %v964 = vmul.f32 %v956, %v961
    %v966 = vlaneseq
    %v967 = vshrl.u32 %v966, 7
    %v968 = vsub.s32 0, %v967
    %v969 = vrot.slane %v930, %v968
    %v971 = vadd.f32 %v963, %v969
    %v972 = vadd.f32 %v964, %v969
    %v973 = vpack.c.bf16 %v972, %v971
    %v974 = vld [vmem:[%s11] sm:$0xff]
    %v975 = vld [vmem:[%s11 + $0x8] sm:$0xff]
    %v976 = vld [vmem:[%s11 + $0x10] sm:$0xff]
    %v977 = vld [vmem:[%s11 + $0x18] sm:$0xff]
    %v978 = vld [vmem:[%s11 + $0x20] sm:$0xff]
    %v979 = vld [vmem:[%s11 + $0x28] sm:$0xff]
    %v980 = vld [vmem:[%s11 + $0x30] sm:$0xff]
    %v981 = vld [vmem:[%s11 + $0x38] sm:$0xff]
    %v982 = vld [vmem:[%s12] sm:$0x3]
    %v984 = vlaneseq
    %v985 = vshrl.u32 %v984, 7
    %v986 = vsub.s32 0, %v985
    %v987 = vrot.slane %v982, %v986
    %v988 = vlaneseq
    %v989 = vshrl.u32 %v988, 7
    %v990 = vsub.s32 1, %v989
    %v991 = vrot.slane %v982, %v990
    %v1002 = vunpack.c.l.b16 %v974
    %v1003 = vunpack.c.h.b16 %v974
    %v1004 = vunpack.c.l.b16 %v975
    %v1005 = vunpack.c.h.b16 %v975
    %v1006 = vunpack.c.l.b16 %v976
    %v1007 = vunpack.c.h.b16 %v976
    %v1008 = vunpack.c.l.b16 %v977
    %v1009 = vunpack.c.h.b16 %v977
    %v1010 = vunpack.c.l.b16 %v978
    %v1011 = vunpack.c.h.b16 %v978
    %v1012 = vunpack.c.l.b16 %v979
    %v1013 = vunpack.c.h.b16 %v979
    %v1014 = vunpack.c.l.b16 %v980
    %v1015 = vunpack.c.h.b16 %v980
    %v1016 = vunpack.c.l.b16 %v981
    %v1017 = vunpack.c.h.b16 %v981
    %v1018 = vpack.c.b16 %v1004, %v1002
    %v1019 = vpack.c.b16 %v1005, %v1003
    %v1020 = vpack.c.b16 %v1008, %v1006
    %v1021 = vpack.c.b16 %v1009, %v1007
    %v1022 = vpack.c.b16 %v1012, %v1010
    %v1023 = vpack.c.b16 %v1013, %v1011
    %v1024 = vpack.c.b16 %v1016, %v1014
    %v1025 = vpack.c.b16 %v1017, %v1015
    %v1035 = vsel %vm186, %v973, 0
    %1037 = vmatprep.subr.bf16.mxu0 %v1019
    %1038 = vmatpush1.bf16.msra.mxu0 %v1018
    %1039 = vmatprep.subr.bf16.mxu0 %v1021
    %1040 = vmatpush1.bf16.msra.mxu0 %v1020
    %1041 = vmatprep.subr.bf16.mxu0 %v1023
    %1042 = vmatpush1.bf16.msra.mxu0 %v1022
    %1043 = vmatprep.subr.bf16.mxu0 %v1025
    %1044 = vmatpush1.bf16.msra.mxu0 %v1024
    %1045 = vmatprep.subr.bf16.mxu0 0
    %1046 = vmatpush1.bf16.msra.mxu0 0
    %1047 = vmatprep.subr.bf16.mxu0 0
    %1048 = vmatpush1.bf16.msra.mxu0 0
    %1049 = vmatprep.subr.bf16.mxu0 0
    %1050 = vmatpush1.bf16.msra.mxu0 0
    %1051 = vmatprep.subr.bf16.mxu0 0
    %1052 = vmatpush1.bf16.msra.mxu0 0
    %1053 = vmatprep.subr.bf16.mxu0 0
    %1054 = vmatpush1.bf16.msra.mxu0 0
    %1055 = vmatprep.subr.bf16.mxu0 0
    %1056 = vmatpush1.bf16.msra.mxu0 0
    %1057 = vmatprep.subr.bf16.mxu0 0
    %1058 = vmatpush1.bf16.msra.mxu0 0
    %1059 = vmatprep.subr.bf16.mxu0 0
    %1060 = vmatpush1.bf16.msra.mxu0 0
    %1061 = vmatprep.subr.bf16.mxu0 0
    %1062 = vmatpush1.bf16.msra.mxu0 0
    %1063 = vmatprep.subr.bf16.mxu0 0
    %1064 = vmatpush1.bf16.msra.mxu0 0
    %1065 = vmatprep.subr.bf16.mxu0 0
    %1066 = vmatpush1.bf16.msra.mxu0 0
    %1067 = vmatprep.subr.bf16.mxu0 0
    %1068 = vmatpush1.bf16.msra.mxu0 0
    %1069 = vmatprep.mubr.bf16.mxu0 0
    %1070 = vmatmul.mubr.bf16.gmra.mrb[0].mxu0 %v1035
    %v1071 = vpop.f32.mrb[0].mxu0
    %v1072 = vadd.f32 %v987, %v1071
    %v1073 = vpop.f32.mrb[0].mxu0
    %v1074 = vadd.f32 %v991, %v1073
    %v1075 = vpop.f32.mrb[0].mxu0
    %v1076 = vadd.f32 %v987, %v1075
    %v1077 = vpop.f32.mrb[0].mxu0
    %v1078 = vadd.f32 %v991, %v1077
    %1079 = vdwg.mxu0
    %v1080 = vmax.f32 %v1072, 0.0
    %v1081 = vmax.f32 %v1074, 0.0
    %v1082 = vmax.f32 %v1076, 0.0
    %v1083 = vmax.f32 %v1078, 0.0
    %v1084 = vpack.c.bf16 %v1082, %v1080
    %v1085 = vpack.c.bf16 %v1083, %v1081
    %v1086 = vld [vmem:[%s13] sm:$0xf]
    %v1087 = vld [vmem:[%s13 + $0x4] sm:$0xf]
    %v1088 = vld [vmem:[%s13 + $0x8] sm:$0xf]
    %v1089 = vld [vmem:[%s13 + $0xc] sm:$0xf]
    %v1090 = vld [vmem:[%s13 + $0x10] sm:$0xf]
    %v1091 = vld [vmem:[%s13 + $0x14] sm:$0xf]
    %v1092 = vld [vmem:[%s13 + $0x18] sm:$0xf]
    %v1093 = vld [vmem:[%s13 + $0x1c] sm:$0xf]
    %v1094 = vld [vmem:[%s13 + $0x20] sm:$0xf]
    %v1095 = vld [vmem:[%s13 + $0x24] sm:$0xf]
    %v1096 = vld [vmem:[%s13 + $0x28] sm:$0xf]
    %v1097 = vld [vmem:[%s13 + $0x2c] sm:$0xf]
    %v1098 = vld [vmem:[%s13 + $0x30] sm:$0xf]
    %v1099 = vld [vmem:[%s13 + $0x34] sm:$0xf]
    %v1100 = vld [vmem:[%s13 + $0x38] sm:$0xf]
    %v1101 = vld [vmem:[%s13 + $0x3c] sm:$0xf]
    %v1102 = vld [vmem:[%s13 + $0x40] sm:$0xf]
    %v1103 = vld [vmem:[%s13 + $0x44] sm:$0xf]
    %v1104 = vld [vmem:[%s13 + $0x48] sm:$0xf]
    %v1105 = vld [vmem:[%s13 + $0x4c] sm:$0xf]
    %v1106 = vld [vmem:[%s13 + $0x50] sm:$0xf]
    %v1107 = vld [vmem:[%s13 + $0x54] sm:$0xf]
    %v1108 = vld [vmem:[%s13 + $0x58] sm:$0xf]
    %v1109 = vld [vmem:[%s13 + $0x5c] sm:$0xf]
    %v1110 = vld [vmem:[%s13 + $0x60] sm:$0xf]
    %v1111 = vld [vmem:[%s13 + $0x64] sm:$0xf]
    %v1112 = vld [vmem:[%s13 + $0x68] sm:$0xf]
    %v1113 = vld [vmem:[%s13 + $0x6c] sm:$0xf]
    %v1114 = vld [vmem:[%s13 + $0x70] sm:$0xf]
    %v1115 = vld [vmem:[%s13 + $0x74] sm:$0xf]
    %v1116 = vld [vmem:[%s13 + $0x78] sm:$0xf]
    %v1117 = vld [vmem:[%s13 + $0x7c] sm:$0xf]
    %v1150 = vunpack.c.l.b16 %v1086
    %v1151 = vunpack.c.l.b16 %v1087
    %v1152 = vunpack.c.l.b16 %v1088
    %v1153 = vunpack.c.l.b16 %v1089
    %v1154 = vunpack.c.l.b16 %v1090
    %v1155 = vunpack.c.l.b16 %v1091
    %v1156 = vunpack.c.l.b16 %v1092
    %v1157 = vunpack.c.l.b16 %v1093
    %v1158 = vunpack.c.l.b16 %v1094
    %v1159 = vunpack.c.l.b16 %v1095
    %v1160 = vunpack.c.l.b16 %v1096
    %v1161 = vunpack.c.l.b16 %v1097
    %v1162 = vunpack.c.l.b16 %v1098
    %v1163 = vunpack.c.l.b16 %v1099
    %v1164 = vunpack.c.l.b16 %v1100
    %v1165 = vunpack.c.l.b16 %v1101
    %v1166 = vunpack.c.l.b16 %v1102
    %v1167 = vunpack.c.l.b16 %v1103
    %v1168 = vunpack.c.l.b16 %v1104
    %v1169 = vunpack.c.l.b16 %v1105
    %v1170 = vunpack.c.l.b16 %v1106
    %v1171 = vunpack.c.l.b16 %v1107
    %v1172 = vunpack.c.l.b16 %v1108
    %v1173 = vunpack.c.l.b16 %v1109
    %v1174 = vunpack.c.l.b16 %v1110
    %v1175 = vunpack.c.l.b16 %v1111
    %v1176 = vunpack.c.l.b16 %v1112
    %v1177 = vunpack.c.l.b16 %v1113
    %v1178 = vunpack.c.l.b16 %v1114
    %v1179 = vunpack.c.l.b16 %v1115
    %v1180 = vunpack.c.l.b16 %v1116
    %v1181 = vunpack.c.l.b16 %v1117
    %v1182 = vpack.c.b16 %v1151, %v1150
    %v1183 = vpack.c.b16 %v1153, %v1152
    %v1184 = vpack.c.b16 %v1155, %v1154
    %v1185 = vpack.c.b16 %v1157, %v1156
    %v1186 = vpack.c.b16 %v1159, %v1158
    %v1187 = vpack.c.b16 %v1161, %v1160
    %v1188 = vpack.c.b16 %v1163, %v1162
    %v1189 = vpack.c.b16 %v1165, %v1164
    %v1190 = vpack.c.b16 %v1167, %v1166
    %v1191 = vpack.c.b16 %v1169, %v1168
    %v1192 = vpack.c.b16 %v1171, %v1170
    %v1193 = vpack.c.b16 %v1173, %v1172
    %v1194 = vpack.c.b16 %v1175, %v1174
    %v1195 = vpack.c.b16 %v1177, %v1176
    %v1196 = vpack.c.b16 %v1179, %v1178
    %v1197 = vpack.c.b16 %v1181, %v1180
    %1214 = vmatprep.subr.bf16.mxu0 0
    %1215 = vmatpush1.bf16.msra.mxu0 %v1182
    %1216 = vmatprep.subr.bf16.mxu0 0
    %1217 = vmatpush1.bf16.msra.mxu0 %v1183
    %1218 = vmatprep.subr.bf16.mxu0 0
    %1219 = vmatpush1.bf16.msra.mxu0 %v1184
    %1220 = vmatprep.subr.bf16.mxu0 0
    %1221 = vmatpush1.bf16.msra.mxu0 %v1185
    %1222 = vmatprep.subr.bf16.mxu0 0
    %1223 = vmatpush1.bf16.msra.mxu0 %v1186
    %1224 = vmatprep.subr.bf16.mxu0 0
    %1225 = vmatpush1.bf16.msra.mxu0 %v1187
    %1226 = vmatprep.subr.bf16.mxu0 0
    %1227 = vmatpush1.bf16.msra.mxu0 %v1188
    %1228 = vmatprep.subr.bf16.mxu0 0
    %1229 = vmatpush1.bf16.msra.mxu0 %v1189
    %1230 = vmatprep.subr.bf16.mxu0 0
    %1231 = vmatpush1.bf16.msra.mxu0 %v1190
    %1232 = vmatprep.subr.bf16.mxu0 0
    %1233 = vmatpush1.bf16.msra.mxu0 %v1191
    %1234 = vmatprep.subr.bf16.mxu0 0
    %1235 = vmatpush1.bf16.msra.mxu0 %v1192
    %1236 = vmatprep.subr.bf16.mxu0 0
    %1237 = vmatpush1.bf16.msra.mxu0 %v1193
    %1238 = vmatprep.subr.bf16.mxu0 0
    %1239 = vmatpush1.bf16.msra.mxu0 %v1194
    %1240 = vmatprep.subr.bf16.mxu0 0
    %1241 = vmatpush1.bf16.msra.mxu0 %v1195
    %1242 = vmatprep.subr.bf16.mxu0 0
    %1243 = vmatpush1.bf16.msra.mxu0 %v1196
    %1244 = vmatprep.subr.bf16.mxu0 0
    %1245 = vmatpush1.bf16.msra.mxu0 %v1197
    %1246 = vmatprep.mubr.bf16.mxu0 %v1085
    %1247 = vmatmul.mubr.bf16.gmra.mrb[0].mxu0 %v1084
    %v1248 = vpop.f32.mrb[0].mxu0
    %v1249 = vadd.f32 0.0, %v1248
    %v1250 = vpop.f32.mrb[0].mxu0
    %v1251 = vpop.f32.mrb[0].mxu0
    %v1252 = vadd.f32 0.0, %v1251
    %v1253 = vpop.f32.mrb[0].mxu0
    %1254 = vdwg.mxu0
    %v1255 = vadd.f32 %v927, %v1249
    %v1256 = vadd.f32 %v928, %v1252
    %v1257 = vld [vmem:[%s14] sm:$0x1]
    %v1259 = vlaneseq
    %v1260 = vshrl.u32 %v1259, 7
    %v1261 = vsub.s32 0, %v1260
    %v1262 = vrot.slane %v1257, %v1261
    %v1264 = vadd.f32 %v1255, %v1262
    %v1265 = vadd.f32 %v1256, %v1262
    %s1266 = scalar_lea.vmem %s4, 1
    %v1267 = vld [vmem:[%s1266] sm:$0x1]
    %s1268 = scalar_lea.vmem %s5, 1
    %v1269 = vld [vmem:[%s1268] sm:$0x1]
    %v1270 = vsel %vm186, %v1264, 0.0
    %1271 = vadd.xlane.f32.xlu0 %v1270
    %v1272 = vpop.xlane.xlu0 %1271
    %v1273 = vsel %vm186, %v1265, 0.0
    %1274 = vadd.xlane.f32.xlu0 %v1273
    %v1275 = vpop.xlane.xlu0 %1274
    %v1276 = vmul.f32 %v1272, %v193
    %v1277 = vmul.f32 %v1275, %v193
    %v1278 = vsub.f32 %v1264, %v1276
    %v1279 = vsub.f32 %v1265, %v1277
    %v1280 = vmul.f32 %v1278, %v1278
    %v1281 = vmul.f32 %v1279, %v1279
    %v1282 = vsel %vm186, %v1280, 0.0
    %1283 = vadd.xlane.f32.xlu0 %v1282
    %v1284 = vpop.xlane.xlu0 %1283
    %v1285 = vsel %vm186, %v1281, 0.0
    %1286 = vadd.xlane.f32.xlu0 %v1285
    %v1287 = vpop.xlane.xlu0 %1286
    %v1288 = vmul.f32 %v1284, %v193
    %v1289 = vmul.f32 %v1287, %v193
    %v1290 = vadd.f32 %v1288, 1e-05
    %v1291 = vadd.f32 %v1289, 1e-05
    %v1292 = vrsqrt.pop %v1290
    %v1293 = vrsqrt.pop %v1291
    %v1294 = vmul.f32 %v1278, %v1292
    %v1295 = vmul.f32 %v1279, %v1293
    %v1297 = vlaneseq
    %v1298 = vshrl.u32 %v1297, 7
    %v1299 = vsub.s32 0, %v1298
    %v1300 = vrot.slane %v1267, %v1299
    %v1302 = vmul.f32 %v1294, %v1300
    %v1303 = vmul.f32 %v1295, %v1300
    %v1305 = vlaneseq
    %v1306 = vshrl.u32 %v1305, 7
    %v1307 = vsub.s32 0, %v1306
    %v1308 = vrot.slane %v1269, %v1307
    %v1310 = vadd.f32 %v1302, %v1308
    %v1311 = vadd.f32 %v1303, %v1308
    %v1312 = vpack.c.bf16 %v1311, %v1310
    %s1313 = scalar_lea.vmem %s6, 64
    %v1314 = vld [vmem:[%s1313] sm:$0xff]
    %v1315 = vld [vmem:[%s1313 + $0x8] sm:$0xff]
    %v1316 = vld [vmem:[%s1313 + $0x10] sm:$0xff]
    %v1317 = vld [vmem:[%s1313 + $0x18] sm:$0xff]
    %v1318 = vld [vmem:[%s1313 + $0x20] sm:$0xff]
    %v1319 = vld [vmem:[%s1313 + $0x28] sm:$0xff]
    %v1320 = vld [vmem:[%s1313 + $0x30] sm:$0xff]
    %v1321 = vld [vmem:[%s1313 + $0x38] sm:$0xff]
    %v1330 = vunpack.c.l.b16 %v1314
    %v1331 = vunpack.c.h.b16 %v1314
    %v1332 = vunpack.c.l.b16 %v1315
    %v1333 = vunpack.c.h.b16 %v1315
    %v1334 = vunpack.c.l.b16 %v1316
    %v1335 = vunpack.c.h.b16 %v1316
    %v1336 = vunpack.c.l.b16 %v1317
    %v1337 = vunpack.c.h.b16 %v1317
    %v1338 = vunpack.c.l.b16 %v1318
    %v1339 = vunpack.c.h.b16 %v1318
    %v1340 = vunpack.c.l.b16 %v1319
    %v1341 = vunpack.c.h.b16 %v1319
    %v1342 = vunpack.c.l.b16 %v1320
    %v1343 = vunpack.c.h.b16 %v1320
    %v1344 = vunpack.c.l.b16 %v1321
    %v1345 = vunpack.c.h.b16 %v1321
    %v1346 = vpack.c.b16 %v1332, %v1330
    %v1347 = vpack.c.b16 %v1333, %v1331
    %v1348 = vpack.c.b16 %v1336, %v1334
    %v1349 = vpack.c.b16 %v1337, %v1335
    %v1350 = vpack.c.b16 %v1340, %v1338
    %v1351 = vpack.c.b16 %v1341, %v1339
    %v1352 = vpack.c.b16 %v1344, %v1342
    %v1353 = vpack.c.b16 %v1345, %v1343
    %v1363 = vsel %vm186, %v1312, 0
    %1365 = vmatprep.subr.bf16.mxu0 %v1347
    %1366 = vmatpush1.bf16.msra.mxu0 %v1346
    %1367 = vmatprep.subr.bf16.mxu0 %v1349
    %1368 = vmatpush1.bf16.msra.mxu0 %v1348
    %1369 = vmatprep.subr.bf16.mxu0 %v1351
    %1370 = vmatpush1.bf16.msra.mxu0 %v1350
    %1371 = vmatprep.subr.bf16.mxu0 %v1353
    %1372 = vmatpush1.bf16.msra.mxu0 %v1352
    %1373 = vmatprep.subr.bf16.mxu0 0
    %1374 = vmatpush1.bf16.msra.mxu0 0
    %1375 = vmatprep.subr.bf16.mxu0 0
    %1376 = vmatpush1.bf16.msra.mxu0 0
    %1377 = vmatprep.subr.bf16.mxu0 0
    %1378 = vmatpush1.bf16.msra.mxu0 0
    %1379 = vmatprep.subr.bf16.mxu0 0
    %1380 = vmatpush1.bf16.msra.mxu0 0
    %1381 = vmatprep.subr.bf16.mxu0 0
    %1382 = vmatpush1.bf16.msra.mxu0 0
    %1383 = vmatprep.subr.bf16.mxu0 0
    %1384 = vmatpush1.bf16.msra.mxu0 0
    %1385 = vmatprep.subr.bf16.mxu0 0
    %1386 = vmatpush1.bf16.msra.mxu0 0
    %1387 = vmatprep.subr.bf16.mxu0 0
    %1388 = vmatpush1.bf16.msra.mxu0 0
    %1389 = vmatprep.subr.bf16.mxu0 0
    %1390 = vmatpush1.bf16.msra.mxu0 0
    %1391 = vmatprep.subr.bf16.mxu0 0
    %1392 = vmatpush1.bf16.msra.mxu0 0
    %1393 = vmatprep.subr.bf16.mxu0 0
    %1394 = vmatpush1.bf16.msra.mxu0 0
    %1395 = vmatprep.subr.bf16.mxu0 0
    %1396 = vmatpush1.bf16.msra.mxu0 0
    %1397 = vmatprep.mubr.bf16.mxu0 0
    %1398 = vmatmul.mubr.bf16.gmra.mrb[0].mxu0 %v1363
    %v1399 = vpop.f32.mrb[0].mxu0
    %v1400 = vadd.f32 0.0, %v1399
    %v1401 = vpop.f32.mrb[0].mxu0
    %v1402 = vadd.f32 0.0, %v1401
    %v1403 = vpop.f32.mrb[0].mxu0
    %v1404 = vadd.f32 0.0, %v1403
    %v1405 = vpop.f32.mrb[0].mxu0
    %v1406 = vadd.f32 0.0, %v1405
    %1407 = vdwg.mxu0
    %v1408 = vpack.c.bf16 %v1404, %v1400
    %v1409 = vpack.c.bf16 %v1406, %v1402
    %1411 = vrot.lane.b32.xlu0 %v1408, 64
    %v1412 = vpop.permute.xlu0 %1411
    %v1414 = vsel %vm330, %v1408, 0
    %v1417 = vsel %vm330, %v1412, 0
    %1419 = vmatprep.subr.bf16.mxu0 0
    %1420 = vmatpush1.bf16.xpose.msra.mxu0 %v1417
    %1421 = vmatprep.subr.bf16.mxu0 0
    %1422 = vmatpush1.bf16.xpose.msra.mxu0 0
    %1423 = vmatprep.subr.bf16.mxu0 0
    %1424 = vmatpush1.bf16.xpose.msra.mxu0 0
    %1425 = vmatprep.subr.bf16.mxu0 0
    %1426 = vmatpush1.bf16.xpose.msra.mxu0 0
    %1427 = vmatprep.subr.bf16.mxu0 0
    %1428 = vmatpush1.bf16.xpose.msra.mxu0 0
    %1429 = vmatprep.subr.bf16.mxu0 0
    %1430 = vmatpush1.bf16.xpose.msra.mxu0 0
    %1431 = vmatprep.subr.bf16.mxu0 0
    %1432 = vmatpush1.bf16.xpose.msra.mxu0 0
    %1433 = vmatprep.subr.bf16.mxu0 0
    %1434 = vmatpush1.bf16.xpose.msra.mxu0 0
    %1435 = vmatprep.subr.bf16.mxu0 0
    %1436 = vmatpush1.bf16.xpose.msra.mxu0 0
    %1437 = vmatprep.subr.bf16.mxu0 0
    %1438 = vmatpush1.bf16.xpose.msra.mxu0 0
    %1439 = vmatprep.subr.bf16.mxu0 0
    %1440 = vmatpush1.bf16.xpose.msra.mxu0 0
    %1441 = vmatprep.subr.bf16.mxu0 0
    %1442 = vmatpush1.bf16.xpose.msra.mxu0 0
    %1443 = vmatprep.subr.bf16.mxu0 0
    %1444 = vmatpush1.bf16.xpose.msra.mxu0 0
    %1445 = vmatprep.subr.bf16.mxu0 0
    %1446 = vmatpush1.bf16.xpose.msra.mxu0 0
    %1447 = vmatprep.subr.bf16.mxu0 0
    %1448 = vmatpush1.bf16.xpose.msra.mxu0 0
    %1449 = vmatprep.subr.bf16.mxu0 0
    %1450 = vmatpush1.bf16.xpose.msra.mxu0 0
    %1451 = vmatprep.mubr.bf16.mxu0 0
    %1452 = vmatmul.mubr.bf16.gmra.mrb[0].mxu0 %v1414
    %v1453 = vpop.f32.mrb[0].mxu0
    %v1454 = vadd.f32 %v182, %v1453
    %v1455 = vpop.f32.mrb[0].mxu0
    %v1456 = vpop.f32.mrb[0].mxu0
    %v1457 = vadd.f32 %v183, %v1456
    %v1458 = vpop.f32.mrb[0].mxu0
    %1459 = vdwg.mxu0
    %v1460 = vsel %vm330, %v1454, -inf
    %1461 = vmax.xlane.f32.xlu0 %v1460
    %v1462 = vpop.xlane.xlu0 %1461
    %v1463 = vsel %vm330, %v1457, -inf
    %1464 = vmax.xlane.f32.xlu0 %v1463
    %v1465 = vpop.xlane.xlu0 %1464
    %v1466 = vsub.f32 %v1454, %v1462
    %v1467 = vsub.f32 %v1457, %v1465
    %v1468 = vmul.f32 %v1466, 1.442695
    %v1469 = vpow.pop %v1468
    %v1470 = vmul.f32 %v1467, 1.442695
    %v1471 = vpow.pop %v1470
    %v1472 = vsel %vm330, %v1469, 0.0
    %1473 = vadd.xlane.f32.xlu0 %v1472
    %v1474 = vpop.xlane.xlu0 %1473
    %v1475 = vsel %vm330, %v1471, 0.0
    %1476 = vadd.xlane.f32.xlu0 %v1475
    %v1477 = vpop.xlane.xlu0 %1476
    %v1478 = vrcp.pop %v1474
    %v1479 = vrcp.pop %v1477
    %v1480 = vmul.f32 %v1469, %v1478
    %v1481 = vmul.f32 %v1471, %v1479
    %v1482 = vpack.c.bf16 %v1481, %v1480
    %v1484 = vsel %vm330, %v1482, 0
    %1486 = vmatprep.subr.bf16.mxu0 0
    %1487 = vmatpush1.bf16.msra.mxu0 %v1409
    %1488 = vmatprep.subr.bf16.mxu0 0
    %1489 = vmatpush1.bf16.msra.mxu0 0
    %1490 = vmatprep.subr.bf16.mxu0 0
    %1491 = vmatpush1.bf16.msra.mxu0 0
    %1492 = vmatprep.subr.bf16.mxu0 0
    %1493 = vmatpush1.bf16.msra.mxu0 0
    %1494 = vmatprep.subr.bf16.mxu0 0
    %1495 = vmatpush1.bf16.msra.mxu0 0
    %1496 = vmatprep.subr.bf16.mxu0 0
    %1497 = vmatpush1.bf16.msra.mxu0 0
    %1498 = vmatprep.subr.bf16.mxu0 0
    %1499 = vmatpush1.bf16.msra.mxu0 0
    %1500 = vmatprep.subr.bf16.mxu0 0
    %1501 = vmatpush1.bf16.msra.mxu0 0
    %1502 = vmatprep.subr.bf16.mxu0 0
    %1503 = vmatpush1.bf16.msra.mxu0 0
    %1504 = vmatprep.subr.bf16.mxu0 0
    %1505 = vmatpush1.bf16.msra.mxu0 0
    %1506 = vmatprep.subr.bf16.mxu0 0
    %1507 = vmatpush1.bf16.msra.mxu0 0
    %1508 = vmatprep.subr.bf16.mxu0 0
    %1509 = vmatpush1.bf16.msra.mxu0 0
    %1510 = vmatprep.subr.bf16.mxu0 0
    %1511 = vmatpush1.bf16.msra.mxu0 0
    %1512 = vmatprep.subr.bf16.mxu0 0
    %1513 = vmatpush1.bf16.msra.mxu0 0
    %1514 = vmatprep.subr.bf16.mxu0 0
    %1515 = vmatpush1.bf16.msra.mxu0 0
    %1516 = vmatprep.subr.bf16.mxu0 0
    %1517 = vmatpush1.bf16.msra.mxu0 0
    %1518 = vmatprep.mubr.bf16.mxu0 0
    %1519 = vmatmul.mubr.bf16.gmra.mrb[0].mxu0 %v1484
    %v1520 = vpop.f32.mrb[0].mxu0
    %v1521 = vadd.f32 0.0, %v1520
    %v1522 = vpop.f32.mrb[0].mxu0
    %v1523 = vpop.f32.mrb[0].mxu0
    %v1524 = vadd.f32 0.0, %v1523
    %v1525 = vpop.f32.mrb[0].mxu0
    %1526 = vdwg.mxu0
    %1527 = vrot.lane.b32.xlu0 %v1408, 112
    %v1528 = vpop.permute.xlu0 %1527
    %1529 = vrot.lane.b32.xlu0 %v1408, 48
    %v1530 = vpop.permute.xlu0 %1529
    %v1532 = vsel %vm330, %v1528, 0
    %v1535 = vsel %vm330, %v1530, 0
    %1537 = vmatprep.subr.bf16.mxu0 0
    %1538 = vmatpush1.bf16.xpose.msra.mxu0 %v1535
    %1539 = vmatprep.subr.bf16.mxu0 0
    %1540 = vmatpush1.bf16.xpose.msra.mxu0 0
    %1541 = vmatprep.subr.bf16.mxu0 0
    %1542 = vmatpush1.bf16.xpose.msra.mxu0 0
    %1543 = vmatprep.subr.bf16.mxu0 0
    %1544 = vmatpush1.bf16.xpose.msra.mxu0 0
    %1545 = vmatprep.subr.bf16.mxu0 0
    %1546 = vmatpush1.bf16.xpose.msra.mxu0 0
    %1547 = vmatprep.subr.bf16.mxu0 0
    %1548 = vmatpush1.bf16.xpose.msra.mxu0 0
    %1549 = vmatprep.subr.bf16.mxu0 0
    %1550 = vmatpush1.bf16.xpose.msra.mxu0 0
    %1551 = vmatprep.subr.bf16.mxu0 0
    %1552 = vmatpush1.bf16.xpose.msra.mxu0 0
    %1553 = vmatprep.subr.bf16.mxu0 0
    %1554 = vmatpush1.bf16.xpose.msra.mxu0 0
    %1555 = vmatprep.subr.bf16.mxu0 0
    %1556 = vmatpush1.bf16.xpose.msra.mxu0 0
    %1557 = vmatprep.subr.bf16.mxu0 0
    %1558 = vmatpush1.bf16.xpose.msra.mxu0 0
    %1559 = vmatprep.subr.bf16.mxu0 0
    %1560 = vmatpush1.bf16.xpose.msra.mxu0 0
    %1561 = vmatprep.subr.bf16.mxu0 0
    %1562 = vmatpush1.bf16.xpose.msra.mxu0 0
    %1563 = vmatprep.subr.bf16.mxu0 0
    %1564 = vmatpush1.bf16.xpose.msra.mxu0 0
    %1565 = vmatprep.subr.bf16.mxu0 0
    %1566 = vmatpush1.bf16.xpose.msra.mxu0 0
    %1567 = vmatprep.subr.bf16.mxu0 0
    %1568 = vmatpush1.bf16.xpose.msra.mxu0 0
    %1569 = vmatprep.mubr.bf16.mxu0 0
    %1570 = vmatmul.mubr.bf16.gmra.mrb[0].mxu0 %v1532
    %v1571 = vpop.f32.mrb[0].mxu0
    %v1572 = vadd.f32 %v182, %v1571
    %v1573 = vpop.f32.mrb[0].mxu0
    %v1574 = vpop.f32.mrb[0].mxu0
    %v1575 = vadd.f32 %v183, %v1574
    %v1576 = vpop.f32.mrb[0].mxu0
    %1577 = vdwg.mxu0
    %v1578 = vsel %vm330, %v1572, -inf
    %1579 = vmax.xlane.f32.xlu0 %v1578
    %v1580 = vpop.xlane.xlu0 %1579
    %v1581 = vsel %vm330, %v1575, -inf
    %1582 = vmax.xlane.f32.xlu0 %v1581
    %v1583 = vpop.xlane.xlu0 %1582
    %v1584 = vsub.f32 %v1572, %v1580
    %v1585 = vsub.f32 %v1575, %v1583
    %v1586 = vmul.f32 %v1584, 1.442695
    %v1587 = vpow.pop %v1586
    %v1588 = vmul.f32 %v1585, 1.442695
    %v1589 = vpow.pop %v1588
    %v1590 = vsel %vm330, %v1587, 0.0
    %1591 = vadd.xlane.f32.xlu0 %v1590
    %v1592 = vpop.xlane.xlu0 %1591
    %v1593 = vsel %vm330, %v1589, 0.0
    %1594 = vadd.xlane.f32.xlu0 %v1593
    %v1595 = vpop.xlane.xlu0 %1594
    %v1596 = vrcp.pop %v1592
    %v1597 = vrcp.pop %v1595
    %v1598 = vmul.f32 %v1587, %v1596
    %v1599 = vmul.f32 %v1589, %v1597
    %v1600 = vpack.c.bf16 %v1599, %v1598
    %1602 = vrot.lane.b32.xlu0 %v1409, 112
    %v1603 = vpop.permute.xlu0 %1602
    %v1606 = vsel %vm330, %v1600, 0
    %1608 = vmatprep.subr.bf16.mxu0 0
    %1609 = vmatpush1.bf16.msra.mxu0 %v1603
    %1610 = vmatprep.subr.bf16.mxu0 0
    %1611 = vmatpush1.bf16.msra.mxu0 0
    %1612 = vmatprep.subr.bf16.mxu0 0
    %1613 = vmatpush1.bf16.msra.mxu0 0
    %1614 = vmatprep.subr.bf16.mxu0 0
    %1615 = vmatpush1.bf16.msra.mxu0 0
    %1616 = vmatprep.subr.bf16.mxu0 0
    %1617 = vmatpush1.bf16.msra.mxu0 0
    %1618 = vmatprep.subr.bf16.mxu0 0
    %1619 = vmatpush1.bf16.msra.mxu0 0
    %1620 = vmatprep.subr.bf16.mxu0 0
    %1621 = vmatpush1.bf16.msra.mxu0 0
    %1622 = vmatprep.subr.bf16.mxu0 0
    %1623 = vmatpush1.bf16.msra.mxu0 0
    %1624 = vmatprep.subr.bf16.mxu0 0
    %1625 = vmatpush1.bf16.msra.mxu0 0
    %1626 = vmatprep.subr.bf16.mxu0 0
    %1627 = vmatpush1.bf16.msra.mxu0 0
    %1628 = vmatprep.subr.bf16.mxu0 0
    %1629 = vmatpush1.bf16.msra.mxu0 0
    %1630 = vmatprep.subr.bf16.mxu0 0
    %1631 = vmatpush1.bf16.msra.mxu0 0
    %1632 = vmatprep.subr.bf16.mxu0 0
    %1633 = vmatpush1.bf16.msra.mxu0 0
    %1634 = vmatprep.subr.bf16.mxu0 0
    %1635 = vmatpush1.bf16.msra.mxu0 0
    %1636 = vmatprep.subr.bf16.mxu0 0
    %1637 = vmatpush1.bf16.msra.mxu0 0
    %1638 = vmatprep.subr.bf16.mxu0 0
    %1639 = vmatpush1.bf16.msra.mxu0 0
    %1640 = vmatprep.mubr.bf16.mxu0 0
    %1641 = vmatmul.mubr.bf16.gmra.mrb[0].mxu0 %v1606
    %v1642 = vpop.f32.mrb[0].mxu0
    %v1643 = vadd.f32 0.0, %v1642
    %v1644 = vpop.f32.mrb[0].mxu0
    %v1645 = vpop.f32.mrb[0].mxu0
    %v1646 = vadd.f32 0.0, %v1645
    %v1647 = vpop.f32.mrb[0].mxu0
    %1648 = vdwg.mxu0
    %1649 = vrot.lane.b32.xlu0 %v1408, 96
    %v1650 = vpop.permute.xlu0 %1649
    %1651 = vrot.lane.b32.xlu0 %v1408, 32
    %v1652 = vpop.permute.xlu0 %1651
    %v1654 = vsel %vm330, %v1650, 0
    %v1657 = vsel %vm330, %v1652, 0
    %1659 = vmatprep.subr.bf16.mxu0 0
    %1660 = vmatpush1.bf16.xpose.msra.mxu0 %v1657
    %1661 = vmatprep.subr.bf16.mxu0 0
    %1662 = vmatpush1.bf16.xpose.msra.mxu0 0
    %1663 = vmatprep.subr.bf16.mxu0 0
    %1664 = vmatpush1.bf16.xpose.msra.mxu0 0
    %1665 = vmatprep.subr.bf16.mxu0 0
    %1666 = vmatpush1.bf16.xpose.msra.mxu0 0
    %1667 = vmatprep.subr.bf16.mxu0 0
    %1668 = vmatpush1.bf16.xpose.msra.mxu0 0
    %1669 = vmatprep.subr.bf16.mxu0 0
    %1670 = vmatpush1.bf16.xpose.msra.mxu0 0
    %1671 = vmatprep.subr.bf16.mxu0 0
    %1672 = vmatpush1.bf16.xpose.msra.mxu0 0
    %1673 = vmatprep.subr.bf16.mxu0 0
    %1674 = vmatpush1.bf16.xpose.msra.mxu0 0
    %1675 = vmatprep.subr.bf16.mxu0 0
    %1676 = vmatpush1.bf16.xpose.msra.mxu0 0
    %1677 = vmatprep.subr.bf16.mxu0 0
    %1678 = vmatpush1.bf16.xpose.msra.mxu0 0
    %1679 = vmatprep.subr.bf16.mxu0 0
    %1680 = vmatpush1.bf16.xpose.msra.mxu0 0
    %1681 = vmatprep.subr.bf16.mxu0 0
    %1682 = vmatpush1.bf16.xpose.msra.mxu0 0
    %1683 = vmatprep.subr.bf16.mxu0 0
    %1684 = vmatpush1.bf16.xpose.msra.mxu0 0
    %1685 = vmatprep.subr.bf16.mxu0 0
    %1686 = vmatpush1.bf16.xpose.msra.mxu0 0
    %1687 = vmatprep.subr.bf16.mxu0 0
    %1688 = vmatpush1.bf16.xpose.msra.mxu0 0
    %1689 = vmatprep.subr.bf16.mxu0 0
    %1690 = vmatpush1.bf16.xpose.msra.mxu0 0
    %1691 = vmatprep.mubr.bf16.mxu0 0
    %1692 = vmatmul.mubr.bf16.gmra.mrb[0].mxu0 %v1654
    %v1693 = vpop.f32.mrb[0].mxu0
    %v1694 = vadd.f32 %v182, %v1693
    %v1695 = vpop.f32.mrb[0].mxu0
    %v1696 = vpop.f32.mrb[0].mxu0
    %v1697 = vadd.f32 %v183, %v1696
    %v1698 = vpop.f32.mrb[0].mxu0
    %1699 = vdwg.mxu0
    %v1700 = vsel %vm330, %v1694, -inf
    %1701 = vmax.xlane.f32.xlu0 %v1700
    %v1702 = vpop.xlane.xlu0 %1701
    %v1703 = vsel %vm330, %v1697, -inf
    %1704 = vmax.xlane.f32.xlu0 %v1703
    %v1705 = vpop.xlane.xlu0 %1704
    %v1706 = vsub.f32 %v1694, %v1702
    %v1707 = vsub.f32 %v1697, %v1705
    %v1708 = vmul.f32 %v1706, 1.442695
    %v1709 = vpow.pop %v1708
    %v1710 = vmul.f32 %v1707, 1.442695
    %v1711 = vpow.pop %v1710
    %v1712 = vsel %vm330, %v1709, 0.0
    %1713 = vadd.xlane.f32.xlu0 %v1712
    %v1714 = vpop.xlane.xlu0 %1713
    %v1715 = vsel %vm330, %v1711, 0.0
    %1716 = vadd.xlane.f32.xlu0 %v1715
    %v1717 = vpop.xlane.xlu0 %1716
    %v1718 = vrcp.pop %v1714
    %v1719 = vrcp.pop %v1717
    %v1720 = vmul.f32 %v1709, %v1718
    %v1721 = vmul.f32 %v1711, %v1719
    %v1722 = vpack.c.bf16 %v1721, %v1720
    %1723 = vrot.lane.b32.xlu0 %v1409, 96
    %v1724 = vpop.permute.xlu0 %1723
    %v1727 = vsel %vm330, %v1722, 0
    %1729 = vmatprep.subr.bf16.mxu0 0
    %1730 = vmatpush1.bf16.msra.mxu0 %v1724
    %1731 = vmatprep.subr.bf16.mxu0 0
    %1732 = vmatpush1.bf16.msra.mxu0 0
    %1733 = vmatprep.subr.bf16.mxu0 0
    %1734 = vmatpush1.bf16.msra.mxu0 0
    %1735 = vmatprep.subr.bf16.mxu0 0
    %1736 = vmatpush1.bf16.msra.mxu0 0
    %1737 = vmatprep.subr.bf16.mxu0 0
    %1738 = vmatpush1.bf16.msra.mxu0 0
    %1739 = vmatprep.subr.bf16.mxu0 0
    %1740 = vmatpush1.bf16.msra.mxu0 0
    %1741 = vmatprep.subr.bf16.mxu0 0
    %1742 = vmatpush1.bf16.msra.mxu0 0
    %1743 = vmatprep.subr.bf16.mxu0 0
    %1744 = vmatpush1.bf16.msra.mxu0 0
    %1745 = vmatprep.subr.bf16.mxu0 0
    %1746 = vmatpush1.bf16.msra.mxu0 0
    %1747 = vmatprep.subr.bf16.mxu0 0
    %1748 = vmatpush1.bf16.msra.mxu0 0
    %1749 = vmatprep.subr.bf16.mxu0 0
    %1750 = vmatpush1.bf16.msra.mxu0 0
    %1751 = vmatprep.subr.bf16.mxu0 0
    %1752 = vmatpush1.bf16.msra.mxu0 0
    %1753 = vmatprep.subr.bf16.mxu0 0
    %1754 = vmatpush1.bf16.msra.mxu0 0
    %1755 = vmatprep.subr.bf16.mxu0 0
    %1756 = vmatpush1.bf16.msra.mxu0 0
    %1757 = vmatprep.subr.bf16.mxu0 0
    %1758 = vmatpush1.bf16.msra.mxu0 0
    %1759 = vmatprep.subr.bf16.mxu0 0
    %1760 = vmatpush1.bf16.msra.mxu0 0
    %1761 = vmatprep.mubr.bf16.mxu0 0
    %1762 = vmatmul.mubr.bf16.gmra.mrb[0].mxu0 %v1727
    %v1763 = vpop.f32.mrb[0].mxu0
    %v1764 = vadd.f32 0.0, %v1763
    %v1765 = vpop.f32.mrb[0].mxu0
    %v1766 = vpop.f32.mrb[0].mxu0
    %v1767 = vadd.f32 0.0, %v1766
    %v1768 = vpop.f32.mrb[0].mxu0
    %1769 = vdwg.mxu0
    %1770 = vrot.lane.b32.xlu0 %v1408, 80
    %v1771 = vpop.permute.xlu0 %1770
    %1772 = vrot.lane.b32.xlu0 %v1408, 16
    %v1773 = vpop.permute.xlu0 %1772
    %v1775 = vsel %vm330, %v1771, 0
    %v1778 = vsel %vm330, %v1773, 0
    %1780 = vmatprep.subr.bf16.mxu0 0
    %1781 = vmatpush1.bf16.xpose.msra.mxu0 %v1778
    %1782 = vmatprep.subr.bf16.mxu0 0
    %1783 = vmatpush1.bf16.xpose.msra.mxu0 0
    %1784 = vmatprep.subr.bf16.mxu0 0
    %1785 = vmatpush1.bf16.xpose.msra.mxu0 0
    %1786 = vmatprep.subr.bf16.mxu0 0
    %1787 = vmatpush1.bf16.xpose.msra.mxu0 0
    %1788 = vmatprep.subr.bf16.mxu0 0
    %1789 = vmatpush1.bf16.xpose.msra.mxu0 0
    %1790 = vmatprep.subr.bf16.mxu0 0
    %1791 = vmatpush1.bf16.xpose.msra.mxu0 0
    %1792 = vmatprep.subr.bf16.mxu0 0
    %1793 = vmatpush1.bf16.xpose.msra.mxu0 0
    %1794 = vmatprep.subr.bf16.mxu0 0
    %1795 = vmatpush1.bf16.xpose.msra.mxu0 0
    %1796 = vmatprep.subr.bf16.mxu0 0
    %1797 = vmatpush1.bf16.xpose.msra.mxu0 0
    %1798 = vmatprep.subr.bf16.mxu0 0
    %1799 = vmatpush1.bf16.xpose.msra.mxu0 0
    %1800 = vmatprep.subr.bf16.mxu0 0
    %1801 = vmatpush1.bf16.xpose.msra.mxu0 0
    %1802 = vmatprep.subr.bf16.mxu0 0
    %1803 = vmatpush1.bf16.xpose.msra.mxu0 0
    %1804 = vmatprep.subr.bf16.mxu0 0
    %1805 = vmatpush1.bf16.xpose.msra.mxu0 0
    %1806 = vmatprep.subr.bf16.mxu0 0
    %1807 = vmatpush1.bf16.xpose.msra.mxu0 0
    %1808 = vmatprep.subr.bf16.mxu0 0
    %1809 = vmatpush1.bf16.xpose.msra.mxu0 0
    %1810 = vmatprep.subr.bf16.mxu0 0
    %1811 = vmatpush1.bf16.xpose.msra.mxu0 0
    %1812 = vmatprep.mubr.bf16.mxu0 0
    %1813 = vmatmul.mubr.bf16.gmra.mrb[0].mxu0 %v1775
    %v1814 = vpop.f32.mrb[0].mxu0
    %v1815 = vadd.f32 %v182, %v1814
    %v1816 = vpop.f32.mrb[0].mxu0
    %v1817 = vpop.f32.mrb[0].mxu0
    %v1818 = vadd.f32 %v183, %v1817
    %v1819 = vpop.f32.mrb[0].mxu0
    %1820 = vdwg.mxu0
    %v1821 = vsel %vm330, %v1815, -inf
    %1822 = vmax.xlane.f32.xlu0 %v1821
    %v1823 = vpop.xlane.xlu0 %1822
    %v1824 = vsel %vm330, %v1818, -inf
    %1825 = vmax.xlane.f32.xlu0 %v1824
    %v1826 = vpop.xlane.xlu0 %1825
    %v1827 = vsub.f32 %v1815, %v1823
    %v1828 = vsub.f32 %v1818, %v1826
    %v1829 = vmul.f32 %v1827, 1.442695
    %v1830 = vpow.pop %v1829
    %v1831 = vmul.f32 %v1828, 1.442695
    %v1832 = vpow.pop %v1831
    %v1833 = vsel %vm330, %v1830, 0.0
    %1834 = vadd.xlane.f32.xlu0 %v1833
    %v1835 = vpop.xlane.xlu0 %1834
    %v1836 = vsel %vm330, %v1832, 0.0
    %1837 = vadd.xlane.f32.xlu0 %v1836
    %v1838 = vpop.xlane.xlu0 %1837
    %v1839 = vrcp.pop %v1835
    %v1840 = vrcp.pop %v1838
    %v1841 = vmul.f32 %v1830, %v1839
    %v1842 = vmul.f32 %v1832, %v1840
    %v1843 = vpack.c.bf16 %v1842, %v1841
    %1844 = vrot.lane.b32.xlu0 %v1409, 80
    %v1845 = vpop.permute.xlu0 %1844
    %v1848 = vsel %vm330, %v1843, 0
    %1850 = vmatprep.subr.bf16.mxu0 0
    %1851 = vmatpush1.bf16.msra.mxu0 %v1845
    %1852 = vmatprep.subr.bf16.mxu0 0
    %1853 = vmatpush1.bf16.msra.mxu0 0
    %1854 = vmatprep.subr.bf16.mxu0 0
    %1855 = vmatpush1.bf16.msra.mxu0 0
    %1856 = vmatprep.subr.bf16.mxu0 0
    %1857 = vmatpush1.bf16.msra.mxu0 0
    %1858 = vmatprep.subr.bf16.mxu0 0
    %1859 = vmatpush1.bf16.msra.mxu0 0
    %1860 = vmatprep.subr.bf16.mxu0 0
    %1861 = vmatpush1.bf16.msra.mxu0 0
    %1862 = vmatprep.subr.bf16.mxu0 0
    %1863 = vmatpush1.bf16.msra.mxu0 0
    %1864 = vmatprep.subr.bf16.mxu0 0
    %1865 = vmatpush1.bf16.msra.mxu0 0
    %1866 = vmatprep.subr.bf16.mxu0 0
    %1867 = vmatpush1.bf16.msra.mxu0 0
    %1868 = vmatprep.subr.bf16.mxu0 0
    %1869 = vmatpush1.bf16.msra.mxu0 0
    %1870 = vmatprep.subr.bf16.mxu0 0
    %1871 = vmatpush1.bf16.msra.mxu0 0
    %1872 = vmatprep.subr.bf16.mxu0 0
    %1873 = vmatpush1.bf16.msra.mxu0 0
    %1874 = vmatprep.subr.bf16.mxu0 0
    %1875 = vmatpush1.bf16.msra.mxu0 0
    %1876 = vmatprep.subr.bf16.mxu0 0
    %1877 = vmatpush1.bf16.msra.mxu0 0
    %1878 = vmatprep.subr.bf16.mxu0 0
    %1879 = vmatpush1.bf16.msra.mxu0 0
    %1880 = vmatprep.subr.bf16.mxu0 0
    %1881 = vmatpush1.bf16.msra.mxu0 0
    %1882 = vmatprep.mubr.bf16.mxu0 0
    %1883 = vmatmul.mubr.bf16.gmra.mrb[0].mxu0 %v1848
    %v1884 = vpop.f32.mrb[0].mxu0
    %v1885 = vadd.f32 0.0, %v1884
    %v1886 = vpop.f32.mrb[0].mxu0
    %v1887 = vpop.f32.mrb[0].mxu0
    %v1888 = vadd.f32 0.0, %v1887
    %v1889 = vpop.f32.mrb[0].mxu0
    %1890 = vdwg.mxu0
    %1893 = vrot.lane.b32.xlu0 %v1643, 16
    %v1894 = vpop.permute.xlu0 %1893
    %1895 = vrot.lane.b32.xlu0 %v1646, 16
    %v1896 = vpop.permute.xlu0 %1895
    %1901 = vrot.lane.b32.xlu0 %v1764, 32
    %v1902 = vpop.permute.xlu0 %1901
    %1903 = vrot.lane.b32.xlu0 %v1767, 32
    %v1904 = vpop.permute.xlu0 %1903
    %1909 = vrot.lane.b32.xlu0 %v1885, 48
    %v1910 = vpop.permute.xlu0 %1909
    %1911 = vrot.lane.b32.xlu0 %v1888, 48
    %v1912 = vpop.permute.xlu0 %1911
    %v1915 = vsel %vm330, %v1521, %v1894
    %v1916 = vsel %vm330, %v1524, %v1896
    %v1917 = vsel %vm835, %v1915, %v1902
    %v1918 = vsel %vm835, %v1916, %v1904
    %v1919 = vsel %vm838, %v1917, %v1910
    %v1920 = vsel %vm838, %v1918, %v1912
    %v1921 = vpack.c.bf16 %v1920, %v1919
    %s1922 = scalar_lea.vmem %s7, 32
    %v1923 = vld [vmem:[%s1922] sm:$0xf]
    %v1924 = vld [vmem:[%s1922 + $0x4] sm:$0xf]
    %v1925 = vld [vmem:[%s1922 + $0x8] sm:$0xf]
    %v1926 = vld [vmem:[%s1922 + $0xc] sm:$0xf]
    %v1927 = vld [vmem:[%s1922 + $0x10] sm:$0xf]
    %v1928 = vld [vmem:[%s1922 + $0x14] sm:$0xf]
    %v1929 = vld [vmem:[%s1922 + $0x18] sm:$0xf]
    %v1930 = vld [vmem:[%s1922 + $0x1c] sm:$0xf]
    %v1939 = vunpack.c.l.b16 %v1923
    %v1940 = vunpack.c.l.b16 %v1924
    %v1941 = vunpack.c.l.b16 %v1925
    %v1942 = vunpack.c.l.b16 %v1926
    %v1943 = vunpack.c.l.b16 %v1927
    %v1944 = vunpack.c.l.b16 %v1928
    %v1945 = vunpack.c.l.b16 %v1929
    %v1946 = vunpack.c.l.b16 %v1930
    %v1947 = vpack.c.b16 %v1940, %v1939
    %v1948 = vpack.c.b16 %v1942, %v1941
    %v1949 = vpack.c.b16 %v1944, %v1943
    %v1950 = vpack.c.b16 %v1946, %v1945
    %v1956 = vsel %vm186, %v1921, 0
    %1958 = vmatprep.subr.bf16.mxu0 0
    %1959 = vmatpush1.bf16.msra.mxu0 %v1947
    %1960 = vmatprep.subr.bf16.mxu0 0
    %1961 = vmatpush1.bf16.msra.mxu0 %v1948
    %1962 = vmatprep.subr.bf16.mxu0 0
    %1963 = vmatpush1.bf16.msra.mxu0 %v1949
    %1964 = vmatprep.subr.bf16.mxu0 0
    %1965 = vmatpush1.bf16.msra.mxu0 %v1950
    %1966 = vmatprep.subr.bf16.mxu0 0
    %1967 = vmatpush1.bf16.msra.mxu0 0
    %1968 = vmatprep.subr.bf16.mxu0 0
    %1969 = vmatpush1.bf16.msra.mxu0 0
    %1970 = vmatprep.subr.bf16.mxu0 0
    %1971 = vmatpush1.bf16.msra.mxu0 0
    %1972 = vmatprep.subr.bf16.mxu0 0
    %1973 = vmatpush1.bf16.msra.mxu0 0
    %1974 = vmatprep.subr.bf16.mxu0 0
    %1975 = vmatpush1.bf16.msra.mxu0 0
    %1976 = vmatprep.subr.bf16.mxu0 0
    %1977 = vmatpush1.bf16.msra.mxu0 0
    %1978 = vmatprep.subr.bf16.mxu0 0
    %1979 = vmatpush1.bf16.msra.mxu0 0
    %1980 = vmatprep.subr.bf16.mxu0 0
    %1981 = vmatpush1.bf16.msra.mxu0 0
    %1982 = vmatprep.subr.bf16.mxu0 0
    %1983 = vmatpush1.bf16.msra.mxu0 0
    %1984 = vmatprep.subr.bf16.mxu0 0
    %1985 = vmatpush1.bf16.msra.mxu0 0
    %1986 = vmatprep.subr.bf16.mxu0 0
    %1987 = vmatpush1.bf16.msra.mxu0 0
    %1988 = vmatprep.subr.bf16.mxu0 0
    %1989 = vmatpush1.bf16.msra.mxu0 0
    %1990 = vmatprep.mubr.bf16.mxu0 0
    %1991 = vmatmul.mubr.bf16.gmra.mrb[0].mxu0 %v1956
    %v1992 = vpop.f32.mrb[0].mxu0
    %v1993 = vadd.f32 0.0, %v1992
    %v1994 = vpop.f32.mrb[0].mxu0
    %v1995 = vpop.f32.mrb[0].mxu0
    %v1996 = vadd.f32 0.0, %v1995
    %v1997 = vpop.f32.mrb[0].mxu0
    %1998 = vdwg.mxu0
    %v1999 = vadd.f32 %v1264, %v1993
    %v2000 = vadd.f32 %v1265, %v1996
    %s2001 = scalar_lea.vmem %s8, 1
    %v2002 = vld [vmem:[%s2001] sm:$0x1]
    %v2004 = vlaneseq
    %v2005 = vshrl.u32 %v2004, 7
    %v2006 = vsub.s32 0, %v2005
    %v2007 = vrot.slane %v2002, %v2006
    %v2009 = vadd.f32 %v1999, %v2007
    %v2010 = vadd.f32 %v2000, %v2007
    %s2011 = scalar_lea.vmem %s9, 1
    %v2012 = vld [vmem:[%s2011] sm:$0x1]
    %s2013 = scalar_lea.vmem %s10, 1
    %v2014 = vld [vmem:[%s2013] sm:$0x1]
    %v2015 = vsel %vm186, %v2009, 0.0
    %2016 = vadd.xlane.f32.xlu0 %v2015
    %v2017 = vpop.xlane.xlu0 %2016
    %v2018 = vsel %vm186, %v2010, 0.0
    %2019 = vadd.xlane.f32.xlu0 %v2018
    %v2020 = vpop.xlane.xlu0 %2019
    %v2021 = vmul.f32 %v2017, %v193
    %v2022 = vmul.f32 %v2020, %v193
    %v2023 = vsub.f32 %v2009, %v2021
    %v2024 = vsub.f32 %v2010, %v2022
    %v2025 = vmul.f32 %v2023, %v2023
    %v2026 = vmul.f32 %v2024, %v2024
    %v2027 = vsel %vm186, %v2025, 0.0
    %2028 = vadd.xlane.f32.xlu0 %v2027
    %v2029 = vpop.xlane.xlu0 %2028
    %v2030 = vsel %vm186, %v2026, 0.0
    %2031 = vadd.xlane.f32.xlu0 %v2030
    %v2032 = vpop.xlane.xlu0 %2031
    %v2033 = vmul.f32 %v2029, %v193
    %v2034 = vmul.f32 %v2032, %v193
    %v2035 = vadd.f32 %v2033, 1e-05
    %v2036 = vadd.f32 %v2034, 1e-05
    %v2037 = vrsqrt.pop %v2035
    %v2038 = vrsqrt.pop %v2036
    %v2039 = vmul.f32 %v2023, %v2037
    %v2040 = vmul.f32 %v2024, %v2038
    %v2042 = vlaneseq
    %v2043 = vshrl.u32 %v2042, 7
    %v2044 = vsub.s32 0, %v2043
    %v2045 = vrot.slane %v2012, %v2044
    %v2047 = vmul.f32 %v2039, %v2045
    %v2048 = vmul.f32 %v2040, %v2045
    %v2050 = vlaneseq
    %v2051 = vshrl.u32 %v2050, 7
    %v2052 = vsub.s32 0, %v2051
    %v2053 = vrot.slane %v2014, %v2052
    %v2055 = vadd.f32 %v2047, %v2053
    %v2056 = vadd.f32 %v2048, %v2053
    %v2057 = vpack.c.bf16 %v2056, %v2055
    %s2058 = scalar_lea.vmem %s11, 64
    %v2059 = vld [vmem:[%s2058] sm:$0xff]
    %v2060 = vld [vmem:[%s2058 + $0x8] sm:$0xff]
    %v2061 = vld [vmem:[%s2058 + $0x10] sm:$0xff]
    %v2062 = vld [vmem:[%s2058 + $0x18] sm:$0xff]
    %v2063 = vld [vmem:[%s2058 + $0x20] sm:$0xff]
    %v2064 = vld [vmem:[%s2058 + $0x28] sm:$0xff]
    %v2065 = vld [vmem:[%s2058 + $0x30] sm:$0xff]
    %v2066 = vld [vmem:[%s2058 + $0x38] sm:$0xff]
    %s2067 = scalar_lea.vmem %s12, 2
    %v2068 = vld [vmem:[%s2067] sm:$0x3]
    %v2070 = vlaneseq
    %v2071 = vshrl.u32 %v2070, 7
    %v2072 = vsub.s32 0, %v2071
    %v2073 = vrot.slane %v2068, %v2072
    %v2074 = vlaneseq
    %v2075 = vshrl.u32 %v2074, 7
    %v2076 = vsub.s32 1, %v2075
    %v2077 = vrot.slane %v2068, %v2076
    %v2088 = vunpack.c.l.b16 %v2059
    %v2089 = vunpack.c.h.b16 %v2059
    %v2090 = vunpack.c.l.b16 %v2060
    %v2091 = vunpack.c.h.b16 %v2060
    %v2092 = vunpack.c.l.b16 %v2061
    %v2093 = vunpack.c.h.b16 %v2061
    %v2094 = vunpack.c.l.b16 %v2062
    %v2095 = vunpack.c.h.b16 %v2062
    %v2096 = vunpack.c.l.b16 %v2063
    %v2097 = vunpack.c.h.b16 %v2063
    %v2098 = vunpack.c.l.b16 %v2064
    %v2099 = vunpack.c.h.b16 %v2064
    %v2100 = vunpack.c.l.b16 %v2065
    %v2101 = vunpack.c.h.b16 %v2065
    %v2102 = vunpack.c.l.b16 %v2066
    %v2103 = vunpack.c.h.b16 %v2066
    %v2104 = vpack.c.b16 %v2090, %v2088
    %v2105 = vpack.c.b16 %v2091, %v2089
    %v2106 = vpack.c.b16 %v2094, %v2092
    %v2107 = vpack.c.b16 %v2095, %v2093
    %v2108 = vpack.c.b16 %v2098, %v2096
    %v2109 = vpack.c.b16 %v2099, %v2097
    %v2110 = vpack.c.b16 %v2102, %v2100
    %v2111 = vpack.c.b16 %v2103, %v2101
    %v2121 = vsel %vm186, %v2057, 0
    %2123 = vmatprep.subr.bf16.mxu0 %v2105
    %2124 = vmatpush1.bf16.msra.mxu0 %v2104
    %2125 = vmatprep.subr.bf16.mxu0 %v2107
    %2126 = vmatpush1.bf16.msra.mxu0 %v2106
    %2127 = vmatprep.subr.bf16.mxu0 %v2109
    %2128 = vmatpush1.bf16.msra.mxu0 %v2108
    %2129 = vmatprep.subr.bf16.mxu0 %v2111
    %2130 = vmatpush1.bf16.msra.mxu0 %v2110
    %2131 = vmatprep.subr.bf16.mxu0 0
    %2132 = vmatpush1.bf16.msra.mxu0 0
    %2133 = vmatprep.subr.bf16.mxu0 0
    %2134 = vmatpush1.bf16.msra.mxu0 0
    %2135 = vmatprep.subr.bf16.mxu0 0
    %2136 = vmatpush1.bf16.msra.mxu0 0
    %2137 = vmatprep.subr.bf16.mxu0 0
    %2138 = vmatpush1.bf16.msra.mxu0 0
    %2139 = vmatprep.subr.bf16.mxu0 0
    %2140 = vmatpush1.bf16.msra.mxu0 0
    %2141 = vmatprep.subr.bf16.mxu0 0
    %2142 = vmatpush1.bf16.msra.mxu0 0
    %2143 = vmatprep.subr.bf16.mxu0 0
    %2144 = vmatpush1.bf16.msra.mxu0 0
    %2145 = vmatprep.subr.bf16.mxu0 0
    %2146 = vmatpush1.bf16.msra.mxu0 0
    %2147 = vmatprep.subr.bf16.mxu0 0
    %2148 = vmatpush1.bf16.msra.mxu0 0
    %2149 = vmatprep.subr.bf16.mxu0 0
    %2150 = vmatpush1.bf16.msra.mxu0 0
    %2151 = vmatprep.subr.bf16.mxu0 0
    %2152 = vmatpush1.bf16.msra.mxu0 0
    %2153 = vmatprep.subr.bf16.mxu0 0
    %2154 = vmatpush1.bf16.msra.mxu0 0
    %2155 = vmatprep.mubr.bf16.mxu0 0
    %2156 = vmatmul.mubr.bf16.gmra.mrb[0].mxu0 %v2121
    %v2157 = vpop.f32.mrb[0].mxu0
    %v2158 = vadd.f32 %v2073, %v2157
    %v2159 = vpop.f32.mrb[0].mxu0
    %v2160 = vadd.f32 %v2077, %v2159
    %v2161 = vpop.f32.mrb[0].mxu0
    %v2162 = vadd.f32 %v2073, %v2161
    %v2163 = vpop.f32.mrb[0].mxu0
    %v2164 = vadd.f32 %v2077, %v2163
    %2165 = vdwg.mxu0
    %v2166 = vmax.f32 %v2158, 0.0
    %v2167 = vmax.f32 %v2160, 0.0
    %v2168 = vmax.f32 %v2162, 0.0
    %v2169 = vmax.f32 %v2164, 0.0
    %v2170 = vpack.c.bf16 %v2168, %v2166
    %v2171 = vpack.c.bf16 %v2169, %v2167
    %s2172 = scalar_lea.vmem %s13, 128
    %v2173 = vld [vmem:[%s2172] sm:$0xf]
    %v2174 = vld [vmem:[%s2172 + $0x4] sm:$0xf]
    %v2175 = vld [vmem:[%s2172 + $0x8] sm:$0xf]
    %v2176 = vld [vmem:[%s2172 + $0xc] sm:$0xf]
    %v2177 = vld [vmem:[%s2172 + $0x10] sm:$0xf]
    %v2178 = vld [vmem:[%s2172 + $0x14] sm:$0xf]
    %v2179 = vld [vmem:[%s2172 + $0x18] sm:$0xf]
    %v2180 = vld [vmem:[%s2172 + $0x1c] sm:$0xf]
    %v2181 = vld [vmem:[%s2172 + $0x20] sm:$0xf]
    %v2182 = vld [vmem:[%s2172 + $0x24] sm:$0xf]
    %v2183 = vld [vmem:[%s2172 + $0x28] sm:$0xf]
    %v2184 = vld [vmem:[%s2172 + $0x2c] sm:$0xf]
    %v2185 = vld [vmem:[%s2172 + $0x30] sm:$0xf]
    %v2186 = vld [vmem:[%s2172 + $0x34] sm:$0xf]
    %v2187 = vld [vmem:[%s2172 + $0x38] sm:$0xf]
    %v2188 = vld [vmem:[%s2172 + $0x3c] sm:$0xf]
    %v2189 = vld [vmem:[%s2172 + $0x40] sm:$0xf]
    %v2190 = vld [vmem:[%s2172 + $0x44] sm:$0xf]
    %v2191 = vld [vmem:[%s2172 + $0x48] sm:$0xf]
    %v2192 = vld [vmem:[%s2172 + $0x4c] sm:$0xf]
    %v2193 = vld [vmem:[%s2172 + $0x50] sm:$0xf]
    %v2194 = vld [vmem:[%s2172 + $0x54] sm:$0xf]
    %v2195 = vld [vmem:[%s2172 + $0x58] sm:$0xf]
    %v2196 = vld [vmem:[%s2172 + $0x5c] sm:$0xf]
    %v2197 = vld [vmem:[%s2172 + $0x60] sm:$0xf]
    %v2198 = vld [vmem:[%s2172 + $0x64] sm:$0xf]
    %v2199 = vld [vmem:[%s2172 + $0x68] sm:$0xf]
    %v2200 = vld [vmem:[%s2172 + $0x6c] sm:$0xf]
    %v2201 = vld [vmem:[%s2172 + $0x70] sm:$0xf]
    %v2202 = vld [vmem:[%s2172 + $0x74] sm:$0xf]
    %v2203 = vld [vmem:[%s2172 + $0x78] sm:$0xf]
    %v2204 = vld [vmem:[%s2172 + $0x7c] sm:$0xf]
    %v2237 = vunpack.c.l.b16 %v2173
    %v2238 = vunpack.c.l.b16 %v2174
    %v2239 = vunpack.c.l.b16 %v2175
    %v2240 = vunpack.c.l.b16 %v2176
    %v2241 = vunpack.c.l.b16 %v2177
    %v2242 = vunpack.c.l.b16 %v2178
    %v2243 = vunpack.c.l.b16 %v2179
    %v2244 = vunpack.c.l.b16 %v2180
    %v2245 = vunpack.c.l.b16 %v2181
    %v2246 = vunpack.c.l.b16 %v2182
    %v2247 = vunpack.c.l.b16 %v2183
    %v2248 = vunpack.c.l.b16 %v2184
    %v2249 = vunpack.c.l.b16 %v2185
    %v2250 = vunpack.c.l.b16 %v2186
    %v2251 = vunpack.c.l.b16 %v2187
    %v2252 = vunpack.c.l.b16 %v2188
    %v2253 = vunpack.c.l.b16 %v2189
    %v2254 = vunpack.c.l.b16 %v2190
    %v2255 = vunpack.c.l.b16 %v2191
    %v2256 = vunpack.c.l.b16 %v2192
    %v2257 = vunpack.c.l.b16 %v2193
    %v2258 = vunpack.c.l.b16 %v2194
    %v2259 = vunpack.c.l.b16 %v2195
    %v2260 = vunpack.c.l.b16 %v2196
    %v2261 = vunpack.c.l.b16 %v2197
    %v2262 = vunpack.c.l.b16 %v2198
    %v2263 = vunpack.c.l.b16 %v2199
    %v2264 = vunpack.c.l.b16 %v2200
    %v2265 = vunpack.c.l.b16 %v2201
    %v2266 = vunpack.c.l.b16 %v2202
    %v2267 = vunpack.c.l.b16 %v2203
    %v2268 = vunpack.c.l.b16 %v2204
    %v2269 = vpack.c.b16 %v2238, %v2237
    %v2270 = vpack.c.b16 %v2240, %v2239
    %v2271 = vpack.c.b16 %v2242, %v2241
    %v2272 = vpack.c.b16 %v2244, %v2243
    %v2273 = vpack.c.b16 %v2246, %v2245
    %v2274 = vpack.c.b16 %v2248, %v2247
    %v2275 = vpack.c.b16 %v2250, %v2249
    %v2276 = vpack.c.b16 %v2252, %v2251
    %v2277 = vpack.c.b16 %v2254, %v2253
    %v2278 = vpack.c.b16 %v2256, %v2255
    %v2279 = vpack.c.b16 %v2258, %v2257
    %v2280 = vpack.c.b16 %v2260, %v2259
    %v2281 = vpack.c.b16 %v2262, %v2261
    %v2282 = vpack.c.b16 %v2264, %v2263
    %v2283 = vpack.c.b16 %v2266, %v2265
    %v2284 = vpack.c.b16 %v2268, %v2267
    %2301 = vmatprep.subr.bf16.mxu0 0
    %2302 = vmatpush1.bf16.msra.mxu0 %v2269
    %2303 = vmatprep.subr.bf16.mxu0 0
    %2304 = vmatpush1.bf16.msra.mxu0 %v2270
    %2305 = vmatprep.subr.bf16.mxu0 0
    %2306 = vmatpush1.bf16.msra.mxu0 %v2271
    %2307 = vmatprep.subr.bf16.mxu0 0
    %2308 = vmatpush1.bf16.msra.mxu0 %v2272
    %2309 = vmatprep.subr.bf16.mxu0 0
    %2310 = vmatpush1.bf16.msra.mxu0 %v2273
    %2311 = vmatprep.subr.bf16.mxu0 0
    %2312 = vmatpush1.bf16.msra.mxu0 %v2274
    %2313 = vmatprep.subr.bf16.mxu0 0
    %2314 = vmatpush1.bf16.msra.mxu0 %v2275
    %2315 = vmatprep.subr.bf16.mxu0 0
    %2316 = vmatpush1.bf16.msra.mxu0 %v2276
    %2317 = vmatprep.subr.bf16.mxu0 0
    %2318 = vmatpush1.bf16.msra.mxu0 %v2277
    %2319 = vmatprep.subr.bf16.mxu0 0
    %2320 = vmatpush1.bf16.msra.mxu0 %v2278
    %2321 = vmatprep.subr.bf16.mxu0 0
    %2322 = vmatpush1.bf16.msra.mxu0 %v2279
    %2323 = vmatprep.subr.bf16.mxu0 0
    %2324 = vmatpush1.bf16.msra.mxu0 %v2280
    %2325 = vmatprep.subr.bf16.mxu0 0
    %2326 = vmatpush1.bf16.msra.mxu0 %v2281
    %2327 = vmatprep.subr.bf16.mxu0 0
    %2328 = vmatpush1.bf16.msra.mxu0 %v2282
    %2329 = vmatprep.subr.bf16.mxu0 0
    %2330 = vmatpush1.bf16.msra.mxu0 %v2283
    %2331 = vmatprep.subr.bf16.mxu0 0
    %2332 = vmatpush1.bf16.msra.mxu0 %v2284
    %2333 = vmatprep.mubr.bf16.mxu0 %v2171
    %2334 = vmatmul.mubr.bf16.gmra.mrb[0].mxu0 %v2170
    %v2335 = vpop.f32.mrb[0].mxu0
    %v2336 = vadd.f32 0.0, %v2335
    %v2337 = vpop.f32.mrb[0].mxu0
    %v2338 = vpop.f32.mrb[0].mxu0
    %v2339 = vadd.f32 0.0, %v2338
    %v2340 = vpop.f32.mrb[0].mxu0
    %2341 = vdwg.mxu0
    %v2342 = vadd.f32 %v2009, %v2336
    %v2343 = vadd.f32 %v2010, %v2339
    %s2344 = scalar_lea.vmem %s14, 1
    %v2345 = vld [vmem:[%s2344] sm:$0x1]
    %v2347 = vlaneseq
    %v2348 = vshrl.u32 %v2347, 7
    %v2349 = vsub.s32 0, %v2348
    %v2350 = vrot.slane %v2345, %v2349
    %v2352 = vadd.f32 %v2342, %v2350
    %v2353 = vadd.f32 %v2343, %v2350
    %s2354 = scalar_lea.vmem %s4, 2
    %v2355 = vld [vmem:[%s2354] sm:$0x1]
    %s2356 = scalar_lea.vmem %s5, 2
    %v2357 = vld [vmem:[%s2356] sm:$0x1]
    %v2358 = vsel %vm186, %v2352, 0.0
    %2359 = vadd.xlane.f32.xlu0 %v2358
    %v2360 = vpop.xlane.xlu0 %2359
    %v2361 = vsel %vm186, %v2353, 0.0
    %2362 = vadd.xlane.f32.xlu0 %v2361
    %v2363 = vpop.xlane.xlu0 %2362
    %v2364 = vmul.f32 %v2360, %v193
    %v2365 = vmul.f32 %v2363, %v193
    %v2366 = vsub.f32 %v2352, %v2364
    %v2367 = vsub.f32 %v2353, %v2365
    %v2368 = vmul.f32 %v2366, %v2366
    %v2369 = vmul.f32 %v2367, %v2367
    %v2370 = vsel %vm186, %v2368, 0.0
    %2371 = vadd.xlane.f32.xlu0 %v2370
    %v2372 = vpop.xlane.xlu0 %2371
    %v2373 = vsel %vm186, %v2369, 0.0
    %2374 = vadd.xlane.f32.xlu0 %v2373
    %v2375 = vpop.xlane.xlu0 %2374
    %v2376 = vmul.f32 %v2372, %v193
    %v2377 = vmul.f32 %v2375, %v193
    %v2378 = vadd.f32 %v2376, 1e-05
    %v2379 = vadd.f32 %v2377, 1e-05
    %v2380 = vrsqrt.pop %v2378
    %v2381 = vrsqrt.pop %v2379
    %v2382 = vmul.f32 %v2366, %v2380
    %v2383 = vmul.f32 %v2367, %v2381
    %v2385 = vlaneseq
    %v2386 = vshrl.u32 %v2385, 7
    %v2387 = vsub.s32 0, %v2386
    %v2388 = vrot.slane %v2355, %v2387
    %v2390 = vmul.f32 %v2382, %v2388
    %v2391 = vmul.f32 %v2383, %v2388
    %v2393 = vlaneseq
    %v2394 = vshrl.u32 %v2393, 7
    %v2395 = vsub.s32 0, %v2394
    %v2396 = vrot.slane %v2357, %v2395
    %v2398 = vadd.f32 %v2390, %v2396
    %v2399 = vadd.f32 %v2391, %v2396
    %v2400 = vpack.c.bf16 %v2399, %v2398
    %s2401 = scalar_lea.vmem %s6, 128
    %v2402 = vld [vmem:[%s2401] sm:$0xff]
    %v2403 = vld [vmem:[%s2401 + $0x8] sm:$0xff]
    %v2404 = vld [vmem:[%s2401 + $0x10] sm:$0xff]
    %v2405 = vld [vmem:[%s2401 + $0x18] sm:$0xff]
    %v2406 = vld [vmem:[%s2401 + $0x20] sm:$0xff]
    %v2407 = vld [vmem:[%s2401 + $0x28] sm:$0xff]
    %v2408 = vld [vmem:[%s2401 + $0x30] sm:$0xff]
    %v2409 = vld [vmem:[%s2401 + $0x38] sm:$0xff]
    %v2418 = vunpack.c.l.b16 %v2402
    %v2419 = vunpack.c.h.b16 %v2402
    %v2420 = vunpack.c.l.b16 %v2403
    %v2421 = vunpack.c.h.b16 %v2403
    %v2422 = vunpack.c.l.b16 %v2404
    %v2423 = vunpack.c.h.b16 %v2404
    %v2424 = vunpack.c.l.b16 %v2405
    %v2425 = vunpack.c.h.b16 %v2405
    %v2426 = vunpack.c.l.b16 %v2406
    %v2427 = vunpack.c.h.b16 %v2406
    %v2428 = vunpack.c.l.b16 %v2407
    %v2429 = vunpack.c.h.b16 %v2407
    %v2430 = vunpack.c.l.b16 %v2408
    %v2431 = vunpack.c.h.b16 %v2408
    %v2432 = vunpack.c.l.b16 %v2409
    %v2433 = vunpack.c.h.b16 %v2409
    %v2434 = vpack.c.b16 %v2420, %v2418
    %v2435 = vpack.c.b16 %v2421, %v2419
    %v2436 = vpack.c.b16 %v2424, %v2422
    %v2437 = vpack.c.b16 %v2425, %v2423
    %v2438 = vpack.c.b16 %v2428, %v2426
    %v2439 = vpack.c.b16 %v2429, %v2427
    %v2440 = vpack.c.b16 %v2432, %v2430
    %v2441 = vpack.c.b16 %v2433, %v2431
    %v2451 = vsel %vm186, %v2400, 0
    %2453 = vmatprep.subr.bf16.mxu0 %v2435
    %2454 = vmatpush1.bf16.msra.mxu0 %v2434
    %2455 = vmatprep.subr.bf16.mxu0 %v2437
    %2456 = vmatpush1.bf16.msra.mxu0 %v2436
    %2457 = vmatprep.subr.bf16.mxu0 %v2439
    %2458 = vmatpush1.bf16.msra.mxu0 %v2438
    %2459 = vmatprep.subr.bf16.mxu0 %v2441
    %2460 = vmatpush1.bf16.msra.mxu0 %v2440
    %2461 = vmatprep.subr.bf16.mxu0 0
    %2462 = vmatpush1.bf16.msra.mxu0 0
    %2463 = vmatprep.subr.bf16.mxu0 0
    %2464 = vmatpush1.bf16.msra.mxu0 0
    %2465 = vmatprep.subr.bf16.mxu0 0
    %2466 = vmatpush1.bf16.msra.mxu0 0
    %2467 = vmatprep.subr.bf16.mxu0 0
    %2468 = vmatpush1.bf16.msra.mxu0 0
    %2469 = vmatprep.subr.bf16.mxu0 0
    %2470 = vmatpush1.bf16.msra.mxu0 0
    %2471 = vmatprep.subr.bf16.mxu0 0
    %2472 = vmatpush1.bf16.msra.mxu0 0
    %2473 = vmatprep.subr.bf16.mxu0 0
    %2474 = vmatpush1.bf16.msra.mxu0 0
    %2475 = vmatprep.subr.bf16.mxu0 0
    %2476 = vmatpush1.bf16.msra.mxu0 0
    %2477 = vmatprep.subr.bf16.mxu0 0
    %2478 = vmatpush1.bf16.msra.mxu0 0
    %2479 = vmatprep.subr.bf16.mxu0 0
    %2480 = vmatpush1.bf16.msra.mxu0 0
    %2481 = vmatprep.subr.bf16.mxu0 0
    %2482 = vmatpush1.bf16.msra.mxu0 0
    %2483 = vmatprep.subr.bf16.mxu0 0
    %2484 = vmatpush1.bf16.msra.mxu0 0
    %2485 = vmatprep.mubr.bf16.mxu0 0
    %2486 = vmatmul.mubr.bf16.gmra.mrb[0].mxu0 %v2451
    %v2487 = vpop.f32.mrb[0].mxu0
    %v2488 = vadd.f32 0.0, %v2487
    %v2489 = vpop.f32.mrb[0].mxu0
    %v2490 = vadd.f32 0.0, %v2489
    %v2491 = vpop.f32.mrb[0].mxu0
    %v2492 = vadd.f32 0.0, %v2491
    %v2493 = vpop.f32.mrb[0].mxu0
    %v2494 = vadd.f32 0.0, %v2493
    %2495 = vdwg.mxu0
    %v2496 = vpack.c.bf16 %v2492, %v2488
    %v2497 = vpack.c.bf16 %v2494, %v2490
    %2499 = vrot.lane.b32.xlu0 %v2496, 64
    %v2500 = vpop.permute.xlu0 %2499
    %v2502 = vsel %vm330, %v2496, 0
    %v2505 = vsel %vm330, %v2500, 0
    %2507 = vmatprep.subr.bf16.mxu0 0
    %2508 = vmatpush1.bf16.xpose.msra.mxu0 %v2505
    %2509 = vmatprep.subr.bf16.mxu0 0
    %2510 = vmatpush1.bf16.xpose.msra.mxu0 0
    %2511 = vmatprep.subr.bf16.mxu0 0
    %2512 = vmatpush1.bf16.xpose.msra.mxu0 0
    %2513 = vmatprep.subr.bf16.mxu0 0
    %2514 = vmatpush1.bf16.xpose.msra.mxu0 0
    %2515 = vmatprep.subr.bf16.mxu0 0
    %2516 = vmatpush1.bf16.xpose.msra.mxu0 0
    %2517 = vmatprep.subr.bf16.mxu0 0
    %2518 = vmatpush1.bf16.xpose.msra.mxu0 0
    %2519 = vmatprep.subr.bf16.mxu0 0
    %2520 = vmatpush1.bf16.xpose.msra.mxu0 0
    %2521 = vmatprep.subr.bf16.mxu0 0
    %2522 = vmatpush1.bf16.xpose.msra.mxu0 0
    %2523 = vmatprep.subr.bf16.mxu0 0
    %2524 = vmatpush1.bf16.xpose.msra.mxu0 0
    %2525 = vmatprep.subr.bf16.mxu0 0
    %2526 = vmatpush1.bf16.xpose.msra.mxu0 0
    %2527 = vmatprep.subr.bf16.mxu0 0
    %2528 = vmatpush1.bf16.xpose.msra.mxu0 0
    %2529 = vmatprep.subr.bf16.mxu0 0
    %2530 = vmatpush1.bf16.xpose.msra.mxu0 0
    %2531 = vmatprep.subr.bf16.mxu0 0
    %2532 = vmatpush1.bf16.xpose.msra.mxu0 0
    %2533 = vmatprep.subr.bf16.mxu0 0
    %2534 = vmatpush1.bf16.xpose.msra.mxu0 0
    %2535 = vmatprep.subr.bf16.mxu0 0
    %2536 = vmatpush1.bf16.xpose.msra.mxu0 0
    %2537 = vmatprep.subr.bf16.mxu0 0
    %2538 = vmatpush1.bf16.xpose.msra.mxu0 0
    %2539 = vmatprep.mubr.bf16.mxu0 0
    %2540 = vmatmul.mubr.bf16.gmra.mrb[0].mxu0 %v2502
    %v2541 = vpop.f32.mrb[0].mxu0
    %v2542 = vadd.f32 %v182, %v2541
    %v2543 = vpop.f32.mrb[0].mxu0
    %v2544 = vpop.f32.mrb[0].mxu0
    %v2545 = vadd.f32 %v183, %v2544
    %v2546 = vpop.f32.mrb[0].mxu0
    %2547 = vdwg.mxu0
    %v2548 = vsel %vm330, %v2542, -inf
    %2549 = vmax.xlane.f32.xlu0 %v2548
    %v2550 = vpop.xlane.xlu0 %2549
    %v2551 = vsel %vm330, %v2545, -inf
    %2552 = vmax.xlane.f32.xlu0 %v2551
    %v2553 = vpop.xlane.xlu0 %2552
    %v2554 = vsub.f32 %v2542, %v2550
    %v2555 = vsub.f32 %v2545, %v2553
    %v2556 = vmul.f32 %v2554, 1.442695
    %v2557 = vpow.pop %v2556
    %v2558 = vmul.f32 %v2555, 1.442695
    %v2559 = vpow.pop %v2558
    %v2560 = vsel %vm330, %v2557, 0.0
    %2561 = vadd.xlane.f32.xlu0 %v2560
    %v2562 = vpop.xlane.xlu0 %2561
    %v2563 = vsel %vm330, %v2559, 0.0
    %2564 = vadd.xlane.f32.xlu0 %v2563
    %v2565 = vpop.xlane.xlu0 %2564
    %v2566 = vrcp.pop %v2562
    %v2567 = vrcp.pop %v2565
    %v2568 = vmul.f32 %v2557, %v2566
    %v2569 = vmul.f32 %v2559, %v2567
    %v2570 = vpack.c.bf16 %v2569, %v2568
    %v2572 = vsel %vm330, %v2570, 0
    %2574 = vmatprep.subr.bf16.mxu0 0
    %2575 = vmatpush1.bf16.msra.mxu0 %v2497
    %2576 = vmatprep.subr.bf16.mxu0 0
    %2577 = vmatpush1.bf16.msra.mxu0 0
    %2578 = vmatprep.subr.bf16.mxu0 0
    %2579 = vmatpush1.bf16.msra.mxu0 0
    %2580 = vmatprep.subr.bf16.mxu0 0
    %2581 = vmatpush1.bf16.msra.mxu0 0
    %2582 = vmatprep.subr.bf16.mxu0 0
    %2583 = vmatpush1.bf16.msra.mxu0 0
    %2584 = vmatprep.subr.bf16.mxu0 0
    %2585 = vmatpush1.bf16.msra.mxu0 0
    %2586 = vmatprep.subr.bf16.mxu0 0
    %2587 = vmatpush1.bf16.msra.mxu0 0
    %2588 = vmatprep.subr.bf16.mxu0 0
    %2589 = vmatpush1.bf16.msra.mxu0 0
    %2590 = vmatprep.subr.bf16.mxu0 0
    %2591 = vmatpush1.bf16.msra.mxu0 0
    %2592 = vmatprep.subr.bf16.mxu0 0
    %2593 = vmatpush1.bf16.msra.mxu0 0
    %2594 = vmatprep.subr.bf16.mxu0 0
    %2595 = vmatpush1.bf16.msra.mxu0 0
    %2596 = vmatprep.subr.bf16.mxu0 0
    %2597 = vmatpush1.bf16.msra.mxu0 0
    %2598 = vmatprep.subr.bf16.mxu0 0
    %2599 = vmatpush1.bf16.msra.mxu0 0
    %2600 = vmatprep.subr.bf16.mxu0 0
    %2601 = vmatpush1.bf16.msra.mxu0 0
    %2602 = vmatprep.subr.bf16.mxu0 0
    %2603 = vmatpush1.bf16.msra.mxu0 0
    %2604 = vmatprep.subr.bf16.mxu0 0
    %2605 = vmatpush1.bf16.msra.mxu0 0
    %2606 = vmatprep.mubr.bf16.mxu0 0
    %2607 = vmatmul.mubr.bf16.gmra.mrb[0].mxu0 %v2572
    %v2608 = vpop.f32.mrb[0].mxu0
    %v2609 = vadd.f32 0.0, %v2608
    %v2610 = vpop.f32.mrb[0].mxu0
    %v2611 = vpop.f32.mrb[0].mxu0
    %v2612 = vadd.f32 0.0, %v2611
    %v2613 = vpop.f32.mrb[0].mxu0
    %2614 = vdwg.mxu0
    %2615 = vrot.lane.b32.xlu0 %v2496, 112
    %v2616 = vpop.permute.xlu0 %2615
    %2617 = vrot.lane.b32.xlu0 %v2496, 48
    %v2618 = vpop.permute.xlu0 %2617
    %v2620 = vsel %vm330, %v2616, 0
    %v2623 = vsel %vm330, %v2618, 0
    %2625 = vmatprep.subr.bf16.mxu0 0
    %2626 = vmatpush1.bf16.xpose.msra.mxu0 %v2623
    %2627 = vmatprep.subr.bf16.mxu0 0
    %2628 = vmatpush1.bf16.xpose.msra.mxu0 0
    %2629 = vmatprep.subr.bf16.mxu0 0
    %2630 = vmatpush1.bf16.xpose.msra.mxu0 0
    %2631 = vmatprep.subr.bf16.mxu0 0
    %2632 = vmatpush1.bf16.xpose.msra.mxu0 0
    %2633 = vmatprep.subr.bf16.mxu0 0
    %2634 = vmatpush1.bf16.xpose.msra.mxu0 0
    %2635 = vmatprep.subr.bf16.mxu0 0
    %2636 = vmatpush1.bf16.xpose.msra.mxu0 0
    %2637 = vmatprep.subr.bf16.mxu0 0
    %2638 = vmatpush1.bf16.xpose.msra.mxu0 0
    %2639 = vmatprep.subr.bf16.mxu0 0
    %2640 = vmatpush1.bf16.xpose.msra.mxu0 0
    %2641 = vmatprep.subr.bf16.mxu0 0
    %2642 = vmatpush1.bf16.xpose.msra.mxu0 0
    %2643 = vmatprep.subr.bf16.mxu0 0
    %2644 = vmatpush1.bf16.xpose.msra.mxu0 0
    %2645 = vmatprep.subr.bf16.mxu0 0
    %2646 = vmatpush1.bf16.xpose.msra.mxu0 0
    %2647 = vmatprep.subr.bf16.mxu0 0
    %2648 = vmatpush1.bf16.xpose.msra.mxu0 0
    %2649 = vmatprep.subr.bf16.mxu0 0
    %2650 = vmatpush1.bf16.xpose.msra.mxu0 0
    %2651 = vmatprep.subr.bf16.mxu0 0
    %2652 = vmatpush1.bf16.xpose.msra.mxu0 0
    %2653 = vmatprep.subr.bf16.mxu0 0
    %2654 = vmatpush1.bf16.xpose.msra.mxu0 0
    %2655 = vmatprep.subr.bf16.mxu0 0
    %2656 = vmatpush1.bf16.xpose.msra.mxu0 0
    %2657 = vmatprep.mubr.bf16.mxu0 0
    %2658 = vmatmul.mubr.bf16.gmra.mrb[0].mxu0 %v2620
    %v2659 = vpop.f32.mrb[0].mxu0
    %v2660 = vadd.f32 %v182, %v2659
    %v2661 = vpop.f32.mrb[0].mxu0
    %v2662 = vpop.f32.mrb[0].mxu0
    %v2663 = vadd.f32 %v183, %v2662
    %v2664 = vpop.f32.mrb[0].mxu0
    %2665 = vdwg.mxu0
    %v2666 = vsel %vm330, %v2660, -inf
    %2667 = vmax.xlane.f32.xlu0 %v2666
    %v2668 = vpop.xlane.xlu0 %2667
    %v2669 = vsel %vm330, %v2663, -inf
    %2670 = vmax.xlane.f32.xlu0 %v2669
    %v2671 = vpop.xlane.xlu0 %2670
    %v2672 = vsub.f32 %v2660, %v2668
    %v2673 = vsub.f32 %v2663, %v2671
    %v2674 = vmul.f32 %v2672, 1.442695
    %v2675 = vpow.pop %v2674
    %v2676 = vmul.f32 %v2673, 1.442695
    %v2677 = vpow.pop %v2676
    %v2678 = vsel %vm330, %v2675, 0.0
    %2679 = vadd.xlane.f32.xlu0 %v2678
    %v2680 = vpop.xlane.xlu0 %2679
    %v2681 = vsel %vm330, %v2677, 0.0
    %2682 = vadd.xlane.f32.xlu0 %v2681
    %v2683 = vpop.xlane.xlu0 %2682
    %v2684 = vrcp.pop %v2680
    %v2685 = vrcp.pop %v2683
    %v2686 = vmul.f32 %v2675, %v2684
    %v2687 = vmul.f32 %v2677, %v2685
    %v2688 = vpack.c.bf16 %v2687, %v2686
    %2690 = vrot.lane.b32.xlu0 %v2497, 112
    %v2691 = vpop.permute.xlu0 %2690
    %v2694 = vsel %vm330, %v2688, 0
    %2696 = vmatprep.subr.bf16.mxu0 0
    %2697 = vmatpush1.bf16.msra.mxu0 %v2691
    %2698 = vmatprep.subr.bf16.mxu0 0
    %2699 = vmatpush1.bf16.msra.mxu0 0
    %2700 = vmatprep.subr.bf16.mxu0 0
    %2701 = vmatpush1.bf16.msra.mxu0 0
    %2702 = vmatprep.subr.bf16.mxu0 0
    %2703 = vmatpush1.bf16.msra.mxu0 0
    %2704 = vmatprep.subr.bf16.mxu0 0
    %2705 = vmatpush1.bf16.msra.mxu0 0
    %2706 = vmatprep.subr.bf16.mxu0 0
    %2707 = vmatpush1.bf16.msra.mxu0 0
    %2708 = vmatprep.subr.bf16.mxu0 0
    %2709 = vmatpush1.bf16.msra.mxu0 0
    %2710 = vmatprep.subr.bf16.mxu0 0
    %2711 = vmatpush1.bf16.msra.mxu0 0
    %2712 = vmatprep.subr.bf16.mxu0 0
    %2713 = vmatpush1.bf16.msra.mxu0 0
    %2714 = vmatprep.subr.bf16.mxu0 0
    %2715 = vmatpush1.bf16.msra.mxu0 0
    %2716 = vmatprep.subr.bf16.mxu0 0
    %2717 = vmatpush1.bf16.msra.mxu0 0
    %2718 = vmatprep.subr.bf16.mxu0 0
    %2719 = vmatpush1.bf16.msra.mxu0 0
    %2720 = vmatprep.subr.bf16.mxu0 0
    %2721 = vmatpush1.bf16.msra.mxu0 0
    %2722 = vmatprep.subr.bf16.mxu0 0
    %2723 = vmatpush1.bf16.msra.mxu0 0
    %2724 = vmatprep.subr.bf16.mxu0 0
    %2725 = vmatpush1.bf16.msra.mxu0 0
    %2726 = vmatprep.subr.bf16.mxu0 0
    %2727 = vmatpush1.bf16.msra.mxu0 0
    %2728 = vmatprep.mubr.bf16.mxu0 0
    %2729 = vmatmul.mubr.bf16.gmra.mrb[0].mxu0 %v2694
    %v2730 = vpop.f32.mrb[0].mxu0
    %v2731 = vadd.f32 0.0, %v2730
    %v2732 = vpop.f32.mrb[0].mxu0
    %v2733 = vpop.f32.mrb[0].mxu0
    %v2734 = vadd.f32 0.0, %v2733
    %v2735 = vpop.f32.mrb[0].mxu0
    %2736 = vdwg.mxu0
    %2737 = vrot.lane.b32.xlu0 %v2496, 96
    %v2738 = vpop.permute.xlu0 %2737
    %2739 = vrot.lane.b32.xlu0 %v2496, 32
    %v2740 = vpop.permute.xlu0 %2739
    %v2742 = vsel %vm330, %v2738, 0
    %v2745 = vsel %vm330, %v2740, 0
    %2747 = vmatprep.subr.bf16.mxu0 0
    %2748 = vmatpush1.bf16.xpose.msra.mxu0 %v2745
    %2749 = vmatprep.subr.bf16.mxu0 0
    %2750 = vmatpush1.bf16.xpose.msra.mxu0 0
    %2751 = vmatprep.subr.bf16.mxu0 0
    %2752 = vmatpush1.bf16.xpose.msra.mxu0 0
    %2753 = vmatprep.subr.bf16.mxu0 0
    %2754 = vmatpush1.bf16.xpose.msra.mxu0 0
    %2755 = vmatprep.subr.bf16.mxu0 0
    %2756 = vmatpush1.bf16.xpose.msra.mxu0 0
    %2757 = vmatprep.subr.bf16.mxu0 0
    %2758 = vmatpush1.bf16.xpose.msra.mxu0 0
    %2759 = vmatprep.subr.bf16.mxu0 0
    %2760 = vmatpush1.bf16.xpose.msra.mxu0 0
    %2761 = vmatprep.subr.bf16.mxu0 0
    %2762 = vmatpush1.bf16.xpose.msra.mxu0 0
    %2763 = vmatprep.subr.bf16.mxu0 0
    %2764 = vmatpush1.bf16.xpose.msra.mxu0 0
    %2765 = vmatprep.subr.bf16.mxu0 0
    %2766 = vmatpush1.bf16.xpose.msra.mxu0 0
    %2767 = vmatprep.subr.bf16.mxu0 0
    %2768 = vmatpush1.bf16.xpose.msra.mxu0 0
    %2769 = vmatprep.subr.bf16.mxu0 0
    %2770 = vmatpush1.bf16.xpose.msra.mxu0 0
    %2771 = vmatprep.subr.bf16.mxu0 0
    %2772 = vmatpush1.bf16.xpose.msra.mxu0 0
    %2773 = vmatprep.subr.bf16.mxu0 0
    %2774 = vmatpush1.bf16.xpose.msra.mxu0 0
    %2775 = vmatprep.subr.bf16.mxu0 0
    %2776 = vmatpush1.bf16.xpose.msra.mxu0 0
    %2777 = vmatprep.subr.bf16.mxu0 0
    %2778 = vmatpush1.bf16.xpose.msra.mxu0 0
    %2779 = vmatprep.mubr.bf16.mxu0 0
    %2780 = vmatmul.mubr.bf16.gmra.mrb[0].mxu0 %v2742
    %v2781 = vpop.f32.mrb[0].mxu0
    %v2782 = vadd.f32 %v182, %v2781
    %v2783 = vpop.f32.mrb[0].mxu0
    %v2784 = vpop.f32.mrb[0].mxu0
    %v2785 = vadd.f32 %v183, %v2784
    %v2786 = vpop.f32.mrb[0].mxu0
    %2787 = vdwg.mxu0
    %v2788 = vsel %vm330, %v2782, -inf
    %2789 = vmax.xlane.f32.xlu0 %v2788
    %v2790 = vpop.xlane.xlu0 %2789
    %v2791 = vsel %vm330, %v2785, -inf
    %2792 = vmax.xlane.f32.xlu0 %v2791
    %v2793 = vpop.xlane.xlu0 %2792
    %v2794 = vsub.f32 %v2782, %v2790
    %v2795 = vsub.f32 %v2785, %v2793
    %v2796 = vmul.f32 %v2794, 1.442695
    %v2797 = vpow.pop %v2796
    %v2798 = vmul.f32 %v2795, 1.442695
    %v2799 = vpow.pop %v2798
    %v2800 = vsel %vm330, %v2797, 0.0
    %2801 = vadd.xlane.f32.xlu0 %v2800
    %v2802 = vpop.xlane.xlu0 %2801
    %v2803 = vsel %vm330, %v2799, 0.0
    %2804 = vadd.xlane.f32.xlu0 %v2803
    %v2805 = vpop.xlane.xlu0 %2804
    %v2806 = vrcp.pop %v2802
    %v2807 = vrcp.pop %v2805
    %v2808 = vmul.f32 %v2797, %v2806
    %v2809 = vmul.f32 %v2799, %v2807
    %v2810 = vpack.c.bf16 %v2809, %v2808
    %2811 = vrot.lane.b32.xlu0 %v2497, 96
    %v2812 = vpop.permute.xlu0 %2811
    %v2815 = vsel %vm330, %v2810, 0
    %2817 = vmatprep.subr.bf16.mxu0 0
    %2818 = vmatpush1.bf16.msra.mxu0 %v2812
    %2819 = vmatprep.subr.bf16.mxu0 0
    %2820 = vmatpush1.bf16.msra.mxu0 0
    %2821 = vmatprep.subr.bf16.mxu0 0
    %2822 = vmatpush1.bf16.msra.mxu0 0
    %2823 = vmatprep.subr.bf16.mxu0 0
    %2824 = vmatpush1.bf16.msra.mxu0 0
    %2825 = vmatprep.subr.bf16.mxu0 0
    %2826 = vmatpush1.bf16.msra.mxu0 0
    %2827 = vmatprep.subr.bf16.mxu0 0
    %2828 = vmatpush1.bf16.msra.mxu0 0
    %2829 = vmatprep.subr.bf16.mxu0 0
    %2830 = vmatpush1.bf16.msra.mxu0 0
    %2831 = vmatprep.subr.bf16.mxu0 0
    %2832 = vmatpush1.bf16.msra.mxu0 0
    %2833 = vmatprep.subr.bf16.mxu0 0
    %2834 = vmatpush1.bf16.msra.mxu0 0
    %2835 = vmatprep.subr.bf16.mxu0 0
    %2836 = vmatpush1.bf16.msra.mxu0 0
    %2837 = vmatprep.subr.bf16.mxu0 0
    %2838 = vmatpush1.bf16.msra.mxu0 0
    %2839 = vmatprep.subr.bf16.mxu0 0
    %2840 = vmatpush1.bf16.msra.mxu0 0
    %2841 = vmatprep.subr.bf16.mxu0 0
    %2842 = vmatpush1.bf16.msra.mxu0 0
    %2843 = vmatprep.subr.bf16.mxu0 0
    %2844 = vmatpush1.bf16.msra.mxu0 0
    %2845 = vmatprep.subr.bf16.mxu0 0
    %2846 = vmatpush1.bf16.msra.mxu0 0
    %2847 = vmatprep.subr.bf16.mxu0 0
    %2848 = vmatpush1.bf16.msra.mxu0 0
    %2849 = vmatprep.mubr.bf16.mxu0 0
    %2850 = vmatmul.mubr.bf16.gmra.mrb[0].mxu0 %v2815
    %v2851 = vpop.f32.mrb[0].mxu0
    %v2852 = vadd.f32 0.0, %v2851
    %v2853 = vpop.f32.mrb[0].mxu0
    %v2854 = vpop.f32.mrb[0].mxu0
    %v2855 = vadd.f32 0.0, %v2854
    %v2856 = vpop.f32.mrb[0].mxu0
    %2857 = vdwg.mxu0
    %2858 = vrot.lane.b32.xlu0 %v2496, 80
    %v2859 = vpop.permute.xlu0 %2858
    %2860 = vrot.lane.b32.xlu0 %v2496, 16
    %v2861 = vpop.permute.xlu0 %2860
    %v2863 = vsel %vm330, %v2859, 0
    %v2866 = vsel %vm330, %v2861, 0
    %2868 = vmatprep.subr.bf16.mxu0 0
    %2869 = vmatpush1.bf16.xpose.msra.mxu0 %v2866
    %2870 = vmatprep.subr.bf16.mxu0 0
    %2871 = vmatpush1.bf16.xpose.msra.mxu0 0
    %2872 = vmatprep.subr.bf16.mxu0 0
    %2873 = vmatpush1.bf16.xpose.msra.mxu0 0
    %2874 = vmatprep.subr.bf16.mxu0 0
    %2875 = vmatpush1.bf16.xpose.msra.mxu0 0
    %2876 = vmatprep.subr.bf16.mxu0 0
    %2877 = vmatpush1.bf16.xpose.msra.mxu0 0
    %2878 = vmatprep.subr.bf16.mxu0 0
    %2879 = vmatpush1.bf16.xpose.msra.mxu0 0
    %2880 = vmatprep.subr.bf16.mxu0 0
    %2881 = vmatpush1.bf16.xpose.msra.mxu0 0
    %2882 = vmatprep.subr.bf16.mxu0 0
    %2883 = vmatpush1.bf16.xpose.msra.mxu0 0
    %2884 = vmatprep.subr.bf16.mxu0 0
    %2885 = vmatpush1.bf16.xpose.msra.mxu0 0
    %2886 = vmatprep.subr.bf16.mxu0 0
    %2887 = vmatpush1.bf16.xpose.msra.mxu0 0
    %2888 = vmatprep.subr.bf16.mxu0 0
    %2889 = vmatpush1.bf16.xpose.msra.mxu0 0
    %2890 = vmatprep.subr.bf16.mxu0 0
    %2891 = vmatpush1.bf16.xpose.msra.mxu0 0
    %2892 = vmatprep.subr.bf16.mxu0 0
    %2893 = vmatpush1.bf16.xpose.msra.mxu0 0
    %2894 = vmatprep.subr.bf16.mxu0 0
    %2895 = vmatpush1.bf16.xpose.msra.mxu0 0
    %2896 = vmatprep.subr.bf16.mxu0 0
    %2897 = vmatpush1.bf16.xpose.msra.mxu0 0
    %2898 = vmatprep.subr.bf16.mxu0 0
    %2899 = vmatpush1.bf16.xpose.msra.mxu0 0
    %2900 = vmatprep.mubr.bf16.mxu0 0
    %2901 = vmatmul.mubr.bf16.gmra.mrb[0].mxu0 %v2863
    %v2902 = vpop.f32.mrb[0].mxu0
    %v2903 = vadd.f32 %v182, %v2902
    %v2904 = vpop.f32.mrb[0].mxu0
    %v2905 = vpop.f32.mrb[0].mxu0
    %v2906 = vadd.f32 %v183, %v2905
    %v2907 = vpop.f32.mrb[0].mxu0
    %2908 = vdwg.mxu0
    %v2909 = vsel %vm330, %v2903, -inf
    %2910 = vmax.xlane.f32.xlu0 %v2909
    %v2911 = vpop.xlane.xlu0 %2910
    %v2912 = vsel %vm330, %v2906, -inf
    %2913 = vmax.xlane.f32.xlu0 %v2912
    %v2914 = vpop.xlane.xlu0 %2913
    %v2915 = vsub.f32 %v2903, %v2911
    %v2916 = vsub.f32 %v2906, %v2914
    %v2917 = vmul.f32 %v2915, 1.442695
    %v2918 = vpow.pop %v2917
    %v2919 = vmul.f32 %v2916, 1.442695
    %v2920 = vpow.pop %v2919
    %v2921 = vsel %vm330, %v2918, 0.0
    %2922 = vadd.xlane.f32.xlu0 %v2921
    %v2923 = vpop.xlane.xlu0 %2922
    %v2924 = vsel %vm330, %v2920, 0.0
    %2925 = vadd.xlane.f32.xlu0 %v2924
    %v2926 = vpop.xlane.xlu0 %2925
    %v2927 = vrcp.pop %v2923
    %v2928 = vrcp.pop %v2926
    %v2929 = vmul.f32 %v2918, %v2927
    %v2930 = vmul.f32 %v2920, %v2928
    %v2931 = vpack.c.bf16 %v2930, %v2929
    %2932 = vrot.lane.b32.xlu0 %v2497, 80
    %v2933 = vpop.permute.xlu0 %2932
    %v2936 = vsel %vm330, %v2931, 0
    %2938 = vmatprep.subr.bf16.mxu0 0
    %2939 = vmatpush1.bf16.msra.mxu0 %v2933
    %2940 = vmatprep.subr.bf16.mxu0 0
    %2941 = vmatpush1.bf16.msra.mxu0 0
    %2942 = vmatprep.subr.bf16.mxu0 0
    %2943 = vmatpush1.bf16.msra.mxu0 0
    %2944 = vmatprep.subr.bf16.mxu0 0
    %2945 = vmatpush1.bf16.msra.mxu0 0
    %2946 = vmatprep.subr.bf16.mxu0 0
    %2947 = vmatpush1.bf16.msra.mxu0 0
    %2948 = vmatprep.subr.bf16.mxu0 0
    %2949 = vmatpush1.bf16.msra.mxu0 0
    %2950 = vmatprep.subr.bf16.mxu0 0
    %2951 = vmatpush1.bf16.msra.mxu0 0
    %2952 = vmatprep.subr.bf16.mxu0 0
    %2953 = vmatpush1.bf16.msra.mxu0 0
    %2954 = vmatprep.subr.bf16.mxu0 0
    %2955 = vmatpush1.bf16.msra.mxu0 0
    %2956 = vmatprep.subr.bf16.mxu0 0
    %2957 = vmatpush1.bf16.msra.mxu0 0
    %2958 = vmatprep.subr.bf16.mxu0 0
    %2959 = vmatpush1.bf16.msra.mxu0 0
    %2960 = vmatprep.subr.bf16.mxu0 0
    %2961 = vmatpush1.bf16.msra.mxu0 0
    %2962 = vmatprep.subr.bf16.mxu0 0
    %2963 = vmatpush1.bf16.msra.mxu0 0
    %2964 = vmatprep.subr.bf16.mxu0 0
    %2965 = vmatpush1.bf16.msra.mxu0 0
    %2966 = vmatprep.subr.bf16.mxu0 0
    %2967 = vmatpush1.bf16.msra.mxu0 0
    %2968 = vmatprep.subr.bf16.mxu0 0
    %2969 = vmatpush1.bf16.msra.mxu0 0
    %2970 = vmatprep.mubr.bf16.mxu0 0
    %2971 = vmatmul.mubr.bf16.gmra.mrb[0].mxu0 %v2936
    %v2972 = vpop.f32.mrb[0].mxu0
    %v2973 = vadd.f32 0.0, %v2972
    %v2974 = vpop.f32.mrb[0].mxu0
    %v2975 = vpop.f32.mrb[0].mxu0
    %v2976 = vadd.f32 0.0, %v2975
    %v2977 = vpop.f32.mrb[0].mxu0
    %2978 = vdwg.mxu0
    %2981 = vrot.lane.b32.xlu0 %v2731, 16
    %v2982 = vpop.permute.xlu0 %2981
    %2983 = vrot.lane.b32.xlu0 %v2734, 16
    %v2984 = vpop.permute.xlu0 %2983
    %2989 = vrot.lane.b32.xlu0 %v2852, 32
    %v2990 = vpop.permute.xlu0 %2989
    %2991 = vrot.lane.b32.xlu0 %v2855, 32
    %v2992 = vpop.permute.xlu0 %2991
    %2997 = vrot.lane.b32.xlu0 %v2973, 48
    %v2998 = vpop.permute.xlu0 %2997
    %2999 = vrot.lane.b32.xlu0 %v2976, 48
    %v3000 = vpop.permute.xlu0 %2999
    %v3003 = vsel %vm330, %v2609, %v2982
    %v3004 = vsel %vm330, %v2612, %v2984
    %v3005 = vsel %vm835, %v3003, %v2990
    %v3006 = vsel %vm835, %v3004, %v2992
    %v3007 = vsel %vm838, %v3005, %v2998
    %v3008 = vsel %vm838, %v3006, %v3000
    %v3009 = vpack.c.bf16 %v3008, %v3007
    %s3010 = scalar_lea.vmem %s7, 64
    %v3011 = vld [vmem:[%s3010] sm:$0xf]
    %v3012 = vld [vmem:[%s3010 + $0x4] sm:$0xf]
    %v3013 = vld [vmem:[%s3010 + $0x8] sm:$0xf]
    %v3014 = vld [vmem:[%s3010 + $0xc] sm:$0xf]
    %v3015 = vld [vmem:[%s3010 + $0x10] sm:$0xf]
    %v3016 = vld [vmem:[%s3010 + $0x14] sm:$0xf]
    %v3017 = vld [vmem:[%s3010 + $0x18] sm:$0xf]
    %v3018 = vld [vmem:[%s3010 + $0x1c] sm:$0xf]
    %v3027 = vunpack.c.l.b16 %v3011
    %v3028 = vunpack.c.l.b16 %v3012
    %v3029 = vunpack.c.l.b16 %v3013
    %v3030 = vunpack.c.l.b16 %v3014
    %v3031 = vunpack.c.l.b16 %v3015
    %v3032 = vunpack.c.l.b16 %v3016
    %v3033 = vunpack.c.l.b16 %v3017
    %v3034 = vunpack.c.l.b16 %v3018
    %v3035 = vpack.c.b16 %v3028, %v3027
    %v3036 = vpack.c.b16 %v3030, %v3029
    %v3037 = vpack.c.b16 %v3032, %v3031
    %v3038 = vpack.c.b16 %v3034, %v3033
    %v3044 = vsel %vm186, %v3009, 0
    %3046 = vmatprep.subr.bf16.mxu0 0
    %3047 = vmatpush1.bf16.msra.mxu0 %v3035
    %3048 = vmatprep.subr.bf16.mxu0 0
    %3049 = vmatpush1.bf16.msra.mxu0 %v3036
    %3050 = vmatprep.subr.bf16.mxu0 0
    %3051 = vmatpush1.bf16.msra.mxu0 %v3037
    %3052 = vmatprep.subr.bf16.mxu0 0
    %3053 = vmatpush1.bf16.msra.mxu0 %v3038
    %3054 = vmatprep.subr.bf16.mxu0 0
    %3055 = vmatpush1.bf16.msra.mxu0 0
    %3056 = vmatprep.subr.bf16.mxu0 0
    %3057 = vmatpush1.bf16.msra.mxu0 0
    %3058 = vmatprep.subr.bf16.mxu0 0
    %3059 = vmatpush1.bf16.msra.mxu0 0
    %3060 = vmatprep.subr.bf16.mxu0 0
    %3061 = vmatpush1.bf16.msra.mxu0 0
    %3062 = vmatprep.subr.bf16.mxu0 0
    %3063 = vmatpush1.bf16.msra.mxu0 0
    %3064 = vmatprep.subr.bf16.mxu0 0
    %3065 = vmatpush1.bf16.msra.mxu0 0
    %3066 = vmatprep.subr.bf16.mxu0 0
    %3067 = vmatpush1.bf16.msra.mxu0 0
    %3068 = vmatprep.subr.bf16.mxu0 0
    %3069 = vmatpush1.bf16.msra.mxu0 0
    %3070 = vmatprep.subr.bf16.mxu0 0
    %3071 = vmatpush1.bf16.msra.mxu0 0
    %3072 = vmatprep.subr.bf16.mxu0 0
    %3073 = vmatpush1.bf16.msra.mxu0 0
    %3074 = vmatprep.subr.bf16.mxu0 0
    %3075 = vmatpush1.bf16.msra.mxu0 0
    %3076 = vmatprep.subr.bf16.mxu0 0
    %3077 = vmatpush1.bf16.msra.mxu0 0
    %3078 = vmatprep.mubr.bf16.mxu0 0
    %3079 = vmatmul.mubr.bf16.gmra.mrb[0].mxu0 %v3044
    %v3080 = vpop.f32.mrb[0].mxu0
    %v3081 = vadd.f32 0.0, %v3080
    %v3082 = vpop.f32.mrb[0].mxu0
    %v3083 = vpop.f32.mrb[0].mxu0
    %v3084 = vadd.f32 0.0, %v3083
    %v3085 = vpop.f32.mrb[0].mxu0
    %3086 = vdwg.mxu0
    %v3087 = vadd.f32 %v2352, %v3081
    %v3088 = vadd.f32 %v2353, %v3084
    %s3089 = scalar_lea.vmem %s8, 2
    %v3090 = vld [vmem:[%s3089] sm:$0x1]
    %v3092 = vlaneseq
    %v3093 = vshrl.u32 %v3092, 7
    %v3094 = vsub.s32 0, %v3093
    %v3095 = vrot.slane %v3090, %v3094
    %v3097 = vadd.f32 %v3087, %v3095
    %v3098 = vadd.f32 %v3088, %v3095
    %s3099 = scalar_lea.vmem %s9, 2
    %v3100 = vld [vmem:[%s3099] sm:$0x1]
    %s3101 = scalar_lea.vmem %s10, 2
    %v3102 = vld [vmem:[%s3101] sm:$0x1]
    %v3103 = vsel %vm186, %v3097, 0.0
    %3104 = vadd.xlane.f32.xlu0 %v3103
    %v3105 = vpop.xlane.xlu0 %3104
    %v3106 = vsel %vm186, %v3098, 0.0
    %3107 = vadd.xlane.f32.xlu0 %v3106
    %v3108 = vpop.xlane.xlu0 %3107
    %v3109 = vmul.f32 %v3105, %v193
    %v3110 = vmul.f32 %v3108, %v193
    %v3111 = vsub.f32 %v3097, %v3109
    %v3112 = vsub.f32 %v3098, %v3110
    %v3113 = vmul.f32 %v3111, %v3111
    %v3114 = vmul.f32 %v3112, %v3112
    %v3115 = vsel %vm186, %v3113, 0.0
    %3116 = vadd.xlane.f32.xlu0 %v3115
    %v3117 = vpop.xlane.xlu0 %3116
    %v3118 = vsel %vm186, %v3114, 0.0
    %3119 = vadd.xlane.f32.xlu0 %v3118
    %v3120 = vpop.xlane.xlu0 %3119
    %v3121 = vmul.f32 %v3117, %v193
    %v3122 = vmul.f32 %v3120, %v193
    %v3123 = vadd.f32 %v3121, 1e-05
    %v3124 = vadd.f32 %v3122, 1e-05
    %v3125 = vrsqrt.pop %v3123
    %v3126 = vrsqrt.pop %v3124
    %v3127 = vmul.f32 %v3111, %v3125
    %v3128 = vmul.f32 %v3112, %v3126
    %v3130 = vlaneseq
    %v3131 = vshrl.u32 %v3130, 7
    %v3132 = vsub.s32 0, %v3131
    %v3133 = vrot.slane %v3100, %v3132
    %v3135 = vmul.f32 %v3127, %v3133
    %v3136 = vmul.f32 %v3128, %v3133
    %v3138 = vlaneseq
    %v3139 = vshrl.u32 %v3138, 7
    %v3140 = vsub.s32 0, %v3139
    %v3141 = vrot.slane %v3102, %v3140
    %v3143 = vadd.f32 %v3135, %v3141
    %v3144 = vadd.f32 %v3136, %v3141
    %v3145 = vpack.c.bf16 %v3144, %v3143
    %s3146 = scalar_lea.vmem %s11, 128
    %v3147 = vld [vmem:[%s3146] sm:$0xff]
    %v3148 = vld [vmem:[%s3146 + $0x8] sm:$0xff]
    %v3149 = vld [vmem:[%s3146 + $0x10] sm:$0xff]
    %v3150 = vld [vmem:[%s3146 + $0x18] sm:$0xff]
    %v3151 = vld [vmem:[%s3146 + $0x20] sm:$0xff]
    %v3152 = vld [vmem:[%s3146 + $0x28] sm:$0xff]
    %v3153 = vld [vmem:[%s3146 + $0x30] sm:$0xff]
    %v3154 = vld [vmem:[%s3146 + $0x38] sm:$0xff]
    %s3155 = scalar_lea.vmem %s12, 4
    %v3156 = vld [vmem:[%s3155] sm:$0x3]
    %v3158 = vlaneseq
    %v3159 = vshrl.u32 %v3158, 7
    %v3160 = vsub.s32 0, %v3159
    %v3161 = vrot.slane %v3156, %v3160
    %v3162 = vlaneseq
    %v3163 = vshrl.u32 %v3162, 7
    %v3164 = vsub.s32 1, %v3163
    %v3165 = vrot.slane %v3156, %v3164
    %v3176 = vunpack.c.l.b16 %v3147
    %v3177 = vunpack.c.h.b16 %v3147
    %v3178 = vunpack.c.l.b16 %v3148
    %v3179 = vunpack.c.h.b16 %v3148
    %v3180 = vunpack.c.l.b16 %v3149
    %v3181 = vunpack.c.h.b16 %v3149
    %v3182 = vunpack.c.l.b16 %v3150
    %v3183 = vunpack.c.h.b16 %v3150
    %v3184 = vunpack.c.l.b16 %v3151
    %v3185 = vunpack.c.h.b16 %v3151
    %v3186 = vunpack.c.l.b16 %v3152
    %v3187 = vunpack.c.h.b16 %v3152
    %v3188 = vunpack.c.l.b16 %v3153
    %v3189 = vunpack.c.h.b16 %v3153
    %v3190 = vunpack.c.l.b16 %v3154
    %v3191 = vunpack.c.h.b16 %v3154
    %v3192 = vpack.c.b16 %v3178, %v3176
    %v3193 = vpack.c.b16 %v3179, %v3177
    %v3194 = vpack.c.b16 %v3182, %v3180
    %v3195 = vpack.c.b16 %v3183, %v3181
    %v3196 = vpack.c.b16 %v3186, %v3184
    %v3197 = vpack.c.b16 %v3187, %v3185
    %v3198 = vpack.c.b16 %v3190, %v3188
    %v3199 = vpack.c.b16 %v3191, %v3189
    %v3209 = vsel %vm186, %v3145, 0
    %3211 = vmatprep.subr.bf16.mxu0 %v3193
    %3212 = vmatpush1.bf16.msra.mxu0 %v3192
    %3213 = vmatprep.subr.bf16.mxu0 %v3195
    %3214 = vmatpush1.bf16.msra.mxu0 %v3194
    %3215 = vmatprep.subr.bf16.mxu0 %v3197
    %3216 = vmatpush1.bf16.msra.mxu0 %v3196
    %3217 = vmatprep.subr.bf16.mxu0 %v3199
    %3218 = vmatpush1.bf16.msra.mxu0 %v3198
    %3219 = vmatprep.subr.bf16.mxu0 0
    %3220 = vmatpush1.bf16.msra.mxu0 0
    %3221 = vmatprep.subr.bf16.mxu0 0
    %3222 = vmatpush1.bf16.msra.mxu0 0
    %3223 = vmatprep.subr.bf16.mxu0 0
    %3224 = vmatpush1.bf16.msra.mxu0 0
    %3225 = vmatprep.subr.bf16.mxu0 0
    %3226 = vmatpush1.bf16.msra.mxu0 0
    %3227 = vmatprep.subr.bf16.mxu0 0
    %3228 = vmatpush1.bf16.msra.mxu0 0
    %3229 = vmatprep.subr.bf16.mxu0 0
    %3230 = vmatpush1.bf16.msra.mxu0 0
    %3231 = vmatprep.subr.bf16.mxu0 0
    %3232 = vmatpush1.bf16.msra.mxu0 0
    %3233 = vmatprep.subr.bf16.mxu0 0
    %3234 = vmatpush1.bf16.msra.mxu0 0
    %3235 = vmatprep.subr.bf16.mxu0 0
    %3236 = vmatpush1.bf16.msra.mxu0 0
    %3237 = vmatprep.subr.bf16.mxu0 0
    %3238 = vmatpush1.bf16.msra.mxu0 0
    %3239 = vmatprep.subr.bf16.mxu0 0
    %3240 = vmatpush1.bf16.msra.mxu0 0
    %3241 = vmatprep.subr.bf16.mxu0 0
    %3242 = vmatpush1.bf16.msra.mxu0 0
    %3243 = vmatprep.mubr.bf16.mxu0 0
    %3244 = vmatmul.mubr.bf16.gmra.mrb[0].mxu0 %v3209
    %v3245 = vpop.f32.mrb[0].mxu0
    %v3246 = vadd.f32 %v3161, %v3245
    %v3247 = vpop.f32.mrb[0].mxu0
    %v3248 = vadd.f32 %v3165, %v3247
    %v3249 = vpop.f32.mrb[0].mxu0
    %v3250 = vadd.f32 %v3161, %v3249
    %v3251 = vpop.f32.mrb[0].mxu0
    %v3252 = vadd.f32 %v3165, %v3251
    %3253 = vdwg.mxu0
    %v3254 = vmax.f32 %v3246, 0.0
    %v3255 = vmax.f32 %v3248, 0.0
    %v3256 = vmax.f32 %v3250, 0.0
    %v3257 = vmax.f32 %v3252, 0.0
    %v3258 = vpack.c.bf16 %v3256, %v3254
    %v3259 = vpack.c.bf16 %v3257, %v3255
    %s3260 = scalar_lea.vmem %s13, 256
    %v3261 = vld [vmem:[%s3260] sm:$0xf]
    %v3262 = vld [vmem:[%s3260 + $0x4] sm:$0xf]
    %v3263 = vld [vmem:[%s3260 + $0x8] sm:$0xf]
    %v3264 = vld [vmem:[%s3260 + $0xc] sm:$0xf]
    %v3265 = vld [vmem:[%s3260 + $0x10] sm:$0xf]
    %v3266 = vld [vmem:[%s3260 + $0x14] sm:$0xf]
    %v3267 = vld [vmem:[%s3260 + $0x18] sm:$0xf]
    %v3268 = vld [vmem:[%s3260 + $0x1c] sm:$0xf]
    %v3269 = vld [vmem:[%s3260 + $0x20] sm:$0xf]
    %v3270 = vld [vmem:[%s3260 + $0x24] sm:$0xf]
    %v3271 = vld [vmem:[%s3260 + $0x28] sm:$0xf]
    %v3272 = vld [vmem:[%s3260 + $0x2c] sm:$0xf]
    %v3273 = vld [vmem:[%s3260 + $0x30] sm:$0xf]
    %v3274 = vld [vmem:[%s3260 + $0x34] sm:$0xf]
    %v3275 = vld [vmem:[%s3260 + $0x38] sm:$0xf]
    %v3276 = vld [vmem:[%s3260 + $0x3c] sm:$0xf]
    %v3277 = vld [vmem:[%s3260 + $0x40] sm:$0xf]
    %v3278 = vld [vmem:[%s3260 + $0x44] sm:$0xf]
    %v3279 = vld [vmem:[%s3260 + $0x48] sm:$0xf]
    %v3280 = vld [vmem:[%s3260 + $0x4c] sm:$0xf]
    %v3281 = vld [vmem:[%s3260 + $0x50] sm:$0xf]
    %v3282 = vld [vmem:[%s3260 + $0x54] sm:$0xf]
    %v3283 = vld [vmem:[%s3260 + $0x58] sm:$0xf]
    %v3284 = vld [vmem:[%s3260 + $0x5c] sm:$0xf]
    %v3285 = vld [vmem:[%s3260 + $0x60] sm:$0xf]
    %v3286 = vld [vmem:[%s3260 + $0x64] sm:$0xf]
    %v3287 = vld [vmem:[%s3260 + $0x68] sm:$0xf]
    %v3288 = vld [vmem:[%s3260 + $0x6c] sm:$0xf]
    %v3289 = vld [vmem:[%s3260 + $0x70] sm:$0xf]
    %v3290 = vld [vmem:[%s3260 + $0x74] sm:$0xf]
    %v3291 = vld [vmem:[%s3260 + $0x78] sm:$0xf]
    %v3292 = vld [vmem:[%s3260 + $0x7c] sm:$0xf]
    %v3325 = vunpack.c.l.b16 %v3261
    %v3326 = vunpack.c.l.b16 %v3262
    %v3327 = vunpack.c.l.b16 %v3263
    %v3328 = vunpack.c.l.b16 %v3264
    %v3329 = vunpack.c.l.b16 %v3265
    %v3330 = vunpack.c.l.b16 %v3266
    %v3331 = vunpack.c.l.b16 %v3267
    %v3332 = vunpack.c.l.b16 %v3268
    %v3333 = vunpack.c.l.b16 %v3269
    %v3334 = vunpack.c.l.b16 %v3270
    %v3335 = vunpack.c.l.b16 %v3271
    %v3336 = vunpack.c.l.b16 %v3272
    %v3337 = vunpack.c.l.b16 %v3273
    %v3338 = vunpack.c.l.b16 %v3274
    %v3339 = vunpack.c.l.b16 %v3275
    %v3340 = vunpack.c.l.b16 %v3276
    %v3341 = vunpack.c.l.b16 %v3277
    %v3342 = vunpack.c.l.b16 %v3278
    %v3343 = vunpack.c.l.b16 %v3279
    %v3344 = vunpack.c.l.b16 %v3280
    %v3345 = vunpack.c.l.b16 %v3281
    %v3346 = vunpack.c.l.b16 %v3282
    %v3347 = vunpack.c.l.b16 %v3283
    %v3348 = vunpack.c.l.b16 %v3284
    %v3349 = vunpack.c.l.b16 %v3285
    %v3350 = vunpack.c.l.b16 %v3286
    %v3351 = vunpack.c.l.b16 %v3287
    %v3352 = vunpack.c.l.b16 %v3288
    %v3353 = vunpack.c.l.b16 %v3289
    %v3354 = vunpack.c.l.b16 %v3290
    %v3355 = vunpack.c.l.b16 %v3291
    %v3356 = vunpack.c.l.b16 %v3292
    %v3357 = vpack.c.b16 %v3326, %v3325
    %v3358 = vpack.c.b16 %v3328, %v3327
    %v3359 = vpack.c.b16 %v3330, %v3329
    %v3360 = vpack.c.b16 %v3332, %v3331
    %v3361 = vpack.c.b16 %v3334, %v3333
    %v3362 = vpack.c.b16 %v3336, %v3335
    %v3363 = vpack.c.b16 %v3338, %v3337
    %v3364 = vpack.c.b16 %v3340, %v3339
    %v3365 = vpack.c.b16 %v3342, %v3341
    %v3366 = vpack.c.b16 %v3344, %v3343
    %v3367 = vpack.c.b16 %v3346, %v3345
    %v3368 = vpack.c.b16 %v3348, %v3347
    %v3369 = vpack.c.b16 %v3350, %v3349
    %v3370 = vpack.c.b16 %v3352, %v3351
    %v3371 = vpack.c.b16 %v3354, %v3353
    %v3372 = vpack.c.b16 %v3356, %v3355
    %3389 = vmatprep.subr.bf16.mxu0 0
    %3390 = vmatpush1.bf16.msra.mxu0 %v3357
    %3391 = vmatprep.subr.bf16.mxu0 0
    %3392 = vmatpush1.bf16.msra.mxu0 %v3358
    %3393 = vmatprep.subr.bf16.mxu0 0
    %3394 = vmatpush1.bf16.msra.mxu0 %v3359
    %3395 = vmatprep.subr.bf16.mxu0 0
    %3396 = vmatpush1.bf16.msra.mxu0 %v3360
    %3397 = vmatprep.subr.bf16.mxu0 0
    %3398 = vmatpush1.bf16.msra.mxu0 %v3361
    %3399 = vmatprep.subr.bf16.mxu0 0
    %3400 = vmatpush1.bf16.msra.mxu0 %v3362
    %3401 = vmatprep.subr.bf16.mxu0 0
    %3402 = vmatpush1.bf16.msra.mxu0 %v3363
    %3403 = vmatprep.subr.bf16.mxu0 0
    %3404 = vmatpush1.bf16.msra.mxu0 %v3364
    %3405 = vmatprep.subr.bf16.mxu0 0
    %3406 = vmatpush1.bf16.msra.mxu0 %v3365
    %3407 = vmatprep.subr.bf16.mxu0 0
    %3408 = vmatpush1.bf16.msra.mxu0 %v3366
    %3409 = vmatprep.subr.bf16.mxu0 0
    %3410 = vmatpush1.bf16.msra.mxu0 %v3367
    %3411 = vmatprep.subr.bf16.mxu0 0
    %3412 = vmatpush1.bf16.msra.mxu0 %v3368
    %3413 = vmatprep.subr.bf16.mxu0 0
    %3414 = vmatpush1.bf16.msra.mxu0 %v3369
    %3415 = vmatprep.subr.bf16.mxu0 0
    %3416 = vmatpush1.bf16.msra.mxu0 %v3370
    %3417 = vmatprep.subr.bf16.mxu0 0
    %3418 = vmatpush1.bf16.msra.mxu0 %v3371
    %3419 = vmatprep.subr.bf16.mxu0 0
    %3420 = vmatpush1.bf16.msra.mxu0 %v3372
    %3421 = vmatprep.mubr.bf16.mxu0 %v3259
    %3422 = vmatmul.mubr.bf16.gmra.mrb[0].mxu0 %v3258
    %v3423 = vpop.f32.mrb[0].mxu0
    %v3424 = vadd.f32 0.0, %v3423
    %v3425 = vpop.f32.mrb[0].mxu0
    %v3426 = vpop.f32.mrb[0].mxu0
    %v3427 = vadd.f32 0.0, %v3426
    %v3428 = vpop.f32.mrb[0].mxu0
    %3429 = vdwg.mxu0
    %v3430 = vadd.f32 %v3097, %v3424
    %v3431 = vadd.f32 %v3098, %v3427
    %s3432 = scalar_lea.vmem %s14, 2
    %v3433 = vld [vmem:[%s3432] sm:$0x1]
    %v3435 = vlaneseq
    %v3436 = vshrl.u32 %v3435, 7
    %v3437 = vsub.s32 0, %v3436
    %v3438 = vrot.slane %v3433, %v3437
    %v3440 = vadd.f32 %v3430, %v3438
    %v3441 = vadd.f32 %v3431, %v3438
    %s3442 = scalar_lea.vmem %s4, 3
    %v3443 = vld [vmem:[%s3442] sm:$0x1]
    %s3444 = scalar_lea.vmem %s5, 3
    %v3445 = vld [vmem:[%s3444] sm:$0x1]
    %v3446 = vsel %vm186, %v3440, 0.0
    %3447 = vadd.xlane.f32.xlu0 %v3446
    %v3448 = vpop.xlane.xlu0 %3447
    %v3449 = vsel %vm186, %v3441, 0.0
    %3450 = vadd.xlane.f32.xlu0 %v3449
    %v3451 = vpop.xlane.xlu0 %3450
    %v3452 = vmul.f32 %v3448, %v193
    %v3453 = vmul.f32 %v3451, %v193
    %v3454 = vsub.f32 %v3440, %v3452
    %v3455 = vsub.f32 %v3441, %v3453
    %v3456 = vmul.f32 %v3454, %v3454
    %v3457 = vmul.f32 %v3455, %v3455
    %v3458 = vsel %vm186, %v3456, 0.0
    %3459 = vadd.xlane.f32.xlu0 %v3458
    %v3460 = vpop.xlane.xlu0 %3459
    %v3461 = vsel %vm186, %v3457, 0.0
    %3462 = vadd.xlane.f32.xlu0 %v3461
    %v3463 = vpop.xlane.xlu0 %3462
    %v3464 = vmul.f32 %v3460, %v193
    %v3465 = vmul.f32 %v3463, %v193
    %v3466 = vadd.f32 %v3464, 1e-05
    %v3467 = vadd.f32 %v3465, 1e-05
    %v3468 = vrsqrt.pop %v3466
    %v3469 = vrsqrt.pop %v3467
    %v3470 = vmul.f32 %v3454, %v3468
    %v3471 = vmul.f32 %v3455, %v3469
    %v3473 = vlaneseq
    %v3474 = vshrl.u32 %v3473, 7
    %v3475 = vsub.s32 0, %v3474
    %v3476 = vrot.slane %v3443, %v3475
    %v3478 = vmul.f32 %v3470, %v3476
    %v3479 = vmul.f32 %v3471, %v3476
    %v3481 = vlaneseq
    %v3482 = vshrl.u32 %v3481, 7
    %v3483 = vsub.s32 0, %v3482
    %v3484 = vrot.slane %v3445, %v3483
    %v3486 = vadd.f32 %v3478, %v3484
    %v3487 = vadd.f32 %v3479, %v3484
    %v3488 = vpack.c.bf16 %v3487, %v3486
    %s3489 = scalar_lea.vmem %s6, 192
    %v3490 = vld [vmem:[%s3489] sm:$0xff]
    %v3491 = vld [vmem:[%s3489 + $0x8] sm:$0xff]
    %v3492 = vld [vmem:[%s3489 + $0x10] sm:$0xff]
    %v3493 = vld [vmem:[%s3489 + $0x18] sm:$0xff]
    %v3494 = vld [vmem:[%s3489 + $0x20] sm:$0xff]
    %v3495 = vld [vmem:[%s3489 + $0x28] sm:$0xff]
    %v3496 = vld [vmem:[%s3489 + $0x30] sm:$0xff]
    %v3497 = vld [vmem:[%s3489 + $0x38] sm:$0xff]
    %v3506 = vunpack.c.l.b16 %v3490
    %v3507 = vunpack.c.h.b16 %v3490
    %v3508 = vunpack.c.l.b16 %v3491
    %v3509 = vunpack.c.h.b16 %v3491
    %v3510 = vunpack.c.l.b16 %v3492
    %v3511 = vunpack.c.h.b16 %v3492
    %v3512 = vunpack.c.l.b16 %v3493
    %v3513 = vunpack.c.h.b16 %v3493
    %v3514 = vunpack.c.l.b16 %v3494
    %v3515 = vunpack.c.h.b16 %v3494
    %v3516 = vunpack.c.l.b16 %v3495
    %v3517 = vunpack.c.h.b16 %v3495
    %v3518 = vunpack.c.l.b16 %v3496
    %v3519 = vunpack.c.h.b16 %v3496
    %v3520 = vunpack.c.l.b16 %v3497
    %v3521 = vunpack.c.h.b16 %v3497
    %v3522 = vpack.c.b16 %v3508, %v3506
    %v3523 = vpack.c.b16 %v3509, %v3507
    %v3524 = vpack.c.b16 %v3512, %v3510
    %v3525 = vpack.c.b16 %v3513, %v3511
    %v3526 = vpack.c.b16 %v3516, %v3514
    %v3527 = vpack.c.b16 %v3517, %v3515
    %v3528 = vpack.c.b16 %v3520, %v3518
    %v3529 = vpack.c.b16 %v3521, %v3519
    %v3539 = vsel %vm186, %v3488, 0
    %3541 = vmatprep.subr.bf16.mxu0 %v3523
    %3542 = vmatpush1.bf16.msra.mxu0 %v3522
    %3543 = vmatprep.subr.bf16.mxu0 %v3525
    %3544 = vmatpush1.bf16.msra.mxu0 %v3524
    %3545 = vmatprep.subr.bf16.mxu0 %v3527
    %3546 = vmatpush1.bf16.msra.mxu0 %v3526
    %3547 = vmatprep.subr.bf16.mxu0 %v3529
    %3548 = vmatpush1.bf16.msra.mxu0 %v3528
    %3549 = vmatprep.subr.bf16.mxu0 0
    %3550 = vmatpush1.bf16.msra.mxu0 0
    %3551 = vmatprep.subr.bf16.mxu0 0
    %3552 = vmatpush1.bf16.msra.mxu0 0
    %3553 = vmatprep.subr.bf16.mxu0 0
    %3554 = vmatpush1.bf16.msra.mxu0 0
    %3555 = vmatprep.subr.bf16.mxu0 0
    %3556 = vmatpush1.bf16.msra.mxu0 0
    %3557 = vmatprep.subr.bf16.mxu0 0
    %3558 = vmatpush1.bf16.msra.mxu0 0
    %3559 = vmatprep.subr.bf16.mxu0 0
    %3560 = vmatpush1.bf16.msra.mxu0 0
    %3561 = vmatprep.subr.bf16.mxu0 0
    %3562 = vmatpush1.bf16.msra.mxu0 0
    %3563 = vmatprep.subr.bf16.mxu0 0
    %3564 = vmatpush1.bf16.msra.mxu0 0
    %3565 = vmatprep.subr.bf16.mxu0 0
    %3566 = vmatpush1.bf16.msra.mxu0 0
    %3567 = vmatprep.subr.bf16.mxu0 0
    %3568 = vmatpush1.bf16.msra.mxu0 0
    %3569 = vmatprep.subr.bf16.mxu0 0
    %3570 = vmatpush1.bf16.msra.mxu0 0
    %3571 = vmatprep.subr.bf16.mxu0 0
    %3572 = vmatpush1.bf16.msra.mxu0 0
    %3573 = vmatprep.mubr.bf16.mxu0 0
    %3574 = vmatmul.mubr.bf16.gmra.mrb[0].mxu0 %v3539
    %v3575 = vpop.f32.mrb[0].mxu0
    %v3576 = vadd.f32 0.0, %v3575
    %v3577 = vpop.f32.mrb[0].mxu0
    %v3578 = vadd.f32 0.0, %v3577
    %v3579 = vpop.f32.mrb[0].mxu0
    %v3580 = vadd.f32 0.0, %v3579
    %v3581 = vpop.f32.mrb[0].mxu0
    %v3582 = vadd.f32 0.0, %v3581
    %3583 = vdwg.mxu0
    %v3584 = vpack.c.bf16 %v3580, %v3576
    %v3585 = vpack.c.bf16 %v3582, %v3578
    %3587 = vrot.lane.b32.xlu0 %v3584, 64
    %v3588 = vpop.permute.xlu0 %3587
    %v3590 = vsel %vm330, %v3584, 0
    %v3593 = vsel %vm330, %v3588, 0
    %3595 = vmatprep.subr.bf16.mxu0 0
    %3596 = vmatpush1.bf16.xpose.msra.mxu0 %v3593
    %3597 = vmatprep.subr.bf16.mxu0 0
    %3598 = vmatpush1.bf16.xpose.msra.mxu0 0
    %3599 = vmatprep.subr.bf16.mxu0 0
    %3600 = vmatpush1.bf16.xpose.msra.mxu0 0
    %3601 = vmatprep.subr.bf16.mxu0 0
    %3602 = vmatpush1.bf16.xpose.msra.mxu0 0
    %3603 = vmatprep.subr.bf16.mxu0 0
    %3604 = vmatpush1.bf16.xpose.msra.mxu0 0
    %3605 = vmatprep.subr.bf16.mxu0 0
    %3606 = vmatpush1.bf16.xpose.msra.mxu0 0
    %3607 = vmatprep.subr.bf16.mxu0 0
    %3608 = vmatpush1.bf16.xpose.msra.mxu0 0
    %3609 = vmatprep.subr.bf16.mxu0 0
    %3610 = vmatpush1.bf16.xpose.msra.mxu0 0
    %3611 = vmatprep.subr.bf16.mxu0 0
    %3612 = vmatpush1.bf16.xpose.msra.mxu0 0
    %3613 = vmatprep.subr.bf16.mxu0 0
    %3614 = vmatpush1.bf16.xpose.msra.mxu0 0
    %3615 = vmatprep.subr.bf16.mxu0 0
    %3616 = vmatpush1.bf16.xpose.msra.mxu0 0
    %3617 = vmatprep.subr.bf16.mxu0 0
    %3618 = vmatpush1.bf16.xpose.msra.mxu0 0
    %3619 = vmatprep.subr.bf16.mxu0 0
    %3620 = vmatpush1.bf16.xpose.msra.mxu0 0
    %3621 = vmatprep.subr.bf16.mxu0 0
    %3622 = vmatpush1.bf16.xpose.msra.mxu0 0
    %3623 = vmatprep.subr.bf16.mxu0 0
    %3624 = vmatpush1.bf16.xpose.msra.mxu0 0
    %3625 = vmatprep.subr.bf16.mxu0 0
    %3626 = vmatpush1.bf16.xpose.msra.mxu0 0
    %3627 = vmatprep.mubr.bf16.mxu0 0
    %3628 = vmatmul.mubr.bf16.gmra.mrb[0].mxu0 %v3590
    %v3629 = vpop.f32.mrb[0].mxu0
    %v3630 = vadd.f32 %v182, %v3629
    %v3631 = vpop.f32.mrb[0].mxu0
    %v3632 = vpop.f32.mrb[0].mxu0
    %v3633 = vadd.f32 %v183, %v3632
    %v3634 = vpop.f32.mrb[0].mxu0
    %3635 = vdwg.mxu0
    %v3636 = vsel %vm330, %v3630, -inf
    %3637 = vmax.xlane.f32.xlu0 %v3636
    %v3638 = vpop.xlane.xlu0 %3637
    %v3639 = vsel %vm330, %v3633, -inf
    %3640 = vmax.xlane.f32.xlu0 %v3639
    %v3641 = vpop.xlane.xlu0 %3640
    %v3642 = vsub.f32 %v3630, %v3638
    %v3643 = vsub.f32 %v3633, %v3641
    %v3644 = vmul.f32 %v3642, 1.442695
    %v3645 = vpow.pop %v3644
    %v3646 = vmul.f32 %v3643, 1.442695
    %v3647 = vpow.pop %v3646
    %v3648 = vsel %vm330, %v3645, 0.0
    %3649 = vadd.xlane.f32.xlu0 %v3648
    %v3650 = vpop.xlane.xlu0 %3649
    %v3651 = vsel %vm330, %v3647, 0.0
    %3652 = vadd.xlane.f32.xlu0 %v3651
    %v3653 = vpop.xlane.xlu0 %3652
    %v3654 = vrcp.pop %v3650
    %v3655 = vrcp.pop %v3653
    %v3656 = vmul.f32 %v3645, %v3654
    %v3657 = vmul.f32 %v3647, %v3655
    %v3658 = vpack.c.bf16 %v3657, %v3656
    %v3660 = vsel %vm330, %v3658, 0
    %3662 = vmatprep.subr.bf16.mxu0 0
    %3663 = vmatpush1.bf16.msra.mxu0 %v3585
    %3664 = vmatprep.subr.bf16.mxu0 0
    %3665 = vmatpush1.bf16.msra.mxu0 0
    %3666 = vmatprep.subr.bf16.mxu0 0
    %3667 = vmatpush1.bf16.msra.mxu0 0
    %3668 = vmatprep.subr.bf16.mxu0 0
    %3669 = vmatpush1.bf16.msra.mxu0 0
    %3670 = vmatprep.subr.bf16.mxu0 0
    %3671 = vmatpush1.bf16.msra.mxu0 0
    %3672 = vmatprep.subr.bf16.mxu0 0
    %3673 = vmatpush1.bf16.msra.mxu0 0
    %3674 = vmatprep.subr.bf16.mxu0 0
    %3675 = vmatpush1.bf16.msra.mxu0 0
    %3676 = vmatprep.subr.bf16.mxu0 0
    %3677 = vmatpush1.bf16.msra.mxu0 0
    %3678 = vmatprep.subr.bf16.mxu0 0
    %3679 = vmatpush1.bf16.msra.mxu0 0
    %3680 = vmatprep.subr.bf16.mxu0 0
    %3681 = vmatpush1.bf16.msra.mxu0 0
    %3682 = vmatprep.subr.bf16.mxu0 0
    %3683 = vmatpush1.bf16.msra.mxu0 0
    %3684 = vmatprep.subr.bf16.mxu0 0
    %3685 = vmatpush1.bf16.msra.mxu0 0
    %3686 = vmatprep.subr.bf16.mxu0 0
    %3687 = vmatpush1.bf16.msra.mxu0 0
    %3688 = vmatprep.subr.bf16.mxu0 0
    %3689 = vmatpush1.bf16.msra.mxu0 0
    %3690 = vmatprep.subr.bf16.mxu0 0
    %3691 = vmatpush1.bf16.msra.mxu0 0
    %3692 = vmatprep.subr.bf16.mxu0 0
    %3693 = vmatpush1.bf16.msra.mxu0 0
    %3694 = vmatprep.mubr.bf16.mxu0 0
    %3695 = vmatmul.mubr.bf16.gmra.mrb[0].mxu0 %v3660
    %v3696 = vpop.f32.mrb[0].mxu0
    %v3697 = vadd.f32 0.0, %v3696
    %v3698 = vpop.f32.mrb[0].mxu0
    %v3699 = vpop.f32.mrb[0].mxu0
    %v3700 = vadd.f32 0.0, %v3699
    %v3701 = vpop.f32.mrb[0].mxu0
    %3702 = vdwg.mxu0
    %3703 = vrot.lane.b32.xlu0 %v3584, 112
    %v3704 = vpop.permute.xlu0 %3703
    %3705 = vrot.lane.b32.xlu0 %v3584, 48
    %v3706 = vpop.permute.xlu0 %3705
    %v3708 = vsel %vm330, %v3704, 0
    %v3711 = vsel %vm330, %v3706, 0
    %3713 = vmatprep.subr.bf16.mxu0 0
    %3714 = vmatpush1.bf16.xpose.msra.mxu0 %v3711
    %3715 = vmatprep.subr.bf16.mxu0 0
    %3716 = vmatpush1.bf16.xpose.msra.mxu0 0
    %3717 = vmatprep.subr.bf16.mxu0 0
    %3718 = vmatpush1.bf16.xpose.msra.mxu0 0
    %3719 = vmatprep.subr.bf16.mxu0 0
    %3720 = vmatpush1.bf16.xpose.msra.mxu0 0
    %3721 = vmatprep.subr.bf16.mxu0 0
    %3722 = vmatpush1.bf16.xpose.msra.mxu0 0
    %3723 = vmatprep.subr.bf16.mxu0 0
    %3724 = vmatpush1.bf16.xpose.msra.mxu0 0
    %3725 = vmatprep.subr.bf16.mxu0 0
    %3726 = vmatpush1.bf16.xpose.msra.mxu0 0
    %3727 = vmatprep.subr.bf16.mxu0 0
    %3728 = vmatpush1.bf16.xpose.msra.mxu0 0
    %3729 = vmatprep.subr.bf16.mxu0 0
    %3730 = vmatpush1.bf16.xpose.msra.mxu0 0
    %3731 = vmatprep.subr.bf16.mxu0 0
    %3732 = vmatpush1.bf16.xpose.msra.mxu0 0
    %3733 = vmatprep.subr.bf16.mxu0 0
    %3734 = vmatpush1.bf16.xpose.msra.mxu0 0
    %3735 = vmatprep.subr.bf16.mxu0 0
    %3736 = vmatpush1.bf16.xpose.msra.mxu0 0
    %3737 = vmatprep.subr.bf16.mxu0 0
    %3738 = vmatpush1.bf16.xpose.msra.mxu0 0
    %3739 = vmatprep.subr.bf16.mxu0 0
    %3740 = vmatpush1.bf16.xpose.msra.mxu0 0
    %3741 = vmatprep.subr.bf16.mxu0 0
    %3742 = vmatpush1.bf16.xpose.msra.mxu0 0
    %3743 = vmatprep.subr.bf16.mxu0 0
    %3744 = vmatpush1.bf16.xpose.msra.mxu0 0
    %3745 = vmatprep.mubr.bf16.mxu0 0
    %3746 = vmatmul.mubr.bf16.gmra.mrb[0].mxu0 %v3708
    %v3747 = vpop.f32.mrb[0].mxu0
    %v3748 = vadd.f32 %v182, %v3747
    %v3749 = vpop.f32.mrb[0].mxu0
    %v3750 = vpop.f32.mrb[0].mxu0
    %v3751 = vadd.f32 %v183, %v3750
    %v3752 = vpop.f32.mrb[0].mxu0
    %3753 = vdwg.mxu0
    %v3754 = vsel %vm330, %v3748, -inf
    %3755 = vmax.xlane.f32.xlu0 %v3754
    %v3756 = vpop.xlane.xlu0 %3755
    %v3757 = vsel %vm330, %v3751, -inf
    %3758 = vmax.xlane.f32.xlu0 %v3757
    %v3759 = vpop.xlane.xlu0 %3758
    %v3760 = vsub.f32 %v3748, %v3756
    %v3761 = vsub.f32 %v3751, %v3759
    %v3762 = vmul.f32 %v3760, 1.442695
    %v3763 = vpow.pop %v3762
    %v3764 = vmul.f32 %v3761, 1.442695
    %v3765 = vpow.pop %v3764
    %v3766 = vsel %vm330, %v3763, 0.0
    %3767 = vadd.xlane.f32.xlu0 %v3766
    %v3768 = vpop.xlane.xlu0 %3767
    %v3769 = vsel %vm330, %v3765, 0.0
    %3770 = vadd.xlane.f32.xlu0 %v3769
    %v3771 = vpop.xlane.xlu0 %3770
    %v3772 = vrcp.pop %v3768
    %v3773 = vrcp.pop %v3771
    %v3774 = vmul.f32 %v3763, %v3772
    %v3775 = vmul.f32 %v3765, %v3773
    %v3776 = vpack.c.bf16 %v3775, %v3774
    %3778 = vrot.lane.b32.xlu0 %v3585, 112
    %v3779 = vpop.permute.xlu0 %3778
    %v3782 = vsel %vm330, %v3776, 0
    %3784 = vmatprep.subr.bf16.mxu0 0
    %3785 = vmatpush1.bf16.msra.mxu0 %v3779
    %3786 = vmatprep.subr.bf16.mxu0 0
    %3787 = vmatpush1.bf16.msra.mxu0 0
    %3788 = vmatprep.subr.bf16.mxu0 0
    %3789 = vmatpush1.bf16.msra.mxu0 0
    %3790 = vmatprep.subr.bf16.mxu0 0
    %3791 = vmatpush1.bf16.msra.mxu0 0
    %3792 = vmatprep.subr.bf16.mxu0 0
    %3793 = vmatpush1.bf16.msra.mxu0 0
    %3794 = vmatprep.subr.bf16.mxu0 0
    %3795 = vmatpush1.bf16.msra.mxu0 0
    %3796 = vmatprep.subr.bf16.mxu0 0
    %3797 = vmatpush1.bf16.msra.mxu0 0
    %3798 = vmatprep.subr.bf16.mxu0 0
    %3799 = vmatpush1.bf16.msra.mxu0 0
    %3800 = vmatprep.subr.bf16.mxu0 0
    %3801 = vmatpush1.bf16.msra.mxu0 0
    %3802 = vmatprep.subr.bf16.mxu0 0
    %3803 = vmatpush1.bf16.msra.mxu0 0
    %3804 = vmatprep.subr.bf16.mxu0 0
    %3805 = vmatpush1.bf16.msra.mxu0 0
    %3806 = vmatprep.subr.bf16.mxu0 0
    %3807 = vmatpush1.bf16.msra.mxu0 0
    %3808 = vmatprep.subr.bf16.mxu0 0
    %3809 = vmatpush1.bf16.msra.mxu0 0
    %3810 = vmatprep.subr.bf16.mxu0 0
    %3811 = vmatpush1.bf16.msra.mxu0 0
    %3812 = vmatprep.subr.bf16.mxu0 0
    %3813 = vmatpush1.bf16.msra.mxu0 0
    %3814 = vmatprep.subr.bf16.mxu0 0
    %3815 = vmatpush1.bf16.msra.mxu0 0
    %3816 = vmatprep.mubr.bf16.mxu0 0
    %3817 = vmatmul.mubr.bf16.gmra.mrb[0].mxu0 %v3782
    %v3818 = vpop.f32.mrb[0].mxu0
    %v3819 = vadd.f32 0.0, %v3818
    %v3820 = vpop.f32.mrb[0].mxu0
    %v3821 = vpop.f32.mrb[0].mxu0
    %v3822 = vadd.f32 0.0, %v3821
    %v3823 = vpop.f32.mrb[0].mxu0
    %3824 = vdwg.mxu0
    %3825 = vrot.lane.b32.xlu0 %v3584, 96
    %v3826 = vpop.permute.xlu0 %3825
    %3827 = vrot.lane.b32.xlu0 %v3584, 32
    %v3828 = vpop.permute.xlu0 %3827
    %v3830 = vsel %vm330, %v3826, 0
    %v3833 = vsel %vm330, %v3828, 0
    %3835 = vmatprep.subr.bf16.mxu0 0
    %3836 = vmatpush1.bf16.xpose.msra.mxu0 %v3833
    %3837 = vmatprep.subr.bf16.mxu0 0
    %3838 = vmatpush1.bf16.xpose.msra.mxu0 0
    %3839 = vmatprep.subr.bf16.mxu0 0
    %3840 = vmatpush1.bf16.xpose.msra.mxu0 0
    %3841 = vmatprep.subr.bf16.mxu0 0
    %3842 = vmatpush1.bf16.xpose.msra.mxu0 0
    %3843 = vmatprep.subr.bf16.mxu0 0
    %3844 = vmatpush1.bf16.xpose.msra.mxu0 0
    %3845 = vmatprep.subr.bf16.mxu0 0
    %3846 = vmatpush1.bf16.xpose.msra.mxu0 0
    %3847 = vmatprep.subr.bf16.mxu0 0
    %3848 = vmatpush1.bf16.xpose.msra.mxu0 0
    %3849 = vmatprep.subr.bf16.mxu0 0
    %3850 = vmatpush1.bf16.xpose.msra.mxu0 0
    %3851 = vmatprep.subr.bf16.mxu0 0
    %3852 = vmatpush1.bf16.xpose.msra.mxu0 0
    %3853 = vmatprep.subr.bf16.mxu0 0
    %3854 = vmatpush1.bf16.xpose.msra.mxu0 0
    %3855 = vmatprep.subr.bf16.mxu0 0
    %3856 = vmatpush1.bf16.xpose.msra.mxu0 0
    %3857 = vmatprep.subr.bf16.mxu0 0
    %3858 = vmatpush1.bf16.xpose.msra.mxu0 0
    %3859 = vmatprep.subr.bf16.mxu0 0
    %3860 = vmatpush1.bf16.xpose.msra.mxu0 0
    %3861 = vmatprep.subr.bf16.mxu0 0
    %3862 = vmatpush1.bf16.xpose.msra.mxu0 0
    %3863 = vmatprep.subr.bf16.mxu0 0
    %3864 = vmatpush1.bf16.xpose.msra.mxu0 0
    %3865 = vmatprep.subr.bf16.mxu0 0
    %3866 = vmatpush1.bf16.xpose.msra.mxu0 0
    %3867 = vmatprep.mubr.bf16.mxu0 0
    %3868 = vmatmul.mubr.bf16.gmra.mrb[0].mxu0 %v3830
    %v3869 = vpop.f32.mrb[0].mxu0
    %v3870 = vadd.f32 %v182, %v3869
    %v3871 = vpop.f32.mrb[0].mxu0
    %v3872 = vpop.f32.mrb[0].mxu0
    %v3873 = vadd.f32 %v183, %v3872
    %v3874 = vpop.f32.mrb[0].mxu0
    %3875 = vdwg.mxu0
    %v3876 = vsel %vm330, %v3870, -inf
    %3877 = vmax.xlane.f32.xlu0 %v3876
    %v3878 = vpop.xlane.xlu0 %3877
    %v3879 = vsel %vm330, %v3873, -inf
    %3880 = vmax.xlane.f32.xlu0 %v3879
    %v3881 = vpop.xlane.xlu0 %3880
    %v3882 = vsub.f32 %v3870, %v3878
    %v3883 = vsub.f32 %v3873, %v3881
    %v3884 = vmul.f32 %v3882, 1.442695
    %v3885 = vpow.pop %v3884
    %v3886 = vmul.f32 %v3883, 1.442695
    %v3887 = vpow.pop %v3886
    %v3888 = vsel %vm330, %v3885, 0.0
    %3889 = vadd.xlane.f32.xlu0 %v3888
    %v3890 = vpop.xlane.xlu0 %3889
    %v3891 = vsel %vm330, %v3887, 0.0
    %3892 = vadd.xlane.f32.xlu0 %v3891
    %v3893 = vpop.xlane.xlu0 %3892
    %v3894 = vrcp.pop %v3890
    %v3895 = vrcp.pop %v3893
    %v3896 = vmul.f32 %v3885, %v3894
    %v3897 = vmul.f32 %v3887, %v3895
    %v3898 = vpack.c.bf16 %v3897, %v3896
    %3899 = vrot.lane.b32.xlu0 %v3585, 96
    %v3900 = vpop.permute.xlu0 %3899
    %v3903 = vsel %vm330, %v3898, 0
    %3905 = vmatprep.subr.bf16.mxu0 0
    %3906 = vmatpush1.bf16.msra.mxu0 %v3900
    %3907 = vmatprep.subr.bf16.mxu0 0
    %3908 = vmatpush1.bf16.msra.mxu0 0
    %3909 = vmatprep.subr.bf16.mxu0 0
    %3910 = vmatpush1.bf16.msra.mxu0 0
    %3911 = vmatprep.subr.bf16.mxu0 0
    %3912 = vmatpush1.bf16.msra.mxu0 0
    %3913 = vmatprep.subr.bf16.mxu0 0
    %3914 = vmatpush1.bf16.msra.mxu0 0
    %3915 = vmatprep.subr.bf16.mxu0 0
    %3916 = vmatpush1.bf16.msra.mxu0 0
    %3917 = vmatprep.subr.bf16.mxu0 0
    %3918 = vmatpush1.bf16.msra.mxu0 0
    %3919 = vmatprep.subr.bf16.mxu0 0
    %3920 = vmatpush1.bf16.msra.mxu0 0
    %3921 = vmatprep.subr.bf16.mxu0 0
    %3922 = vmatpush1.bf16.msra.mxu0 0
    %3923 = vmatprep.subr.bf16.mxu0 0
    %3924 = vmatpush1.bf16.msra.mxu0 0
    %3925 = vmatprep.subr.bf16.mxu0 0
    %3926 = vmatpush1.bf16.msra.mxu0 0
    %3927 = vmatprep.subr.bf16.mxu0 0
    %3928 = vmatpush1.bf16.msra.mxu0 0
    %3929 = vmatprep.subr.bf16.mxu0 0
    %3930 = vmatpush1.bf16.msra.mxu0 0
    %3931 = vmatprep.subr.bf16.mxu0 0
    %3932 = vmatpush1.bf16.msra.mxu0 0
    %3933 = vmatprep.subr.bf16.mxu0 0
    %3934 = vmatpush1.bf16.msra.mxu0 0
    %3935 = vmatprep.subr.bf16.mxu0 0
    %3936 = vmatpush1.bf16.msra.mxu0 0
    %3937 = vmatprep.mubr.bf16.mxu0 0
    %3938 = vmatmul.mubr.bf16.gmra.mrb[0].mxu0 %v3903
    %v3939 = vpop.f32.mrb[0].mxu0
    %v3940 = vadd.f32 0.0, %v3939
    %v3941 = vpop.f32.mrb[0].mxu0
    %v3942 = vpop.f32.mrb[0].mxu0
    %v3943 = vadd.f32 0.0, %v3942
    %v3944 = vpop.f32.mrb[0].mxu0
    %3945 = vdwg.mxu0
    %3946 = vrot.lane.b32.xlu0 %v3584, 80
    %v3947 = vpop.permute.xlu0 %3946
    %3948 = vrot.lane.b32.xlu0 %v3584, 16
    %v3949 = vpop.permute.xlu0 %3948
    %v3951 = vsel %vm330, %v3947, 0
    %v3954 = vsel %vm330, %v3949, 0
    %3956 = vmatprep.subr.bf16.mxu0 0
    %3957 = vmatpush1.bf16.xpose.msra.mxu0 %v3954
    %3958 = vmatprep.subr.bf16.mxu0 0
    %3959 = vmatpush1.bf16.xpose.msra.mxu0 0
    %3960 = vmatprep.subr.bf16.mxu0 0
    %3961 = vmatpush1.bf16.xpose.msra.mxu0 0
    %3962 = vmatprep.subr.bf16.mxu0 0
    %3963 = vmatpush1.bf16.xpose.msra.mxu0 0
    %3964 = vmatprep.subr.bf16.mxu0 0
    %3965 = vmatpush1.bf16.xpose.msra.mxu0 0
    %3966 = vmatprep.subr.bf16.mxu0 0
    %3967 = vmatpush1.bf16.xpose.msra.mxu0 0
    %3968 = vmatprep.subr.bf16.mxu0 0
    %3969 = vmatpush1.bf16.xpose.msra.mxu0 0
    %3970 = vmatprep.subr.bf16.mxu0 0
    %3971 = vmatpush1.bf16.xpose.msra.mxu0 0
    %3972 = vmatprep.subr.bf16.mxu0 0
    %3973 = vmatpush1.bf16.xpose.msra.mxu0 0
    %3974 = vmatprep.subr.bf16.mxu0 0
    %3975 = vmatpush1.bf16.xpose.msra.mxu0 0
    %3976 = vmatprep.subr.bf16.mxu0 0
    %3977 = vmatpush1.bf16.xpose.msra.mxu0 0
    %3978 = vmatprep.subr.bf16.mxu0 0
    %3979 = vmatpush1.bf16.xpose.msra.mxu0 0
    %3980 = vmatprep.subr.bf16.mxu0 0
    %3981 = vmatpush1.bf16.xpose.msra.mxu0 0
    %3982 = vmatprep.subr.bf16.mxu0 0
    %3983 = vmatpush1.bf16.xpose.msra.mxu0 0
    %3984 = vmatprep.subr.bf16.mxu0 0
    %3985 = vmatpush1.bf16.xpose.msra.mxu0 0
    %3986 = vmatprep.subr.bf16.mxu0 0
    %3987 = vmatpush1.bf16.xpose.msra.mxu0 0
    %3988 = vmatprep.mubr.bf16.mxu0 0
    %3989 = vmatmul.mubr.bf16.gmra.mrb[0].mxu0 %v3951
    %v3990 = vpop.f32.mrb[0].mxu0
    %v3991 = vadd.f32 %v182, %v3990
    %v3992 = vpop.f32.mrb[0].mxu0
    %v3993 = vpop.f32.mrb[0].mxu0
    %v3994 = vadd.f32 %v183, %v3993
    %v3995 = vpop.f32.mrb[0].mxu0
    %3996 = vdwg.mxu0
    %v3997 = vsel %vm330, %v3991, -inf
    %3998 = vmax.xlane.f32.xlu0 %v3997
    %v3999 = vpop.xlane.xlu0 %3998
    %v4000 = vsel %vm330, %v3994, -inf
    %4001 = vmax.xlane.f32.xlu0 %v4000
    %v4002 = vpop.xlane.xlu0 %4001
    %v4003 = vsub.f32 %v3991, %v3999
    %v4004 = vsub.f32 %v3994, %v4002
    %v4005 = vmul.f32 %v4003, 1.442695
    %v4006 = vpow.pop %v4005
    %v4007 = vmul.f32 %v4004, 1.442695
    %v4008 = vpow.pop %v4007
    %v4009 = vsel %vm330, %v4006, 0.0
    %4010 = vadd.xlane.f32.xlu0 %v4009
    %v4011 = vpop.xlane.xlu0 %4010
    %v4012 = vsel %vm330, %v4008, 0.0
    %4013 = vadd.xlane.f32.xlu0 %v4012
    %v4014 = vpop.xlane.xlu0 %4013
    %v4015 = vrcp.pop %v4011
    %v4016 = vrcp.pop %v4014
    %v4017 = vmul.f32 %v4006, %v4015
    %v4018 = vmul.f32 %v4008, %v4016
    %v4019 = vpack.c.bf16 %v4018, %v4017
    %4020 = vrot.lane.b32.xlu0 %v3585, 80
    %v4021 = vpop.permute.xlu0 %4020
    %v4024 = vsel %vm330, %v4019, 0
    %4026 = vmatprep.subr.bf16.mxu0 0
    %4027 = vmatpush1.bf16.msra.mxu0 %v4021
    %4028 = vmatprep.subr.bf16.mxu0 0
    %4029 = vmatpush1.bf16.msra.mxu0 0
    %4030 = vmatprep.subr.bf16.mxu0 0
    %4031 = vmatpush1.bf16.msra.mxu0 0
    %4032 = vmatprep.subr.bf16.mxu0 0
    %4033 = vmatpush1.bf16.msra.mxu0 0
    %4034 = vmatprep.subr.bf16.mxu0 0
    %4035 = vmatpush1.bf16.msra.mxu0 0
    %4036 = vmatprep.subr.bf16.mxu0 0
    %4037 = vmatpush1.bf16.msra.mxu0 0
    %4038 = vmatprep.subr.bf16.mxu0 0
    %4039 = vmatpush1.bf16.msra.mxu0 0
    %4040 = vmatprep.subr.bf16.mxu0 0
    %4041 = vmatpush1.bf16.msra.mxu0 0
    %4042 = vmatprep.subr.bf16.mxu0 0
    %4043 = vmatpush1.bf16.msra.mxu0 0
    %4044 = vmatprep.subr.bf16.mxu0 0
    %4045 = vmatpush1.bf16.msra.mxu0 0
    %4046 = vmatprep.subr.bf16.mxu0 0
    %4047 = vmatpush1.bf16.msra.mxu0 0
    %4048 = vmatprep.subr.bf16.mxu0 0
    %4049 = vmatpush1.bf16.msra.mxu0 0
    %4050 = vmatprep.subr.bf16.mxu0 0
    %4051 = vmatpush1.bf16.msra.mxu0 0
    %4052 = vmatprep.subr.bf16.mxu0 0
    %4053 = vmatpush1.bf16.msra.mxu0 0
    %4054 = vmatprep.subr.bf16.mxu0 0
    %4055 = vmatpush1.bf16.msra.mxu0 0
    %4056 = vmatprep.subr.bf16.mxu0 0
    %4057 = vmatpush1.bf16.msra.mxu0 0
    %4058 = vmatprep.mubr.bf16.mxu0 0
    %4059 = vmatmul.mubr.bf16.gmra.mrb[0].mxu0 %v4024
    %v4060 = vpop.f32.mrb[0].mxu0
    %v4061 = vadd.f32 0.0, %v4060
    %v4062 = vpop.f32.mrb[0].mxu0
    %v4063 = vpop.f32.mrb[0].mxu0
    %v4064 = vadd.f32 0.0, %v4063
    %v4065 = vpop.f32.mrb[0].mxu0
    %4066 = vdwg.mxu0
    %4069 = vrot.lane.b32.xlu0 %v3819, 16
    %v4070 = vpop.permute.xlu0 %4069
    %4071 = vrot.lane.b32.xlu0 %v3822, 16
    %v4072 = vpop.permute.xlu0 %4071
    %4077 = vrot.lane.b32.xlu0 %v3940, 32
    %v4078 = vpop.permute.xlu0 %4077
    %4079 = vrot.lane.b32.xlu0 %v3943, 32
    %v4080 = vpop.permute.xlu0 %4079
    %4085 = vrot.lane.b32.xlu0 %v4061, 48
    %v4086 = vpop.permute.xlu0 %4085
    %4087 = vrot.lane.b32.xlu0 %v4064, 48
    %v4088 = vpop.permute.xlu0 %4087
    %v4091 = vsel %vm330, %v3697, %v4070
    %v4092 = vsel %vm330, %v3700, %v4072
    %v4093 = vsel %vm835, %v4091, %v4078
    %v4094 = vsel %vm835, %v4092, %v4080
    %v4095 = vsel %vm838, %v4093, %v4086
    %v4096 = vsel %vm838, %v4094, %v4088
    %v4097 = vpack.c.bf16 %v4096, %v4095
    %s4098 = scalar_lea.vmem %s7, 96
    %v4099 = vld [vmem:[%s4098] sm:$0xf]
    %v4100 = vld [vmem:[%s4098 + $0x4] sm:$0xf]
    %v4101 = vld [vmem:[%s4098 + $0x8] sm:$0xf]
    %v4102 = vld [vmem:[%s4098 + $0xc] sm:$0xf]
    %v4103 = vld [vmem:[%s4098 + $0x10] sm:$0xf]
    %v4104 = vld [vmem:[%s4098 + $0x14] sm:$0xf]
    %v4105 = vld [vmem:[%s4098 + $0x18] sm:$0xf]
    %v4106 = vld [vmem:[%s4098 + $0x1c] sm:$0xf]
    %v4115 = vunpack.c.l.b16 %v4099
    %v4116 = vunpack.c.l.b16 %v4100
    %v4117 = vunpack.c.l.b16 %v4101
    %v4118 = vunpack.c.l.b16 %v4102
    %v4119 = vunpack.c.l.b16 %v4103
    %v4120 = vunpack.c.l.b16 %v4104
    %v4121 = vunpack.c.l.b16 %v4105
    %v4122 = vunpack.c.l.b16 %v4106
    %v4123 = vpack.c.b16 %v4116, %v4115
    %v4124 = vpack.c.b16 %v4118, %v4117
    %v4125 = vpack.c.b16 %v4120, %v4119
    %v4126 = vpack.c.b16 %v4122, %v4121
    %v4132 = vsel %vm186, %v4097, 0
    %4134 = vmatprep.subr.bf16.mxu0 0
    %4135 = vmatpush1.bf16.msra.mxu0 %v4123
    %4136 = vmatprep.subr.bf16.mxu0 0
    %4137 = vmatpush1.bf16.msra.mxu0 %v4124
    %4138 = vmatprep.subr.bf16.mxu0 0
    %4139 = vmatpush1.bf16.msra.mxu0 %v4125
    %4140 = vmatprep.subr.bf16.mxu0 0
    %4141 = vmatpush1.bf16.msra.mxu0 %v4126
    %4142 = vmatprep.subr.bf16.mxu0 0
    %4143 = vmatpush1.bf16.msra.mxu0 0
    %4144 = vmatprep.subr.bf16.mxu0 0
    %4145 = vmatpush1.bf16.msra.mxu0 0
    %4146 = vmatprep.subr.bf16.mxu0 0
    %4147 = vmatpush1.bf16.msra.mxu0 0
    %4148 = vmatprep.subr.bf16.mxu0 0
    %4149 = vmatpush1.bf16.msra.mxu0 0
    %4150 = vmatprep.subr.bf16.mxu0 0
    %4151 = vmatpush1.bf16.msra.mxu0 0
    %4152 = vmatprep.subr.bf16.mxu0 0
    %4153 = vmatpush1.bf16.msra.mxu0 0
    %4154 = vmatprep.subr.bf16.mxu0 0
    %4155 = vmatpush1.bf16.msra.mxu0 0
    %4156 = vmatprep.subr.bf16.mxu0 0
    %4157 = vmatpush1.bf16.msra.mxu0 0
    %4158 = vmatprep.subr.bf16.mxu0 0
    %4159 = vmatpush1.bf16.msra.mxu0 0
    %4160 = vmatprep.subr.bf16.mxu0 0
    %4161 = vmatpush1.bf16.msra.mxu0 0
    %4162 = vmatprep.subr.bf16.mxu0 0
    %4163 = vmatpush1.bf16.msra.mxu0 0
    %4164 = vmatprep.subr.bf16.mxu0 0
    %4165 = vmatpush1.bf16.msra.mxu0 0
    %4166 = vmatprep.mubr.bf16.mxu0 0
    %4167 = vmatmul.mubr.bf16.gmra.mrb[0].mxu0 %v4132
    %v4168 = vpop.f32.mrb[0].mxu0
    %v4169 = vadd.f32 0.0, %v4168
    %v4170 = vpop.f32.mrb[0].mxu0
    %v4171 = vpop.f32.mrb[0].mxu0
    %v4172 = vadd.f32 0.0, %v4171
    %v4173 = vpop.f32.mrb[0].mxu0
    %4174 = vdwg.mxu0
    %v4175 = vadd.f32 %v3440, %v4169
    %v4176 = vadd.f32 %v3441, %v4172
    %s4177 = scalar_lea.vmem %s8, 3
    %v4178 = vld [vmem:[%s4177] sm:$0x1]
    %v4180 = vlaneseq
    %v4181 = vshrl.u32 %v4180, 7
    %v4182 = vsub.s32 0, %v4181
    %v4183 = vrot.slane %v4178, %v4182
    %v4185 = vadd.f32 %v4175, %v4183
    %v4186 = vadd.f32 %v4176, %v4183
    %s4187 = scalar_lea.vmem %s9, 3
    %v4188 = vld [vmem:[%s4187] sm:$0x1]
    %s4189 = scalar_lea.vmem %s10, 3
    %v4190 = vld [vmem:[%s4189] sm:$0x1]
    %v4191 = vsel %vm186, %v4185, 0.0
    %4192 = vadd.xlane.f32.xlu0 %v4191
    %v4193 = vpop.xlane.xlu0 %4192
    %v4194 = vsel %vm186, %v4186, 0.0
    %4195 = vadd.xlane.f32.xlu0 %v4194
    %v4196 = vpop.xlane.xlu0 %4195
    %v4197 = vmul.f32 %v4193, %v193
    %v4198 = vmul.f32 %v4196, %v193
    %v4199 = vsub.f32 %v4185, %v4197
    %v4200 = vsub.f32 %v4186, %v4198
    %v4201 = vmul.f32 %v4199, %v4199
    %v4202 = vmul.f32 %v4200, %v4200
    %v4203 = vsel %vm186, %v4201, 0.0
    %4204 = vadd.xlane.f32.xlu0 %v4203
    %v4205 = vpop.xlane.xlu0 %4204
    %v4206 = vsel %vm186, %v4202, 0.0
    %4207 = vadd.xlane.f32.xlu0 %v4206
    %v4208 = vpop.xlane.xlu0 %4207
    %v4209 = vmul.f32 %v4205, %v193
    %v4210 = vmul.f32 %v4208, %v193
    %v4211 = vadd.f32 %v4209, 1e-05
    %v4212 = vadd.f32 %v4210, 1e-05
    %v4213 = vrsqrt.pop %v4211
    %v4214 = vrsqrt.pop %v4212
    %v4215 = vmul.f32 %v4199, %v4213
    %v4216 = vmul.f32 %v4200, %v4214
    %v4218 = vlaneseq
    %v4219 = vshrl.u32 %v4218, 7
    %v4220 = vsub.s32 0, %v4219
    %v4221 = vrot.slane %v4188, %v4220
    %v4223 = vmul.f32 %v4215, %v4221
    %v4224 = vmul.f32 %v4216, %v4221
    %v4226 = vlaneseq
    %v4227 = vshrl.u32 %v4226, 7
    %v4228 = vsub.s32 0, %v4227
    %v4229 = vrot.slane %v4190, %v4228
    %v4231 = vadd.f32 %v4223, %v4229
    %v4232 = vadd.f32 %v4224, %v4229
    %v4233 = vpack.c.bf16 %v4232, %v4231
    %s4234 = scalar_lea.vmem %s11, 192
    %v4235 = vld [vmem:[%s4234] sm:$0xff]
    %v4236 = vld [vmem:[%s4234 + $0x8] sm:$0xff]
    %v4237 = vld [vmem:[%s4234 + $0x10] sm:$0xff]
    %v4238 = vld [vmem:[%s4234 + $0x18] sm:$0xff]
    %v4239 = vld [vmem:[%s4234 + $0x20] sm:$0xff]
    %v4240 = vld [vmem:[%s4234 + $0x28] sm:$0xff]
    %v4241 = vld [vmem:[%s4234 + $0x30] sm:$0xff]
    %v4242 = vld [vmem:[%s4234 + $0x38] sm:$0xff]
    %s4243 = scalar_lea.vmem %s12, 6
    %v4244 = vld [vmem:[%s4243] sm:$0x3]
    %v4246 = vlaneseq
    %v4247 = vshrl.u32 %v4246, 7
    %v4248 = vsub.s32 0, %v4247
    %v4249 = vrot.slane %v4244, %v4248
    %v4250 = vlaneseq
    %v4251 = vshrl.u32 %v4250, 7
    %v4252 = vsub.s32 1, %v4251
    %v4253 = vrot.slane %v4244, %v4252
    %v4264 = vunpack.c.l.b16 %v4235
    %v4265 = vunpack.c.h.b16 %v4235
    %v4266 = vunpack.c.l.b16 %v4236
    %v4267 = vunpack.c.h.b16 %v4236
    %v4268 = vunpack.c.l.b16 %v4237
    %v4269 = vunpack.c.h.b16 %v4237
    %v4270 = vunpack.c.l.b16 %v4238
    %v4271 = vunpack.c.h.b16 %v4238
    %v4272 = vunpack.c.l.b16 %v4239
    %v4273 = vunpack.c.h.b16 %v4239
    %v4274 = vunpack.c.l.b16 %v4240
    %v4275 = vunpack.c.h.b16 %v4240
    %v4276 = vunpack.c.l.b16 %v4241
    %v4277 = vunpack.c.h.b16 %v4241
    %v4278 = vunpack.c.l.b16 %v4242
    %v4279 = vunpack.c.h.b16 %v4242
    %v4280 = vpack.c.b16 %v4266, %v4264
    %v4281 = vpack.c.b16 %v4267, %v4265
    %v4282 = vpack.c.b16 %v4270, %v4268
    %v4283 = vpack.c.b16 %v4271, %v4269
    %v4284 = vpack.c.b16 %v4274, %v4272
    %v4285 = vpack.c.b16 %v4275, %v4273
    %v4286 = vpack.c.b16 %v4278, %v4276
    %v4287 = vpack.c.b16 %v4279, %v4277
    %v4297 = vsel %vm186, %v4233, 0
    %4299 = vmatprep.subr.bf16.mxu0 %v4281
    %4300 = vmatpush1.bf16.msra.mxu0 %v4280
    %4301 = vmatprep.subr.bf16.mxu0 %v4283
    %4302 = vmatpush1.bf16.msra.mxu0 %v4282
    %4303 = vmatprep.subr.bf16.mxu0 %v4285
    %4304 = vmatpush1.bf16.msra.mxu0 %v4284
    %4305 = vmatprep.subr.bf16.mxu0 %v4287
    %4306 = vmatpush1.bf16.msra.mxu0 %v4286
    %4307 = vmatprep.subr.bf16.mxu0 0
    %4308 = vmatpush1.bf16.msra.mxu0 0
    %4309 = vmatprep.subr.bf16.mxu0 0
    %4310 = vmatpush1.bf16.msra.mxu0 0
    %4311 = vmatprep.subr.bf16.mxu0 0
    %4312 = vmatpush1.bf16.msra.mxu0 0
    %4313 = vmatprep.subr.bf16.mxu0 0
    %4314 = vmatpush1.bf16.msra.mxu0 0
    %4315 = vmatprep.subr.bf16.mxu0 0
    %4316 = vmatpush1.bf16.msra.mxu0 0
    %4317 = vmatprep.subr.bf16.mxu0 0
    %4318 = vmatpush1.bf16.msra.mxu0 0
    %4319 = vmatprep.subr.bf16.mxu0 0
    %4320 = vmatpush1.bf16.msra.mxu0 0
    %4321 = vmatprep.subr.bf16.mxu0 0
    %4322 = vmatpush1.bf16.msra.mxu0 0
    %4323 = vmatprep.subr.bf16.mxu0 0
    %4324 = vmatpush1.bf16.msra.mxu0 0
    %4325 = vmatprep.subr.bf16.mxu0 0
    %4326 = vmatpush1.bf16.msra.mxu0 0
    %4327 = vmatprep.subr.bf16.mxu0 0
    %4328 = vmatpush1.bf16.msra.mxu0 0
    %4329 = vmatprep.subr.bf16.mxu0 0
    %4330 = vmatpush1.bf16.msra.mxu0 0
    %4331 = vmatprep.mubr.bf16.mxu0 0
    %4332 = vmatmul.mubr.bf16.gmra.mrb[0].mxu0 %v4297
    %v4333 = vpop.f32.mrb[0].mxu0
    %v4334 = vadd.f32 %v4249, %v4333
    %v4335 = vpop.f32.mrb[0].mxu0
    %v4336 = vadd.f32 %v4253, %v4335
    %v4337 = vpop.f32.mrb[0].mxu0
    %v4338 = vadd.f32 %v4249, %v4337
    %v4339 = vpop.f32.mrb[0].mxu0
    %v4340 = vadd.f32 %v4253, %v4339
    %4341 = vdwg.mxu0
    %v4342 = vmax.f32 %v4334, 0.0
    %v4343 = vmax.f32 %v4336, 0.0
    %v4344 = vmax.f32 %v4338, 0.0
    %v4345 = vmax.f32 %v4340, 0.0
    %v4346 = vpack.c.bf16 %v4344, %v4342
    %v4347 = vpack.c.bf16 %v4345, %v4343
    %s4348 = scalar_lea.vmem %s13, 384
    %v4349 = vld [vmem:[%s4348] sm:$0xf]
    %v4350 = vld [vmem:[%s4348 + $0x4] sm:$0xf]
    %v4351 = vld [vmem:[%s4348 + $0x8] sm:$0xf]
    %v4352 = vld [vmem:[%s4348 + $0xc] sm:$0xf]
    %v4353 = vld [vmem:[%s4348 + $0x10] sm:$0xf]
    %v4354 = vld [vmem:[%s4348 + $0x14] sm:$0xf]
    %v4355 = vld [vmem:[%s4348 + $0x18] sm:$0xf]
    %v4356 = vld [vmem:[%s4348 + $0x1c] sm:$0xf]
    %v4357 = vld [vmem:[%s4348 + $0x20] sm:$0xf]
    %v4358 = vld [vmem:[%s4348 + $0x24] sm:$0xf]
    %v4359 = vld [vmem:[%s4348 + $0x28] sm:$0xf]
    %v4360 = vld [vmem:[%s4348 + $0x2c] sm:$0xf]
    %v4361 = vld [vmem:[%s4348 + $0x30] sm:$0xf]
    %v4362 = vld [vmem:[%s4348 + $0x34] sm:$0xf]
    %v4363 = vld [vmem:[%s4348 + $0x38] sm:$0xf]
    %v4364 = vld [vmem:[%s4348 + $0x3c] sm:$0xf]
    %v4365 = vld [vmem:[%s4348 + $0x40] sm:$0xf]
    %v4366 = vld [vmem:[%s4348 + $0x44] sm:$0xf]
    %v4367 = vld [vmem:[%s4348 + $0x48] sm:$0xf]
    %v4368 = vld [vmem:[%s4348 + $0x4c] sm:$0xf]
    %v4369 = vld [vmem:[%s4348 + $0x50] sm:$0xf]
    %v4370 = vld [vmem:[%s4348 + $0x54] sm:$0xf]
    %v4371 = vld [vmem:[%s4348 + $0x58] sm:$0xf]
    %v4372 = vld [vmem:[%s4348 + $0x5c] sm:$0xf]
    %v4373 = vld [vmem:[%s4348 + $0x60] sm:$0xf]
    %v4374 = vld [vmem:[%s4348 + $0x64] sm:$0xf]
    %v4375 = vld [vmem:[%s4348 + $0x68] sm:$0xf]
    %v4376 = vld [vmem:[%s4348 + $0x6c] sm:$0xf]
    %v4377 = vld [vmem:[%s4348 + $0x70] sm:$0xf]
    %v4378 = vld [vmem:[%s4348 + $0x74] sm:$0xf]
    %v4379 = vld [vmem:[%s4348 + $0x78] sm:$0xf]
    %v4380 = vld [vmem:[%s4348 + $0x7c] sm:$0xf]
    %v4413 = vunpack.c.l.b16 %v4349
    %v4414 = vunpack.c.l.b16 %v4350
    %v4415 = vunpack.c.l.b16 %v4351
    %v4416 = vunpack.c.l.b16 %v4352
    %v4417 = vunpack.c.l.b16 %v4353
    %v4418 = vunpack.c.l.b16 %v4354
    %v4419 = vunpack.c.l.b16 %v4355
    %v4420 = vunpack.c.l.b16 %v4356
    %v4421 = vunpack.c.l.b16 %v4357
    %v4422 = vunpack.c.l.b16 %v4358
    %v4423 = vunpack.c.l.b16 %v4359
    %v4424 = vunpack.c.l.b16 %v4360
    %v4425 = vunpack.c.l.b16 %v4361
    %v4426 = vunpack.c.l.b16 %v4362
    %v4427 = vunpack.c.l.b16 %v4363
    %v4428 = vunpack.c.l.b16 %v4364
    %v4429 = vunpack.c.l.b16 %v4365
    %v4430 = vunpack.c.l.b16 %v4366
    %v4431 = vunpack.c.l.b16 %v4367
    %v4432 = vunpack.c.l.b16 %v4368
    %v4433 = vunpack.c.l.b16 %v4369
    %v4434 = vunpack.c.l.b16 %v4370
    %v4435 = vunpack.c.l.b16 %v4371
    %v4436 = vunpack.c.l.b16 %v4372
    %v4437 = vunpack.c.l.b16 %v4373
    %v4438 = vunpack.c.l.b16 %v4374
    %v4439 = vunpack.c.l.b16 %v4375
    %v4440 = vunpack.c.l.b16 %v4376
    %v4441 = vunpack.c.l.b16 %v4377
    %v4442 = vunpack.c.l.b16 %v4378
    %v4443 = vunpack.c.l.b16 %v4379
    %v4444 = vunpack.c.l.b16 %v4380
    %v4445 = vpack.c.b16 %v4414, %v4413
    %v4446 = vpack.c.b16 %v4416, %v4415
    %v4447 = vpack.c.b16 %v4418, %v4417
    %v4448 = vpack.c.b16 %v4420, %v4419
    %v4449 = vpack.c.b16 %v4422, %v4421
    %v4450 = vpack.c.b16 %v4424, %v4423
    %v4451 = vpack.c.b16 %v4426, %v4425
    %v4452 = vpack.c.b16 %v4428, %v4427
    %v4453 = vpack.c.b16 %v4430, %v4429
    %v4454 = vpack.c.b16 %v4432, %v4431
    %v4455 = vpack.c.b16 %v4434, %v4433
    %v4456 = vpack.c.b16 %v4436, %v4435
    %v4457 = vpack.c.b16 %v4438, %v4437
    %v4458 = vpack.c.b16 %v4440, %v4439
    %v4459 = vpack.c.b16 %v4442, %v4441
    %v4460 = vpack.c.b16 %v4444, %v4443
    %4477 = vmatprep.subr.bf16.mxu0 0
    %4478 = vmatpush1.bf16.msra.mxu0 %v4445
    %4479 = vmatprep.subr.bf16.mxu0 0
    %4480 = vmatpush1.bf16.msra.mxu0 %v4446
    %4481 = vmatprep.subr.bf16.mxu0 0
    %4482 = vmatpush1.bf16.msra.mxu0 %v4447
    %4483 = vmatprep.subr.bf16.mxu0 0
    %4484 = vmatpush1.bf16.msra.mxu0 %v4448
    %4485 = vmatprep.subr.bf16.mxu0 0
    %4486 = vmatpush1.bf16.msra.mxu0 %v4449
    %4487 = vmatprep.subr.bf16.mxu0 0
    %4488 = vmatpush1.bf16.msra.mxu0 %v4450
    %4489 = vmatprep.subr.bf16.mxu0 0
    %4490 = vmatpush1.bf16.msra.mxu0 %v4451
    %4491 = vmatprep.subr.bf16.mxu0 0
    %4492 = vmatpush1.bf16.msra.mxu0 %v4452
    %4493 = vmatprep.subr.bf16.mxu0 0
    %4494 = vmatpush1.bf16.msra.mxu0 %v4453
    %4495 = vmatprep.subr.bf16.mxu0 0
    %4496 = vmatpush1.bf16.msra.mxu0 %v4454
    %4497 = vmatprep.subr.bf16.mxu0 0
    %4498 = vmatpush1.bf16.msra.mxu0 %v4455
    %4499 = vmatprep.subr.bf16.mxu0 0
    %4500 = vmatpush1.bf16.msra.mxu0 %v4456
    %4501 = vmatprep.subr.bf16.mxu0 0
    %4502 = vmatpush1.bf16.msra.mxu0 %v4457
    %4503 = vmatprep.subr.bf16.mxu0 0
    %4504 = vmatpush1.bf16.msra.mxu0 %v4458
    %4505 = vmatprep.subr.bf16.mxu0 0
    %4506 = vmatpush1.bf16.msra.mxu0 %v4459
    %4507 = vmatprep.subr.bf16.mxu0 0
    %4508 = vmatpush1.bf16.msra.mxu0 %v4460
    %4509 = vmatprep.mubr.bf16.mxu0 %v4347
    %4510 = vmatmul.mubr.bf16.gmra.mrb[0].mxu0 %v4346
    %v4511 = vpop.f32.mrb[0].mxu0
    %v4512 = vadd.f32 0.0, %v4511
    %v4513 = vpop.f32.mrb[0].mxu0
    %v4514 = vpop.f32.mrb[0].mxu0
    %v4515 = vadd.f32 0.0, %v4514
    %v4516 = vpop.f32.mrb[0].mxu0
    %4517 = vdwg.mxu0
    %v4518 = vadd.f32 %v4185, %v4512
    %v4519 = vadd.f32 %v4186, %v4515
    %s4520 = scalar_lea.vmem %s14, 3
    %v4521 = vld [vmem:[%s4520] sm:$0x1]
    %v4523 = vlaneseq
    %v4524 = vshrl.u32 %v4523, 7
    %v4525 = vsub.s32 0, %v4524
    %v4526 = vrot.slane %v4521, %v4525
    %v4528 = vadd.f32 %v4518, %v4526
    %v4529 = vadd.f32 %v4519, %v4526
    %v4530 = vpack.c.bf16 %v4529, %v4528
    %v4531 = vld [vmem:[%s15] sm:$0xf]
    %v4532 = vld [vmem:[%s15 + $0x4] sm:$0xf]
    %v4533 = vld [vmem:[%s15 + $0x8] sm:$0xf]
    %v4534 = vld [vmem:[%s15 + $0xc] sm:$0xf]
    %v4535 = vld [vmem:[%s15 + $0x10] sm:$0xf]
    %v4536 = vld [vmem:[%s15 + $0x14] sm:$0xf]
    %v4537 = vld [vmem:[%s15 + $0x18] sm:$0xf]
    %v4538 = vld [vmem:[%s15 + $0x1c] sm:$0xf]
    %v4539 = vld [vmem:[%s16] sm:$0x1]
    %v4541 = vlaneseq
    %v4542 = vshrl.u32 %v4541, 7
    %v4543 = vsub.s32 0, %v4542
    %v4544 = vrot.slane %v4539, %v4543
    %v4554 = vunpack.c.l.b16 %v4531
    %v4555 = vunpack.c.l.b16 %v4532
    %v4556 = vunpack.c.l.b16 %v4533
    %v4557 = vunpack.c.l.b16 %v4534
    %v4558 = vunpack.c.l.b16 %v4535
    %v4559 = vunpack.c.l.b16 %v4536
    %v4560 = vunpack.c.l.b16 %v4537
    %v4561 = vunpack.c.l.b16 %v4538
    %v4562 = vpack.c.b16 %v4555, %v4554
    %v4563 = vpack.c.b16 %v4557, %v4556
    %v4564 = vpack.c.b16 %v4559, %v4558
    %v4565 = vpack.c.b16 %v4561, %v4560
    %v4571 = vsel %vm186, %v4530, 0
    %4573 = vmatprep.subr.bf16.mxu0 0
    %4574 = vmatpush1.bf16.msra.mxu0 %v4562
    %4575 = vmatprep.subr.bf16.mxu0 0
    %4576 = vmatpush1.bf16.msra.mxu0 %v4563
    %4577 = vmatprep.subr.bf16.mxu0 0
    %4578 = vmatpush1.bf16.msra.mxu0 %v4564
    %4579 = vmatprep.subr.bf16.mxu0 0
    %4580 = vmatpush1.bf16.msra.mxu0 %v4565
    %4581 = vmatprep.subr.bf16.mxu0 0
    %4582 = vmatpush1.bf16.msra.mxu0 0
    %4583 = vmatprep.subr.bf16.mxu0 0
    %4584 = vmatpush1.bf16.msra.mxu0 0
    %4585 = vmatprep.subr.bf16.mxu0 0
    %4586 = vmatpush1.bf16.msra.mxu0 0
    %4587 = vmatprep.subr.bf16.mxu0 0
    %4588 = vmatpush1.bf16.msra.mxu0 0
    %4589 = vmatprep.subr.bf16.mxu0 0
    %4590 = vmatpush1.bf16.msra.mxu0 0
    %4591 = vmatprep.subr.bf16.mxu0 0
    %4592 = vmatpush1.bf16.msra.mxu0 0
    %4593 = vmatprep.subr.bf16.mxu0 0
    %4594 = vmatpush1.bf16.msra.mxu0 0
    %4595 = vmatprep.subr.bf16.mxu0 0
    %4596 = vmatpush1.bf16.msra.mxu0 0
    %4597 = vmatprep.subr.bf16.mxu0 0
    %4598 = vmatpush1.bf16.msra.mxu0 0
    %4599 = vmatprep.subr.bf16.mxu0 0
    %4600 = vmatpush1.bf16.msra.mxu0 0
    %4601 = vmatprep.subr.bf16.mxu0 0
    %4602 = vmatpush1.bf16.msra.mxu0 0
    %4603 = vmatprep.subr.bf16.mxu0 0
    %4604 = vmatpush1.bf16.msra.mxu0 0
    %4605 = vmatprep.mubr.bf16.mxu0 0
    %4606 = vmatmul.mubr.bf16.gmra.mrb[0].mxu0 %v4571
    %v4607 = vpop.f32.mrb[0].mxu0
    %v4608 = vadd.f32 %v4544, %v4607
    %v4609 = vpop.f32.mrb[0].mxu0
    %v4610 = vpop.f32.mrb[0].mxu0
    %v4611 = vadd.f32 %v4544, %v4610
    %v4612 = vpop.f32.mrb[0].mxu0
    %4613 = vdwg.mxu0
    %4614 = vst [vmem:[#allocation2] sm:$0xff] %v4608
    %4615 = vst [vmem:[#allocation2 + $0x8] sm:$0xff] %v4611
    // Predicated region
    $region70: #{bigram_forward.1} parent=1 // pred_check
      _
    $region71: #{bigram_forward.1} parent=1 // pred_check_branch
      %4617 = sbr.rel (0) target = $region73
    $region72: #{bigram_forward.1} parent=1 // pred_region
      %s4619 = ssub.s32 256, 256
      %4620 = vsyncadd [#allocation3], %s4619
      %s4621 = sshll.u32 [#allocation2], 4
      %s4622 = int_to_ptr.vmem [resolvable:$true] %s4621
      %4627 = dma.vmem_to_hbm [thread:$0]  %s4622, 256, %s17, [#allocation3], 128, 128, 8
    $region73: #{bigram_forward.1} parent=1 // pred_fallthru
      _
    // Predicated region
    $region74: #{bigram_forward.1} parent=1 // pred_check
      _
    $region75: #{bigram_forward.1} parent=1 // pred_check_branch
      %4629 = sbr.rel (0) target = $region77
    $region76: #{bigram_forward.1} parent=1 // pred_region
      %4630 = dma.done [#allocation3], 256
    $region77: #{bigram_forward.1} parent=1 // pred_fallthru
      _
    %4631 = vsyncpa [#allocation3], 1

</llo_original>
